<compile_context>
chip_gen: v5e
topology: v5e:2x2
jax: 0.10.0
libtpu: 0.0.40
codegen_flags: <defaults>
</compile_context>

<pallas_src>
import jax
import jax.numpy as jnp
from jax import lax
from jax.experimental import pallas as pl
from jax.experimental.pallas import tpu as pltpu

LANE = 128


def _round_up(n, m):
    return ((n + m - 1) // m) * m


def _bottleneck_kernel(x_ref, w1_ref, b1_ref, w2_ref, b2_ref, w3_ref, b3_ref,
                       o_ref, a0_ref, a1_ref, a2_ref):
    """One image (grid step) of the fused bottleneck.

    x_ref  : (1, H, W, Cin)   input tile (NHWC, channels padded to a lane multiple)
    w1_ref : (Cin, P)         conv1 1x1 weight, BN1 scale folded in (compute dtype)
    w2_ref : (9, P, P)        conv2 3x3 weight (tap-major, k = dy*3 + dx), BN2 folded
    w3_ref : (P, Cout)        conv3 1x1 weight, BN3 scale folded in, Cout == Cin
    b*_ref : (1, C)           folded BN shifts (f32)
    o_ref  : (1, H, W, Cout)  output tile
    a*_ref : (H+2, W, P)      VMEM scratch (compute dtype): conv1 output pre-shifted
                              along W by dx-1 (a0: w-1, a1: w, a2: w+1), with one zero
                              halo row above and below (handles the dy shifts).
    """
    H = x_ref.shape[1]
    W = x_ref.shape[2]
    Cin = x_ref.shape[3]
    P = w1_ref.shape[1]
    Cout = w3_ref.shape[1]
    M = H * W
    cdt = a0_ref.dtype                      # compute dtype (f32 or bf16)

    # ---- conv1 (1x1) + bn1 (bias) + relu : one (M, Cin) x (Cin, P) matmul ------
    x2d = x_ref[0].reshape(M, Cin)                                    # (M, Cin)
    t1 = jnp.dot(x2d.astype(cdt), w1_ref[...],
                 preferred_element_type=jnp.float32)
    t1 = jnp.maximum(t1 + b1_ref[...], 0.0)                           # (M, P) f32

    # ---- build the three dx-shifted activation copies --------------------------
    # Within-row shift by +-1 is a pltpu.roll on the flattened (M, P) activation
    # (XLU sublane rotate -> no unaligned slices, no relayout copies).  Pixels that
    # wrapped across the image border are masked to zero with an iota-derived mask.
    # The dy shifts are handled by the zero halo rows in the scratch, so every tap
    # load below is a contiguous, tile-aligned slab.
    wpos = lax.broadcasted_iota(jnp.int32, (M, P), 0) % W             # w coordinate
    v_left = jnp.where(wpos == 0, 0.0,
                       pltpu.roll(t1, shift=1, axis=0))               # act[h, w-1]
    v_right = jnp.where(wpos == W - 1, 0.0,
                        pltpu.roll(t1, shift=M - 1, axis=0))          # act[h, w+1]

    zrow = jnp.zeros((1, W, P), cdt)
    for a_ref, v in zip((a0_ref, a1_ref, a2_ref), (v_left, t1, v_right)):
        a_ref[0:1] = zrow                                             # top halo row
        a_ref[H + 1:H + 2] = zrow                                     # bottom halo row
        a_ref[1:H + 1] = v.reshape(H, W, P).astype(cdt)               # bulk store

    # ---- conv2 (3x3, stride=1, pad=1, dil=1) + bn2 (bias) + relu ---------------
    # 9 whole-plane (M, P) x (P, P) matmuls; all loads are aligned slabs and the
    # loop is a bare acc += dot chain (lets v7x accumulate in the MXU result buffer).
    acc = jnp.zeros((M, P), jnp.float32)
    for dy in range(3):
        for dx, a_ref in enumerate((a0_ref, a1_ref, a2_ref)):
            win = a_ref[dy:dy + H].reshape(M, P)
            acc = acc + jnp.dot(win, w2_ref[dy * 3 + dx],
                                preferred_element_type=jnp.float32)
    t2 = jnp.maximum(acc + b2_ref[...], 0.0).astype(cdt)              # (M, P)

    # ---- conv3 (1x1) + bn3 (bias) + residual + relu : one (M, P) x (P, Cout) ---
    t3 = jnp.dot(t2, w3_ref[...],
                 preferred_element_type=jnp.float32) + b3_ref[...]
    out = jnp.maximum(t3 + x2d.astype(jnp.float32), 0.0)              # (M, Cout) f32
    o_ref[0] = out.reshape(H, W, Cout).astype(o_ref.dtype)            # lane-dense store


def bottleneck_forward_nhwc(x, params, *, compute_dtype=None, lane_multiple=LANE,
                            vmem_limit_bytes=64 * 1024 * 1024):
    """Fused bottleneck forward, NHWC in / NHWC out (inference-mode BN folded).

    Prefer this entry point and keep activations NHWC (with channels already padded
    to a lane multiple) when chaining blocks; the NCHW wrapper below adds two full
    HBM transposes per call purely for PyTorch-layout parity.
    """
    w1, s1, b1, w2, s2, b2, w3, s3, b3 = params
    N, H, W, Cin = x.shape
    P = w1.shape[1]
    Cout = w3.shape[1]
    assert Cin == Cout, "no downsample branch: residual requires inplanes == planes*4"

    if compute_dtype is None:
        compute_dtype = x.dtype
    compute_dtype = jnp.dtype(compute_dtype)

    # Pad every channel axis to a lane multiple (128; 256 is also a good choice on
    # v6e/v7x when the real channel counts allow it).  Padded weight rows/cols and
    # biases are zero and padded input lanes are zero, so padded lanes stay exactly
    # zero through conv1/conv2/conv3/residual/relu and are sliced off at the end.
    Cin_p = _round_up(Cin, lane_multiple)
    P_p = _round_up(P, lane_multiple)
    Cout_p = _round_up(Cout, lane_multiple)

    x_p = x if Cin_p == Cin else jnp.pad(
        x, ((0, 0), (0, 0), (0, 0), (0, Cin_p - Cin)))

    def pad2(a, r, c):
        return jnp.pad(a, ((0, r - a.shape[0]), (0, c - a.shape[1])))

    # Fold the BN scale into the output-channel columns of each conv weight.
    w1f = pad2(w1 * s1, Cin_p, P_p).astype(compute_dtype)              # (Cin_p, P_p)
    w2f = jnp.pad((w2 * s2.reshape(1, 1, 1, P)).reshape(9, P, P),
                  ((0, 0), (0, P_p - P), (0, P_p - P))).astype(compute_dtype)
    w3f = pad2(w3 * s3, P_p, Cout_p).astype(compute_dtype)             # (P_p, Cout_p)
    b1f = pad2(b1.astype(jnp.float32), 1, P_p)
    b2f = pad2(b2.astype(jnp.float32), 1, P_p)
    b3f = pad2(b3.astype(jnp.float32), 1, Cout_p)

    def const_spec(a):
        nd = a.ndim
        return pl.BlockSpec(a.shape, lambda n, _nd=nd: (0,) * _nd)

    itemsize = x_p.dtype.itemsize
    wbytes = ((w1f.size + w2f.size + w3f.size) * compute_dtype.itemsize
              + (b1f.size + b2f.size + b3f.size) * 4)
    cost = pl.CostEstimate(
        flops=int(2 * N * H * W * (Cin_p * P_p + 9 * P_p * P_p + P_p * Cout_p)),
        transcendentals=0,
        bytes_accessed=int(x_p.size * itemsize + N * H * W * Cout_p * itemsize + wbytes))

    out = pl.pallas_call(
        _bottleneck_kernel,
        out_shape=jax.ShapeDtypeStruct((N, H, W, Cout_p), x.dtype),
        grid_spec=pltpu.PrefetchScalarGridSpec(
            num_scalar_prefetch=0,
            grid=(N,),
            in_specs=[
                pl.BlockSpec((1, H, W, Cin_p), lambda n: (n, 0, 0, 0)),
                const_spec(w1f), const_spec(b1f),
                const_spec(w2f), const_spec(b2f),
                const_spec(w3f), const_spec(b3f),
            ],
            out_specs=pl.BlockSpec((1, H, W, Cout_p), lambda n: (n, 0, 0, 0)),
            scratch_shapes=[pltpu.VMEM((H + 2, W, P_p), compute_dtype)] * 3,
        ),
        compiler_params=pltpu.CompilerParams(
            dimension_semantics=("parallel",),
            vmem_limit_bytes=vmem_limit_bytes),
        cost_estimate=cost,
    )(x_p, w1f, b1f, w2f, b2f, w3f, b3f)

    return out if Cout_p == Cout else out[..., :Cout]


def bottleneck_forward(x_nchw, params, **kwargs):
    """NCHW convenience wrapper (PyTorch layout).

    Each transpose here is a full HBM read+write of the activations as a separate
    XLA op -- when chaining blocks, stay NHWC and call bottleneck_forward_nhwc."""
    x = jnp.transpose(x_nchw, (0, 2, 3, 1))                           # NCHW -> NHWC
    out = bottleneck_forward_nhwc(x, params, **kwargs)
    return jnp.transpose(out, (0, 3, 1, 2))                           # NHWC -> NCHW


def init_params(key, inplanes, planes, eps=1e-5):
    """Deterministic synthetic parameters (shapes from the module's __init__)."""
    expansion = 4
    cout = planes * expansion
    ks = jax.random.split(key, 15)

    w1 = 0.1 * jax.random.normal(ks[0], (inplanes, planes), jnp.float32)      # 1x1
    w2 = 0.1 * jax.random.normal(ks[1], (3, 3, planes, planes), jnp.float32)   # 3x3 HWIO
    w3 = 0.1 * jax.random.normal(ks[2], (planes, cout), jnp.float32)           # 1x1

    def folded_bn(kg, kb, km, kv, c):
        gamma = 1.0 + 0.1 * jax.random.normal(kg, (c,), jnp.float32)
        beta = 0.1 * jax.random.normal(kb, (c,), jnp.float32)
        mean = 0.1 * jax.random.normal(km, (c,), jnp.float32)
        var = jnp.abs(jax.random.normal(kv, (c,), jnp.float32)) + 0.5
        scale = gamma / jnp.sqrt(var + eps)
        shift = beta - mean * scale
        return scale.reshape(1, c), shift.reshape(1, c)

    s1, b1 = folded_bn(ks[3], ks[4], ks[5], ks[6], planes)
    s2, b2 = folded_bn(ks[7], ks[8], ks[9], ks[10], planes)
    s3, b3 = folded_bn(ks[11], ks[12], ks[13], ks[14], cout)
    return (w1, s1, b1, w2, s2, b2, w3, s3, b3)


def bottleneck_reference(x_nchw, params):
    """Pure-JAX (XLA) reference for correctness checking."""
    w1, s1, b1, w2, s2, b2, w3, s3, b3 = params
    x = jnp.transpose(x_nchw, (0, 2, 3, 1))
    t = jnp.einsum('nhwc,cp->nhwp', x, w1)
    t = jnp.maximum(t * s1[0] + b1[0], 0.0)
    t = lax.conv_general_dilated(t, w2, window_strides=(1, 1), padding='SAME',
                                 dimension_numbers=('NHWC', 'HWIO', 'NHWC'))
    t = jnp.maximum(t * s2[0] + b2[0], 0.0)
    t = jnp.einsum('nhwp,pq->nhwq', t, w3)
    t = t * s3[0] + b3[0]
    out = jnp.maximum(t + x, 0.0)
    return jnp.transpose(out, (0, 3, 1, 2))


if __name__ == "__main__":
    # Small shapes: batch=2, planes=4 => inplanes = planes*4 = 16, spatial 16x16.
    N, planes, H, W = 2, 4, 16, 16
    inplanes = planes * 4

    key = jax.random.PRNGKey(0)
    kx, kp = jax.random.split(key)
    x = jax.random.normal(kx, (N, inplanes, H, W), jnp.float32)   # NCHW, like PyTorch
    params = init_params(kp, inplanes, planes)

    ref = jax.block_until_ready(bottleneck_reference(x, params))

    # f32 path: tight correctness check.
    out = jax.block_until_ready(bottleneck_forward(x, params))
    assert out.shape == (N, inplanes, H, W), out.shape
    max_err = float(jnp.max(jnp.abs(out - ref)))
    assert max_err < 1e-3, f"f32 mismatch vs reference: max abs err {max_err}"

    # bf16 MXU path (weights, scratch and matmul operands in bf16, f32 accumulate).
    out_bf16 = jax.block_until_ready(
        bottleneck_forward(x, params, compute_dtype=jnp.bfloat16))
    max_err_bf16 = float(jnp.max(jnp.abs(out_bf16 - ref)))
    assert max_err_bf16 < 1e-1, f"bf16 mismatch vs reference: max abs err {max_err_bf16}"

    print("KERNEL_OK")
</pallas_src>

<mosaic_0001>
module attributes {stable_mosaic.version = 11 : i64} {
  func.func @_bottleneck_kernel(%arg0: i32, %arg1: memref<1x16x16x128xf32, #tpu.memory_space<vmem>>, %arg2: memref<128x128xf32, #tpu.memory_space<vmem>>, %arg3: memref<1x128xf32, #tpu.memory_space<vmem>>, %arg4: memref<9x128x128xf32, #tpu.memory_space<vmem>>, %arg5: memref<1x128xf32, #tpu.memory_space<vmem>>, %arg6: memref<128x128xf32, #tpu.memory_space<vmem>>, %arg7: memref<1x128xf32, #tpu.memory_space<vmem>>, %arg8: memref<1x16x16x128xf32, #tpu.memory_space<vmem>>, %arg9: memref<18x16x128xf32, #tpu.memory_space<vmem>>, %arg10: memref<18x16x128xf32, #tpu.memory_space<vmem>>, %arg11: memref<18x16x128xf32, #tpu.memory_space<vmem>>) attributes {dimension_semantics = [#tpu.dimension_semantics<parallel>], iteration_bounds = array<i64: 2>, scalar_prefetch = 0 : i64, scratch_operands = 3 : i64, tpu.core_type = #tpu.core_type<tc>, window_params = [{transform_indices = @transform_0, window_bounds = array<i64: 1, 16, 16, 128>}, {pipeline_mode = #tpu.pipeline_mode<synchronous>, transform_indices = @transform_1, window_bounds = array<i64: 128, 128>}, {pipeline_mode = #tpu.pipeline_mode<synchronous>, transform_indices = @transform_2, window_bounds = array<i64: 1, 128>}, {pipeline_mode = #tpu.pipeline_mode<synchronous>, transform_indices = @transform_3, window_bounds = array<i64: 9, 128, 128>}, {pipeline_mode = #tpu.pipeline_mode<synchronous>, transform_indices = @transform_4, window_bounds = array<i64: 1, 128>}, {pipeline_mode = #tpu.pipeline_mode<synchronous>, transform_indices = @transform_5, window_bounds = array<i64: 128, 128>}, {pipeline_mode = #tpu.pipeline_mode<synchronous>, transform_indices = @transform_6, window_bounds = array<i64: 1, 128>}, {transform_indices = @transform_7, window_bounds = array<i64: 1, 16, 16, 128>}]} {
    %c0 = arith.constant 0 : index
    %c0_0 = arith.constant 0 : index
    %c0_1 = arith.constant 0 : index
    %c0_2 = arith.constant 0 : index
    %0 = vector.load %arg1[%c0, %c0_0, %c0_1, %c0_2] : memref<1x16x16x128xf32, #tpu.memory_space<vmem>>, vector<1x16x16x128xf32>
    %1 = vector.shape_cast %0 : vector<1x16x16x128xf32> to vector<16x16x128xf32>
    %2 = vector.shape_cast %1 : vector<16x16x128xf32> to vector<256x128xf32>
    %c0_3 = arith.constant 0 : index
    %c0_4 = arith.constant 0 : index
    %3 = vector.load %arg2[%c0_3, %c0_4] : memref<128x128xf32, #tpu.memory_space<vmem>>, vector<128x128xf32>
    %cst = arith.constant dense<0.000000e+00> : vector<256x128xf32>
    %4 = tpu.matmul %2, %3, %cst {dimension_numbers = #tpu.dot_dimension_numbers<[1], [0], [0], [1], [0, 0, 1, 1], [], []>} : vector<256x128xf32>, vector<128x128xf32>, vector<256x128xf32> -> vector<256x128xf32>
    %c0_5 = arith.constant 0 : index
    %c0_6 = arith.constant 0 : index
    %5 = vector.load %arg3[%c0_5, %c0_6] : memref<1x128xf32, #tpu.memory_space<vmem>>, vector<1x128xf32>
    %6 = vector.broadcast %5 : vector<1x128xf32> to vector<256x128xf32>
    %7 = arith.addf %4, %6 : vector<256x128xf32>
    %cst_7 = arith.constant 0.000000e+00 : f32
    %8 = vector.broadcast %cst_7 : f32 to vector<256x128xf32>
    %9 = arith.maximumf %7, %8 : vector<256x128xf32>
    %10 = tpu.iota {dimensions = array<i32: 0>} : vector<256x128xi32>
    %c16_i32 = arith.constant 16 : i32
    %c0_i32 = arith.constant 0 : i32
    %11 = arith.cmpi eq, %c16_i32, %c0_i32 : i32
    %c1_i32 = arith.constant 1 : i32
    %12 = arith.select %11, %c1_i32, %c16_i32 : i32
    %13 = vector.broadcast %12 : i32 to vector<256x128xi32>
    %14 = arith.remsi %10, %13 : vector<256x128xi32>
    %c0_i32_8 = arith.constant 0 : i32
    %15 = vector.broadcast %c0_i32_8 : i32 to vector<256x128xi32>
    %16 = arith.cmpi ne, %14, %15 : vector<256x128xi32>
    %c0_i32_9 = arith.constant 0 : i32
    %17 = vector.broadcast %c0_i32_9 : i32 to vector<256x128xi32>
    %18 = arith.cmpi slt, %14, %17 : vector<256x128xi32>
    %c0_i32_10 = arith.constant 0 : i32
    %19 = arith.cmpi slt, %12, %c0_i32_10 : i32
    %20 = vector.broadcast %19 : i1 to vector<256x128xi1>
    %21 = vector.broadcast %20 : vector<256x128xi1> to vector<256x128xi1>
    %22 = arith.xori %18, %21 : vector<256x128xi1>
    %23 = arith.andi %22, %16 : vector<256x128xi1>
    %24 = vector.broadcast %12 : i32 to vector<256x128xi32>
    %25 = arith.addi %14, %24 : vector<256x128xi32>
    %26 = arith.select %23, %25, %14 : vector<256x128xi1>, vector<256x128xi32>
    %c0_i32_11 = arith.constant 0 : i32
    %27 = vector.broadcast %c0_i32_11 : i32 to vector<256x128xi32>
    %28 = arith.cmpi eq, %26, %27 : vector<256x128xi32>
    %c1_i32_12 = arith.constant 1 : i32
    %29 = tpu.dynamic_rotate %9 by %c1_i32_12 dim 0 : vector<256x128xf32>, i32 -> vector<256x128xf32>
    %cst_13 = arith.constant 0.000000e+00 : f32
    %30 = vector.broadcast %cst_13 : f32 to vector<256x128xf32>
    %31 = arith.select %28, %30, %29 : vector<256x128xi1>, vector<256x128xf32>
    %c15_i32 = arith.constant 15 : i32
    %32 = vector.broadcast %c15_i32 : i32 to vector<256x128xi32>
    %33 = arith.cmpi eq, %26, %32 : vector<256x128xi32>
    %c255_i32 = arith.constant 255 : i32
    %34 = tpu.dynamic_rotate %9 by %c255_i32 dim 0 : vector<256x128xf32>, i32 -> vector<256x128xf32>
    %cst_14 = arith.constant 0.000000e+00 : f32
    %35 = vector.broadcast %cst_14 : f32 to vector<256x128xf32>
    %36 = arith.select %33, %35, %34 : vector<256x128xi1>, vector<256x128xf32>
    %cst_15 = arith.constant 0.000000e+00 : f32
    %37 = vector.broadcast %cst_15 : f32 to vector<1x16x128xf32>
    %c0_16 = arith.constant 0 : index
    %c0_17 = arith.constant 0 : index
    %c0_18 = arith.constant 0 : index
    %38 = vector.load %arg9[%c0_16, %c0_17, %c0_18] : memref<18x16x128xf32, #tpu.memory_space<vmem>>, vector<1x16x128xf32>
    tpu.vector_store %arg9[%c0_16, %c0_17, %c0_18], %37 {strides = array<i32>} : memref<18x16x128xf32, #tpu.memory_space<vmem>>, vector<1x16x128xf32>,
    %c17 = arith.constant 17 : index
    %c0_19 = arith.constant 0 : index
    %c0_20 = arith.constant 0 : index
    %39 = vector.load %arg9[%c17, %c0_19, %c0_20] : memref<18x16x128xf32, #tpu.memory_space<vmem>>, vector<1x16x128xf32>
    tpu.vector_store %arg9[%c17, %c0_19, %c0_20], %37 {strides = array<i32>} : memref<18x16x128xf32, #tpu.memory_space<vmem>>, vector<1x16x128xf32>,
    %40 = vector.shape_cast %31 : vector<256x128xf32> to vector<16x16x128xf32>
    %c1 = arith.constant 1 : index
    %c0_21 = arith.constant 0 : index
    %c0_22 = arith.constant 0 : index
    %41 = vector.load %arg9[%c1, %c0_21, %c0_22] : memref<18x16x128xf32, #tpu.memory_space<vmem>>, vector<16x16x128xf32>
    tpu.vector_store %arg9[%c1, %c0_21, %c0_22], %40 {strides = array<i32>} : memref<18x16x128xf32, #tpu.memory_space<vmem>>, vector<16x16x128xf32>,
    %c0_23 = arith.constant 0 : index
    %c0_24 = arith.constant 0 : index
    %c0_25 = arith.constant 0 : index
    %42 = vector.load %arg10[%c0_23, %c0_24, %c0_25] : memref<18x16x128xf32, #tpu.memory_space<vmem>>, vector<1x16x128xf32>
    tpu.vector_store %arg10[%c0_23, %c0_24, %c0_25], %37 {strides = array<i32>} : memref<18x16x128xf32, #tpu.memory_space<vmem>>, vector<1x16x128xf32>,
    %c17_26 = arith.constant 17 : index
    %c0_27 = arith.constant 0 : index
    %c0_28 = arith.constant 0 : index
    %43 = vector.load %arg10[%c17_26, %c0_27, %c0_28] : memref<18x16x128xf32, #tpu.memory_space<vmem>>, vector<1x16x128xf32>
    tpu.vector_store %arg10[%c17_26, %c0_27, %c0_28], %37 {strides = array<i32>} : memref<18x16x128xf32, #tpu.memory_space<vmem>>, vector<1x16x128xf32>,
    %44 = vector.shape_cast %9 : vector<256x128xf32> to vector<16x16x128xf32>
    %c1_29 = arith.constant 1 : index
    %c0_30 = arith.constant 0 : index
    %c0_31 = arith.constant 0 : index
    %45 = vector.load %arg10[%c1_29, %c0_30, %c0_31] : memref<18x16x128xf32, #tpu.memory_space<vmem>>, vector<16x16x128xf32>
    tpu.vector_store %arg10[%c1_29, %c0_30, %c0_31], %44 {strides = array<i32>} : memref<18x16x128xf32, #tpu.memory_space<vmem>>, vector<16x16x128xf32>,
    %c0_32 = arith.constant 0 : index
    %c0_33 = arith.constant 0 : index
    %c0_34 = arith.constant 0 : index
    %46 = vector.load %arg11[%c0_32, %c0_33, %c0_34] : memref<18x16x128xf32, #tpu.memory_space<vmem>>, vector<1x16x128xf32>
    tpu.vector_store %arg11[%c0_32, %c0_33, %c0_34], %37 {strides = array<i32>} : memref<18x16x128xf32, #tpu.memory_space<vmem>>, vector<1x16x128xf32>,
    %c17_35 = arith.constant 17 : index
    %c0_36 = arith.constant 0 : index
    %c0_37 = arith.constant 0 : index
    %47 = vector.load %arg11[%c17_35, %c0_36, %c0_37] : memref<18x16x128xf32, #tpu.memory_space<vmem>>, vector<1x16x128xf32>
    tpu.vector_store %arg11[%c17_35, %c0_36, %c0_37], %37 {strides = array<i32>} : memref<18x16x128xf32, #tpu.memory_space<vmem>>, vector<1x16x128xf32>,
    %48 = vector.shape_cast %36 : vector<256x128xf32> to vector<16x16x128xf32>
    %c1_38 = arith.constant 1 : index
    %c0_39 = arith.constant 0 : index
    %c0_40 = arith.constant 0 : index
    %49 = vector.load %arg11[%c1_38, %c0_39, %c0_40] : memref<18x16x128xf32, #tpu.memory_space<vmem>>, vector<16x16x128xf32>
    tpu.vector_store %arg11[%c1_38, %c0_39, %c0_40], %48 {strides = array<i32>} : memref<18x16x128xf32, #tpu.memory_space<vmem>>, vector<16x16x128xf32>,
    %cst_41 = arith.constant 0.000000e+00 : f32
    %50 = vector.broadcast %cst_41 : f32 to vector<256x128xf32>
    %c0_42 = arith.constant 0 : index
    %c0_43 = arith.constant 0 : index
    %c0_44 = arith.constant 0 : index
    %51 = vector.load %arg9[%c0_42, %c0_43, %c0_44] : memref<18x16x128xf32, #tpu.memory_space<vmem>>, vector<16x16x128xf32>
    %52 = vector.shape_cast %51 : vector<16x16x128xf32> to vector<256x128xf32>
    %c0_45 = arith.constant 0 : index
    %c0_46 = arith.constant 0 : index
    %c0_47 = arith.constant 0 : index
    %53 = vector.load %arg4[%c0_45, %c0_46, %c0_47] : memref<9x128x128xf32, #tpu.memory_space<vmem>>, vector<1x128x128xf32>
    %54 = vector.shape_cast %53 : vector<1x128x128xf32> to vector<128x128xf32>
    %cst_48 = arith.constant dense<0.000000e+00> : vector<256x128xf32>
    %55 = tpu.matmul %52, %54, %cst_48 {dimension_numbers = #tpu.dot_dimension_numbers<[1], [0], [0], [1], [0, 0, 1, 1], [], []>} : vector<256x128xf32>, vector<128x128xf32>, vector<256x128xf32> -> vector<256x128xf32>
    %56 = arith.addf %50, %55 : vector<256x128xf32>
    %c0_49 = arith.constant 0 : index
    %c0_50 = arith.constant 0 : index
    %c0_51 = arith.constant 0 : index
    %57 = vector.load %arg10[%c0_49, %c0_50, %c0_51] : memref<18x16x128xf32, #tpu.memory_space<vmem>>, vector<16x16x128xf32>
    %58 = vector.shape_cast %57 : vector<16x16x128xf32> to vector<256x128xf32>
    %c1_52 = arith.constant 1 : index
    %c0_53 = arith.constant 0 : index
    %c0_54 = arith.constant 0 : index
    %59 = vector.load %arg4[%c1_52, %c0_53, %c0_54] : memref<9x128x128xf32, #tpu.memory_space<vmem>>, vector<1x128x128xf32>
    %60 = vector.shape_cast %59 : vector<1x128x128xf32> to vector<128x128xf32>
    %cst_55 = arith.constant dense<0.000000e+00> : vector<256x128xf32>
    %61 = tpu.matmul %58, %60, %cst_55 {dimension_numbers = #tpu.dot_dimension_numbers<[1], [0], [0], [1], [0, 0, 1, 1], [], []>} : vector<256x128xf32>, vector<128x128xf32>, vector<256x128xf32> -> vector<256x128xf32>
    %62 = arith.addf %56, %61 : vector<256x128xf32>
    %c0_56 = arith.constant 0 : index
    %c0_57 = arith.constant 0 : index
    %c0_58 = arith.constant 0 : index
    %63 = vector.load %arg11[%c0_56, %c0_57, %c0_58] : memref<18x16x128xf32, #tpu.memory_space<vmem>>, vector<16x16x128xf32>
    %64 = vector.shape_cast %63 : vector<16x16x128xf32> to vector<256x128xf32>
    %c2 = arith.constant 2 : index
    %c0_59 = arith.constant 0 : index
    %c0_60 = arith.constant 0 : index
    %65 = vector.load %arg4[%c2, %c0_59, %c0_60] : memref<9x128x128xf32, #tpu.memory_space<vmem>>, vector<1x128x128xf32>
    %66 = vector.shape_cast %65 : vector<1x128x128xf32> to vector<128x128xf32>
    %cst_61 = arith.constant dense<0.000000e+00> : vector<256x128xf32>
    %67 = tpu.matmul %64, %66, %cst_61 {dimension_numbers = #tpu.dot_dimension_numbers<[1], [0], [0], [1], [0, 0, 1, 1], [], []>} : vector<256x128xf32>, vector<128x128xf32>, vector<256x128xf32> -> vector<256x128xf32>
    %68 = arith.addf %62, %67 : vector<256x128xf32>
    %c1_62 = arith.constant 1 : index
    %c0_63 = arith.constant 0 : index
    %c0_64 = arith.constant 0 : index
    %69 = vector.load %arg9[%c1_62, %c0_63, %c0_64] : memref<18x16x128xf32, #tpu.memory_space<vmem>>, vector<16x16x128xf32>
    %70 = vector.shape_cast %69 : vector<16x16x128xf32> to vector<256x128xf32>
    %c3 = arith.constant 3 : index
    %c0_65 = arith.constant 0 : index
    %c0_66 = arith.constant 0 : index
    %71 = vector.load %arg4[%c3, %c0_65, %c0_66] : memref<9x128x128xf32, #tpu.memory_space<vmem>>, vector<1x128x128xf32>
    %72 = vector.shape_cast %71 : vector<1x128x128xf32> to vector<128x128xf32>
    %cst_67 = arith.constant dense<0.000000e+00> : vector<256x128xf32>
    %73 = tpu.matmul %70, %72, %cst_67 {dimension_numbers = #tpu.dot_dimension_numbers<[1], [0], [0], [1], [0, 0, 1, 1], [], []>} : vector<256x128xf32>, vector<128x128xf32>, vector<256x128xf32> -> vector<256x128xf32>
    %74 = arith.addf %68, %73 : vector<256x128xf32>
    %c1_68 = arith.constant 1 : index
    %c0_69 = arith.constant 0 : index
    %c0_70 = arith.constant 0 : index
    %75 = vector.load %arg10[%c1_68, %c0_69, %c0_70] : memref<18x16x128xf32, #tpu.memory_space<vmem>>, vector<16x16x128xf32>
    %76 = vector.shape_cast %75 : vector<16x16x128xf32> to vector<256x128xf32>
    %c4 = arith.constant 4 : index
    %c0_71 = arith.constant 0 : index
    %c0_72 = arith.constant 0 : index
    %77 = vector.load %arg4[%c4, %c0_71, %c0_72] : memref<9x128x128xf32, #tpu.memory_space<vmem>>, vector<1x128x128xf32>
    %78 = vector.shape_cast %77 : vector<1x128x128xf32> to vector<128x128xf32>
    %cst_73 = arith.constant dense<0.000000e+00> : vector<256x128xf32>
    %79 = tpu.matmul %76, %78, %cst_73 {dimension_numbers = #tpu.dot_dimension_numbers<[1], [0], [0], [1], [0, 0, 1, 1], [], []>} : vector<256x128xf32>, vector<128x128xf32>, vector<256x128xf32> -> vector<256x128xf32>
    %80 = arith.addf %74, %79 : vector<256x128xf32>
    %c1_74 = arith.constant 1 : index
    %c0_75 = arith.constant 0 : index
    %c0_76 = arith.constant 0 : index
    %81 = vector.load %arg11[%c1_74, %c0_75, %c0_76] : memref<18x16x128xf32, #tpu.memory_space<vmem>>, vector<16x16x128xf32>
    %82 = vector.shape_cast %81 : vector<16x16x128xf32> to vector<256x128xf32>
    %c5 = arith.constant 5 : index
    %c0_77 = arith.constant 0 : index
    %c0_78 = arith.constant 0 : index
    %83 = vector.load %arg4[%c5, %c0_77, %c0_78] : memref<9x128x128xf32, #tpu.memory_space<vmem>>, vector<1x128x128xf32>
    %84 = vector.shape_cast %83 : vector<1x128x128xf32> to vector<128x128xf32>
    %cst_79 = arith.constant dense<0.000000e+00> : vector<256x128xf32>
    %85 = tpu.matmul %82, %84, %cst_79 {dimension_numbers = #tpu.dot_dimension_numbers<[1], [0], [0], [1], [0, 0, 1, 1], [], []>} : vector<256x128xf32>, vector<128x128xf32>, vector<256x128xf32> -> vector<256x128xf32>
    %86 = arith.addf %80, %85 : vector<256x128xf32>
    %c2_80 = arith.constant 2 : index
    %c0_81 = arith.constant 0 : index
    %c0_82 = arith.constant 0 : index
    %87 = vector.load %arg9[%c2_80, %c0_81, %c0_82] : memref<18x16x128xf32, #tpu.memory_space<vmem>>, vector<16x16x128xf32>
    %88 = vector.shape_cast %87 : vector<16x16x128xf32> to vector<256x128xf32>
    %c6 = arith.constant 6 : index
    %c0_83 = arith.constant 0 : index
    %c0_84 = arith.constant 0 : index
    %89 = vector.load %arg4[%c6, %c0_83, %c0_84] : memref<9x128x128xf32, #tpu.memory_space<vmem>>, vector<1x128x128xf32>
    %90 = vector.shape_cast %89 : vector<1x128x128xf32> to vector<128x128xf32>
    %cst_85 = arith.constant dense<0.000000e+00> : vector<256x128xf32>
    %91 = tpu.matmul %88, %90, %cst_85 {dimension_numbers = #tpu.dot_dimension_numbers<[1], [0], [0], [1], [0, 0, 1, 1], [], []>} : vector<256x128xf32>, vector<128x128xf32>, vector<256x128xf32> -> vector<256x128xf32>
    %92 = arith.addf %86, %91 : vector<256x128xf32>
    %c2_86 = arith.constant 2 : index
    %c0_87 = arith.constant 0 : index
    %c0_88 = arith.constant 0 : index
    %93 = vector.load %arg10[%c2_86, %c0_87, %c0_88] : memref<18x16x128xf32, #tpu.memory_space<vmem>>, vector<16x16x128xf32>
    %94 = vector.shape_cast %93 : vector<16x16x128xf32> to vector<256x128xf32>
    %c7 = arith.constant 7 : index
    %c0_89 = arith.constant 0 : index
    %c0_90 = arith.constant 0 : index
    %95 = vector.load %arg4[%c7, %c0_89, %c0_90] : memref<9x128x128xf32, #tpu.memory_space<vmem>>, vector<1x128x128xf32>
    %96 = vector.shape_cast %95 : vector<1x128x128xf32> to vector<128x128xf32>
    %cst_91 = arith.constant dense<0.000000e+00> : vector<256x128xf32>
    %97 = tpu.matmul %94, %96, %cst_91 {dimension_numbers = #tpu.dot_dimension_numbers<[1], [0], [0], [1], [0, 0, 1, 1], [], []>} : vector<256x128xf32>, vector<128x128xf32>, vector<256x128xf32> -> vector<256x128xf32>
    %98 = arith.addf %92, %97 : vector<256x128xf32>
    %c2_92 = arith.constant 2 : index
    %c0_93 = arith.constant 0 : index
    %c0_94 = arith.constant 0 : index
    %99 = vector.load %arg11[%c2_92, %c0_93, %c0_94] : memref<18x16x128xf32, #tpu.memory_space<vmem>>, vector<16x16x128xf32>
    %100 = vector.shape_cast %99 : vector<16x16x128xf32> to vector<256x128xf32>
    %c8 = arith.constant 8 : index
    %c0_95 = arith.constant 0 : index
    %c0_96 = arith.constant 0 : index
    %101 = vector.load %arg4[%c8, %c0_95, %c0_96] : memref<9x128x128xf32, #tpu.memory_space<vmem>>, vector<1x128x128xf32>
    %102 = vector.shape_cast %101 : vector<1x128x128xf32> to vector<128x128xf32>
    %cst_97 = arith.constant dense<0.000000e+00> : vector<256x128xf32>
    %103 = tpu.matmul %100, %102, %cst_97 {dimension_numbers = #tpu.dot_dimension_numbers<[1], [0], [0], [1], [0, 0, 1, 1], [], []>} : vector<256x128xf32>, vector<128x128xf32>, vector<256x128xf32> -> vector<256x128xf32>
    %104 = arith.addf %98, %103 : vector<256x128xf32>
    %c0_98 = arith.constant 0 : index
    %c0_99 = arith.constant 0 : index
    %105 = vector.load %arg5[%c0_98, %c0_99] : memref<1x128xf32, #tpu.memory_space<vmem>>, vector<1x128xf32>
    %106 = vector.broadcast %105 : vector<1x128xf32> to vector<256x128xf32>
    %107 = arith.addf %104, %106 : vector<256x128xf32>
    %cst_100 = arith.constant 0.000000e+00 : f32
    %108 = vector.broadcast %cst_100 : f32 to vector<256x128xf32>
    %109 = arith.maximumf %107, %108 : vector<256x128xf32>
    %c0_101 = arith.constant 0 : index
    %c0_102 = arith.constant 0 : index
    %110 = vector.load %arg6[%c0_101, %c0_102] : memref<128x128xf32, #tpu.memory_space<vmem>>, vector<128x128xf32>
    %cst_103 = arith.constant dense<0.000000e+00> : vector<256x128xf32>
    %111 = tpu.matmul %109, %110, %cst_103 {dimension_numbers = #tpu.dot_dimension_numbers<[1], [0], [0], [1], [0, 0, 1, 1], [], []>} : vector<256x128xf32>, vector<128x128xf32>, vector<256x128xf32> -> vector<256x128xf32>
    %c0_104 = arith.constant 0 : index
    %c0_105 = arith.constant 0 : index
    %112 = vector.load %arg7[%c0_104, %c0_105] : memref<1x128xf32, #tpu.memory_space<vmem>>, vector<1x128xf32>
    %113 = vector.broadcast %112 : vector<1x128xf32> to vector<256x128xf32>
    %114 = arith.addf %111, %113 : vector<256x128xf32>
    %115 = arith.addf %114, %2 : vector<256x128xf32>
    %cst_106 = arith.constant 0.000000e+00 : f32
    %116 = vector.broadcast %cst_106 : f32 to vector<256x128xf32>
    %117 = arith.maximumf %115, %116 : vector<256x128xf32>
    %118 = vector.shape_cast %117 : vector<256x128xf32> to vector<16x16x128xf32>
    %c0_107 = arith.constant 0 : index
    %c0_108 = arith.constant 0 : index
    %c0_109 = arith.constant 0 : index
    %c0_110 = arith.constant 0 : index
    %119 = vector.load %arg8[%c0_107, %c0_108, %c0_109, %c0_110] : memref<1x16x16x128xf32, #tpu.memory_space<vmem>>, vector<1x16x16x128xf32>
    %120 = vector.shape_cast %119 : vector<1x16x16x128xf32> to vector<16x16x128xf32>
    %121 = vector.shape_cast %118 : vector<16x16x128xf32> to vector<1x16x16x128xf32>
    tpu.vector_store %arg8[%c0_107, %c0_108, %c0_109, %c0_110], %121 {strides = array<i32>} : memref<1x16x16x128xf32, #tpu.memory_space<vmem>>, vector<1x16x16x128xf32>,
    return
  }
  func.func @transform_0(%arg0: i32) -> (i32, i32, i32, i32) {
    %c0_i32 = arith.constant 0 : i32
    %c0_i32_0 = arith.constant 0 : i32
    %c0_i32_1 = arith.constant 0 : i32
    %c0_i32_2 = arith.constant 0 : i32
    return %arg0, %c0_i32, %c0_i32_0, %c0_i32_1 : i32, i32, i32, i32
  }
  func.func @transform_1(%arg0: i32) -> (i32, i32) {
    %c0_i32 = arith.constant 0 : i32
    %c0_i32_0 = arith.constant 0 : i32
    %c0_i32_1 = arith.constant 0 : i32
    return %c0_i32, %c0_i32_0 : i32, i32
  }
  func.func @transform_2(%arg0: i32) -> (i32, i32) {
    %c0_i32 = arith.constant 0 : i32
    %c0_i32_0 = arith.constant 0 : i32
    %c0_i32_1 = arith.constant 0 : i32
    return %c0_i32, %c0_i32_0 : i32, i32
  }
  func.func @transform_3(%arg0: i32) -> (i32, i32, i32) {
    %c0_i32 = arith.constant 0 : i32
    %c0_i32_0 = arith.constant 0 : i32
    %c0_i32_1 = arith.constant 0 : i32
    %c0_i32_2 = arith.constant 0 : i32
    return %c0_i32, %c0_i32_0, %c0_i32_1 : i32, i32, i32
  }
  func.func @transform_4(%arg0: i32) -> (i32, i32) {
    %c0_i32 = arith.constant 0 : i32
    %c0_i32_0 = arith.constant 0 : i32
    %c0_i32_1 = arith.constant 0 : i32
    return %c0_i32, %c0_i32_0 : i32, i32
  }
  func.func @transform_5(%arg0: i32) -> (i32, i32) {
    %c0_i32 = arith.constant 0 : i32
    %c0_i32_0 = arith.constant 0 : i32
    %c0_i32_1 = arith.constant 0 : i32
    return %c0_i32, %c0_i32_0 : i32, i32
  }
  func.func @transform_6(%arg0: i32) -> (i32, i32) {
    %c0_i32 = arith.constant 0 : i32
    %c0_i32_0 = arith.constant 0 : i32
    %c0_i32_1 = arith.constant 0 : i32
    return %c0_i32, %c0_i32_0 : i32, i32
  }
  func.func @transform_7(%arg0: i32) -> (i32, i32, i32, i32) {
    %c0_i32 = arith.constant 0 : i32
    %c0_i32_0 = arith.constant 0 : i32
    %c0_i32_1 = arith.constant 0 : i32
    %c0_i32_2 = arith.constant 0 : i32
    return %arg0, %c0_i32, %c0_i32_0, %c0_i32_1 : i32, i32, i32, i32
  }
}

</mosaic_0001>

<llo_original>
// kernel: tpu_custom_call.1
$region0: #{tpu_custom_call.1}
  #allocation0 [shape = 'u32[]', space=smem, size = 0x4, offset = 0x4, fixed_abs, tag = 'smem constant byte address 0x4 - core index']
  #allocation1 [shape = 'u32[72,128]{1,0:T(1,128)}', space=vmem, size = 0x9000, scoped, tag = 'internal scratch']
  #allocation2 [shape = 'f32[18,16,128]{2,1,0:T(8,128)}', space=vmem, size = 0x24000, scoped, tag = 'scratch operand']
  #allocation3 [shape = 'f32[18,16,128]{2,1,0:T(8,128)}', space=vmem, size = 0x24000, scoped, tag = 'scratch operand']
  #allocation4 [shape = 'f32[18,16,128]{2,1,0:T(8,128)}', space=vmem, size = 0x24000, scoped, tag = 'scratch operand']
  %s0 = inlined_call_operand.hbm [shape: f32[2,16,16,128], index: 0, kind: input, shape index: {}]
  %s1 = inlined_call_operand.hbm [shape: f32[128,128], index: 1, kind: input, shape index: {}]
  %s2 = inlined_call_operand.vmem [shape: f32[1,128], index: 2, kind: input, shape index: {}]
  %s3 = inlined_call_operand.hbm [shape: f32[9,128,128], index: 3, kind: input, shape index: {}]
  %s4 = inlined_call_operand.vmem [shape: f32[1,128], index: 4, kind: input, shape index: {}]
  %s5 = inlined_call_operand.hbm [shape: f32[128,128], index: 5, kind: input, shape index: {}]
  %s6 = inlined_call_operand.vmem [shape: f32[1,128], index: 6, kind: input, shape index: {}]
  %s7 = inlined_call_operand.hbm [shape: f32[2,16,16,128], index: 7, kind: output, shape index: {}]
  %s8 = sld [smem:[#allocation0]]
  $region77: #{tpu_custom_call.1} parent=0
    _
  %s10 = ssub.s32 1, %s8
  %s11 = scalar_select 0, %s10, %s8
  $region1: #{tpu_custom_call.1} parent=0
    #allocation5 [shape = 'u8[262144]{0}', space=vmem, size = 0x40000, scoped, tag = 'input window, operand 0']
    #allocation6 [shape = 's32[2]{0}', space=sflag, size = 0x8, scoped, tag = 'scoped memory for tpu_custom_call.1']
    #allocation7 [shape = 's32[2]{0}', space=sflag, size = 0x8, scoped, tag = 'scoped memory for tpu_custom_call.1']
    #allocation8 [shape = 'u8[65536]{0}', space=vmem, size = 0x10000, scoped, tag = 'input window, operand 1, single buffered']
    #allocation9 [shape = 's32[1]{0}', space=sflag, size = 0x4, scoped, tag = 'scoped memory for tpu_custom_call.1']
    #allocation10 [shape = 'u8[589824]{0}', space=vmem, size = 0x90000, scoped, tag = 'input window, operand 3, single buffered']
    #allocation11 [shape = 'u8[65536]{0}', space=vmem, size = 0x10000, scoped, tag = 'input window, operand 5, single buffered']
    #allocation12 [shape = 's32[1]{0}', space=sflag, size = 0x4, scoped, tag = 'scoped memory for tpu_custom_call.1']
    #allocation13 [shape = 'u8[262144]{0}', space=vmem, size = 0x40000, scoped, tag = 'output window, operand 0']
    %12 = vsyncpa [#allocation6], 0
    %s13 = scalar_lea.sflag [#allocation6], 1
    %14 = vsyncpa %s13, 0
    %15 = vsyncpa [#allocation9], 0
    %16 = vsyncpa [#allocation12], 0
    %17 = vsyncpa [#allocation7], 0
    %s18 = scalar_lea.sflag [#allocation7], 1
    %19 = vsyncpa %s18, 0
    loop: start=0, step=1, limit=4
    $region2: #{tpu_custom_call.1} parent=1 // loop_pre_header
      _
    $region3: #{tpu_custom_call.1} parent=1 // loop_header
      %s21 = sphi 0, %s25
      %p22 = scmp.ge.s32.totalorder %s21, 4
      %s31 = sphi 0, %s33
      %s34 = sphi 0, %s31
      %s35 = sphi 0, %s34
      %s51 = sphi 0, %s35
      %s55 = sphi 0, %s55
      %s57 = sphi 0, %s55
      %s58 = sphi 0, %s57
      %s72 = sphi 0, %s58
      %s76 = sphi 0, %s76
      %s78 = sphi 0, %s76
      %s79 = sphi 0, %s78
      %s93 = sphi 0, %s79
      %s97 = sphi 0, %s97
      %s99 = sphi 0, %s97
      %s100 = sphi 0, %s99
      %s114 = sphi 0, %s100
      %s118 = sphi 0, %s118
      %s120 = sphi 0, %s118
      %s121 = sphi 0, %s120
      %s135 = sphi 0, %s121
      %s139 = sphi 0, %s139
      %s141 = sphi 0, %s139
      %s142 = sphi 0, %s141
      %s156 = sphi 0, %s142
      %s160 = sphi 0, %s160
      %s162 = sphi 0, %s160
      %s163 = sphi 0, %s162
      %s177 = sphi 0, %s163
      %s183 = sphi 0, %s185
      %s186 = sphi 0, %s183
      %s187 = sphi 0, %s186
      %s203 = sphi 0, %s187
    $region4: #{tpu_custom_call.1} parent=1 // loop_header_branch
      %24 = sbr.rel (%p22) target = $region8
    $region5: #{tpu_custom_call.1} parent=1 // loop_body
      %s26 = ssub.s32 %s21, 1
      %s27 = ssub.s32 %s21, 2
      %s28 = sadd.s32 %s21, 1
      %s29 = ssub.s32 %s21, %s28
      %p30 = scmp.eq.s32.totalorder %s29, 0
      %s32 = sadd.s32 %s31, 1
      %s33 = scalar_select %p30, %s31, %s32
      %p36 = pneg %p30
      %p37 = scmp.eq.s32.totalorder %s21, 1
      %p38 = por %p36, %p37
      %p39 = scmp.ne.s32.totalorder %s31, %s34
      %p40 = scmp.eq.s32.totalorder %s21, 0
      %p41 = por %p39, %p40
      %p42 = scmp.ne.s32.totalorder %s31, %s34
      %p43 = scmp.eq.s32.totalorder %s26, 1
      %p44 = por %p42, %p43
      %p45 = scmp.ne.s32.totalorder %s34, %s35
      %p46 = scmp.eq.s32.totalorder %s26, 0
      %p47 = por %p45, %p46
      %p48 = scmp.ne.s32.totalorder %s34, %s35
      %p49 = scmp.eq.s32.totalorder %s27, 1
      %p50 = por %p48, %p49
      %p52 = scmp.ne.s32.totalorder %s35, %s51
      %p53 = scmp.eq.s32.totalorder %s27, 0
      %p54 = por %p52, %p53
      %s56 = sadd.s32 %s55, 1
      %p59 = scmp.eq.s32.totalorder %s21, 1
      %p60 = scmp.ne.s32.totalorder %s55, %s57
      %p61 = scmp.eq.s32.totalorder %s21, 0
      %p62 = por %p60, %p61
      %p63 = scmp.ne.s32.totalorder %s55, %s57
      %p64 = scmp.eq.s32.totalorder %s26, 1
      %p65 = por %p63, %p64
      %p66 = scmp.ne.s32.totalorder %s57, %s58
      %p67 = scmp.eq.s32.totalorder %s26, 0
      %p68 = por %p66, %p67
      %p69 = scmp.ne.s32.totalorder %s57, %s58
      %p70 = scmp.eq.s32.totalorder %s27, 1
      %p71 = por %p69, %p70
      %p73 = scmp.ne.s32.totalorder %s58, %s72
      %p74 = scmp.eq.s32.totalorder %s27, 0
      %p75 = por %p73, %p74
      %s77 = sadd.s32 %s76, 1
      %p80 = scmp.eq.s32.totalorder %s21, 1
      %p81 = scmp.ne.s32.totalorder %s76, %s78
      %p82 = scmp.eq.s32.totalorder %s21, 0
      %p83 = por %p81, %p82
      %p84 = scmp.ne.s32.totalorder %s76, %s78
      %p85 = scmp.eq.s32.totalorder %s26, 1
      %p86 = por %p84, %p85
      %p87 = scmp.ne.s32.totalorder %s78, %s79
      %p88 = scmp.eq.s32.totalorder %s26, 0
      %p89 = por %p87, %p88
      %p90 = scmp.ne.s32.totalorder %s78, %s79
      %p91 = scmp.eq.s32.totalorder %s27, 1
      %p92 = por %p90, %p91
      %p94 = scmp.ne.s32.totalorder %s79, %s93
      %p95 = scmp.eq.s32.totalorder %s27, 0
      %p96 = por %p94, %p95
      %s98 = sadd.s32 %s97, 1
      %p101 = scmp.eq.s32.totalorder %s21, 1
      %p102 = scmp.ne.s32.totalorder %s97, %s99
      %p103 = scmp.eq.s32.totalorder %s21, 0
      %p104 = por %p102, %p103
      %p105 = scmp.ne.s32.totalorder %s97, %s99
      %p106 = scmp.eq.s32.totalorder %s26, 1
      %p107 = por %p105, %p106
      %p108 = scmp.ne.s32.totalorder %s99, %s100
      %p109 = scmp.eq.s32.totalorder %s26, 0
      %p110 = por %p108, %p109
      %p111 = scmp.ne.s32.totalorder %s99, %s100
      %p112 = scmp.eq.s32.totalorder %s27, 1
      %p113 = por %p111, %p112
      %p115 = scmp.ne.s32.totalorder %s100, %s114
      %p116 = scmp.eq.s32.totalorder %s27, 0
      %p117 = por %p115, %p116
      %s119 = sadd.s32 %s118, 1
      %p122 = scmp.eq.s32.totalorder %s21, 1
      %p123 = scmp.ne.s32.totalorder %s118, %s120
      %p124 = scmp.eq.s32.totalorder %s21, 0
      %p125 = por %p123, %p124
      %p126 = scmp.ne.s32.totalorder %s118, %s120
      %p127 = scmp.eq.s32.totalorder %s26, 1
      %p128 = por %p126, %p127
      %p129 = scmp.ne.s32.totalorder %s120, %s121
      %p130 = scmp.eq.s32.totalorder %s26, 0
      %p131 = por %p129, %p130
      %p132 = scmp.ne.s32.totalorder %s120, %s121
      %p133 = scmp.eq.s32.totalorder %s27, 1
      %p134 = por %p132, %p133
      %p136 = scmp.ne.s32.totalorder %s121, %s135
      %p137 = scmp.eq.s32.totalorder %s27, 0
      %p138 = por %p136, %p137
      %s140 = sadd.s32 %s139, 1
      %p143 = scmp.eq.s32.totalorder %s21, 1
      %p144 = scmp.ne.s32.totalorder %s139, %s141
      %p145 = scmp.eq.s32.totalorder %s21, 0
      %p146 = por %p144, %p145
      %p147 = scmp.ne.s32.totalorder %s139, %s141
      %p148 = scmp.eq.s32.totalorder %s26, 1
      %p149 = por %p147, %p148
      %p150 = scmp.ne.s32.totalorder %s141, %s142
      %p151 = scmp.eq.s32.totalorder %s26, 0
      %p152 = por %p150, %p151
      %p153 = scmp.ne.s32.totalorder %s141, %s142
      %p154 = scmp.eq.s32.totalorder %s27, 1
      %p155 = por %p153, %p154
      %p157 = scmp.ne.s32.totalorder %s142, %s156
      %p158 = scmp.eq.s32.totalorder %s27, 0
      %p159 = por %p157, %p158
      %s161 = sadd.s32 %s160, 1
      %p164 = scmp.eq.s32.totalorder %s21, 1
      %p165 = scmp.ne.s32.totalorder %s160, %s162
      %p166 = scmp.eq.s32.totalorder %s21, 0
      %p167 = por %p165, %p166
      %p168 = scmp.ne.s32.totalorder %s160, %s162
      %p169 = scmp.eq.s32.totalorder %s26, 1
      %p170 = por %p168, %p169
      %p171 = scmp.ne.s32.totalorder %s162, %s163
      %p172 = scmp.eq.s32.totalorder %s26, 0
      %p173 = por %p171, %p172
      %p174 = scmp.ne.s32.totalorder %s162, %s163
      %p175 = scmp.eq.s32.totalorder %s27, 1
      %p176 = por %p174, %p175
      %p178 = scmp.ne.s32.totalorder %s163, %s177
      %p179 = scmp.eq.s32.totalorder %s27, 0
      %p180 = por %p178, %p179
      %s181 = ssub.s32 %s21, %s28
      %p182 = scmp.eq.s32.totalorder %s181, 0
      %s184 = sadd.s32 %s183, 1
      %s185 = scalar_select %p182, %s183, %s184
      %p188 = pneg %p182
      %p189 = scmp.eq.s32.totalorder %s21, 1
      %p190 = por %p188, %p189
      %p191 = scmp.ne.s32.totalorder %s183, %s186
      %p192 = scmp.eq.s32.totalorder %s21, 0
      %p193 = por %p191, %p192
      %p194 = scmp.ne.s32.totalorder %s183, %s186
      %p195 = scmp.eq.s32.totalorder %s26, 1
      %p196 = por %p194, %p195
      %p197 = scmp.ne.s32.totalorder %s186, %s187
      %p198 = scmp.eq.s32.totalorder %s26, 0
      %p199 = por %p197, %p198
      %p200 = scmp.ne.s32.totalorder %s186, %s187
      %p201 = scmp.eq.s32.totalorder %s27, 1
      %p202 = por %p200, %p201
      %p204 = scmp.ne.s32.totalorder %s187, %s203
      %p205 = scmp.eq.s32.totalorder %s27, 0
      %p206 = por %p204, %p205
      %p207 = scmp.le.s32.totalorder 1, %s21
      %p208 = scmp.lt.s32.totalorder %s21, 3
      %p209 = pnand %p207, %p208
      %p210 = pneg %p209
      // Predicated region
      $region9: #{tpu_custom_call.1} parent=5 // pred_check
        _
      $region10: #{tpu_custom_call.1} parent=5 // pred_check_branch
        %212 = sbr.rel (%p209) target = $region12
      $region11: #{tpu_custom_call.1} parent=5 // pred_region
        %s213 = ssub.s32 %s21, 1
        // Predicated region
        $region13: #{tpu_custom_call.1} parent=11 // pred_check
          %p214 = pneg %p68
        $region14: #{tpu_custom_call.1} parent=11 // pred_check_branch
          %216 = sbr.rel (%p214) target = $region16
        $region15: #{tpu_custom_call.1} parent=11 // pred_region
          %218 = vsyncadd [#allocation9], 0
          %s219 = sshll.u32 %s1, 4
          %s220 = int_to_ptr.hbm [resolvable:$true] %s219
          %s221 = sshll.u32 [#allocation8], 4
          %s222 = int_to_ptr.vmem [resolvable:$true] %s221
          %227 = dma.hbm_to_vmem [thread:$0]  %s220, 2048, %s222, [#allocation9], 128, 128, 8
        $region16: #{tpu_custom_call.1} parent=11 // pred_fallthru
          _
        // Predicated region
        $region17: #{tpu_custom_call.1} parent=11 // pred_check
          %p228 = pneg %p89
        $region18: #{tpu_custom_call.1} parent=11 // pred_check_branch
          %230 = sbr.rel (%p228) target = $region20
        $region19: #{tpu_custom_call.1} parent=11 // pred_region
          _
        $region20: #{tpu_custom_call.1} parent=11 // pred_fallthru
          _
        // Predicated region
        $region21: #{tpu_custom_call.1} parent=11 // pred_check
          %p231 = pneg %p110
        $region22: #{tpu_custom_call.1} parent=11 // pred_check_branch
          %233 = sbr.rel (%p231) target = $region24
        $region23: #{tpu_custom_call.1} parent=11 // pred_region
          %235 = vsyncadd [#allocation9], 0
          %s236 = sshll.u32 %s3, 4
          %s237 = int_to_ptr.hbm [resolvable:$true] %s236
          %s238 = sshll.u32 [#allocation10], 4
          %s239 = int_to_ptr.vmem [resolvable:$true] %s238
          %244 = dma.hbm_to_vmem [thread:$0]  %s237, 18432, %s239, [#allocation9], 128, 128, 8
        $region24: #{tpu_custom_call.1} parent=11 // pred_fallthru
          _
        // Predicated region
        $region25: #{tpu_custom_call.1} parent=11 // pred_check
          %p245 = pneg %p131
        $region26: #{tpu_custom_call.1} parent=11 // pred_check_branch
          %247 = sbr.rel (%p245) target = $region28
        $region27: #{tpu_custom_call.1} parent=11 // pred_region
          _
        $region28: #{tpu_custom_call.1} parent=11 // pred_fallthru
          _
        // Predicated region
        $region29: #{tpu_custom_call.1} parent=11 // pred_check
          %p248 = pneg %p152
        $region30: #{tpu_custom_call.1} parent=11 // pred_check_branch
          %250 = sbr.rel (%p248) target = $region32
        $region31: #{tpu_custom_call.1} parent=11 // pred_region
          %252 = vsyncadd [#allocation12], 0
          %s253 = sshll.u32 %s5, 4
          %s254 = int_to_ptr.hbm [resolvable:$true] %s253
          %s255 = sshll.u32 [#allocation11], 4
          %s256 = int_to_ptr.vmem [resolvable:$true] %s255
          %261 = dma.hbm_to_vmem [thread:$0]  %s254, 2048, %s256, [#allocation12], 128, 128, 8
        $region32: #{tpu_custom_call.1} parent=11 // pred_fallthru
          _
        // Predicated region
        $region33: #{tpu_custom_call.1} parent=11 // pred_check
          %p262 = pneg %p173
        $region34: #{tpu_custom_call.1} parent=11 // pred_check_branch
          %264 = sbr.rel (%p262) target = $region36
        $region35: #{tpu_custom_call.1} parent=11 // pred_region
          _
        $region36: #{tpu_custom_call.1} parent=11 // pred_fallthru
          _
      $region12: #{tpu_custom_call.1} parent=5 // pred_fallthru
        _
      %p265 = scmp.lt.s32.totalorder %s21, 2
      // Predicated region
      $region37: #{tpu_custom_call.1} parent=5 // pred_check
        %p266 = pneg %p265
      $region38: #{tpu_custom_call.1} parent=5 // pred_check_branch
        %268 = sbr.rel (%p266) target = $region40
      $region39: #{tpu_custom_call.1} parent=5 // pred_region
        // Predicated region
        $region41: #{tpu_custom_call.1} parent=39 // pred_check
          %p269 = pneg %p41
        $region42: #{tpu_custom_call.1} parent=39 // pred_check_branch
          %271 = sbr.rel (%p269) target = $region44
        $region43: #{tpu_custom_call.1} parent=39 // pred_region
          %s272 = sand.u32 %s31, 1
          %s273 = scalar_lea.sflag [#allocation6], %s272
          %s274 = sand.u32 %s31, 1
          %s275 = smul.addr %s274, 256
          %s276 = scalar_lea.vmem [#allocation5], %s275
          %278 = vsyncadd %s273, 0
          %s279 = smul.addr %s21, 32
          %s280 = smul.addr %s279, 8
          %s281 = scalar_lea.hbm %s0, %s280
          %s282 = sshll.u32 %s281, 4
          %s283 = int_to_ptr.hbm [resolvable:$true] %s282
          %s284 = sshll.u32 %s276, 4
          %s285 = int_to_ptr.vmem [resolvable:$true] %s284
          %290 = dma.hbm_to_vmem [thread:$0]  %s283, 4096, %s285, %s273, 128, 128, 8
        $region44: #{tpu_custom_call.1} parent=39 // pred_fallthru
          _
      $region40: #{tpu_custom_call.1} parent=5 // pred_fallthru
        _
      %p291 = scmp.le.s32.totalorder 1, %s21
      %p292 = scmp.lt.s32.totalorder %s21, 3
      %p293 = pnand %p291, %p292
      %p294 = pneg %p293
      // Predicated region
      $region45: #{tpu_custom_call.1} parent=5 // pred_check
        _
      $region46: #{tpu_custom_call.1} parent=5 // pred_check_branch
        %296 = sbr.rel (%p293) target = $region48
      $region47: #{tpu_custom_call.1} parent=5 // pred_region
        %s297 = ssub.s32 %s21, 1
        %s298 = sand.u32 %s34, 1
        %s299 = scalar_lea.sflag [#allocation6], %s298
        %s300 = sand.u32 %s34, 1
        %s301 = smul.addr %s300, 256
        %s302 = scalar_lea.vmem [#allocation5], %s301
        // Predicated region
        $region49: #{tpu_custom_call.1} parent=47 // pred_check
          %p303 = pneg %p47
        $region50: #{tpu_custom_call.1} parent=47 // pred_check_branch
          %305 = sbr.rel (%p303) target = $region52
        $region51: #{tpu_custom_call.1} parent=47 // pred_region
          %307 = dma.done %s299, 4096
        $region52: #{tpu_custom_call.1} parent=47 // pred_fallthru
          _
        // Predicated region
        $region53: #{tpu_custom_call.1} parent=47 // pred_check
          %p308 = pneg %p68
        $region54: #{tpu_custom_call.1} parent=47 // pred_check_branch
          %310 = sbr.rel (%p308) target = $region56
        $region55: #{tpu_custom_call.1} parent=47 // pred_region
          %312 = dma.done [#allocation9], 2048
        $region56: #{tpu_custom_call.1} parent=47 // pred_fallthru
          _
        // Predicated region
        $region57: #{tpu_custom_call.1} parent=47 // pred_check
          %p313 = pneg %p110
        $region58: #{tpu_custom_call.1} parent=47 // pred_check_branch
          %315 = sbr.rel (%p313) target = $region60
        $region59: #{tpu_custom_call.1} parent=47 // pred_region
          %317 = dma.done [#allocation9], 18432
        $region60: #{tpu_custom_call.1} parent=47 // pred_fallthru
          _
        // Predicated region
        $region61: #{tpu_custom_call.1} parent=47 // pred_check
          %p318 = pneg %p152
        $region62: #{tpu_custom_call.1} parent=47 // pred_check_branch
          %320 = sbr.rel (%p318) target = $region64
        $region63: #{tpu_custom_call.1} parent=47 // pred_region
          %322 = dma.done [#allocation12], 2048
        $region64: #{tpu_custom_call.1} parent=47 // pred_fallthru
          _
        %s323 = sand.u32 %s34, 1
        %s324 = scalar_lea.sflag [#allocation6], %s323
        %s325 = sand.u32 %s34, 1
        %s326 = smul.addr %s325, 256
        %s327 = scalar_lea.vmem [#allocation5], %s326
        %p328 = pneg %p47
        %p329 = pneg %p44
        %p330 = pneg %p68
        %p331 = pneg %p65
        %p332 = pneg %p89
        %p333 = pneg %p86
        %p334 = pneg %p110
        %p335 = pneg %p107
        %p336 = pneg %p131
        %p337 = pneg %p128
        %p338 = pneg %p152
        %p339 = pneg %p149
        %p340 = pneg %p173
        %p341 = pneg %p170
        %p342 = pneg %p199
        %p343 = pneg %p196
        %s344 = sand.u32 %s186, 1
        %s345 = scalar_lea.sflag [#allocation7], %s344
        %s346 = sand.u32 %s186, 1
        %s347 = smul.addr %s346, 256
        %s348 = scalar_lea.vmem [#allocation13], %s347
        %v349 = vld [vmem:[%s302] sm:$0xff]
        %v350 = vld [vmem:[%s302 + $0x8] sm:$0xff]
        %v351 = vld [vmem:[%s302 + $0x10] sm:$0xff]
        %v352 = vld [vmem:[%s302 + $0x18] sm:$0xff]
        %v353 = vld [vmem:[%s302 + $0x20] sm:$0xff]
        %v354 = vld [vmem:[%s302 + $0x28] sm:$0xff]
        %v355 = vld [vmem:[%s302 + $0x30] sm:$0xff]
        %v356 = vld [vmem:[%s302 + $0x38] sm:$0xff]
        %v357 = vld [vmem:[%s302 + $0x40] sm:$0xff]
        %v358 = vld [vmem:[%s302 + $0x48] sm:$0xff]
        %v359 = vld [vmem:[%s302 + $0x50] sm:$0xff]
        %v360 = vld [vmem:[%s302 + $0x58] sm:$0xff]
        %v361 = vld [vmem:[%s302 + $0x60] sm:$0xff]
        %v362 = vld [vmem:[%s302 + $0x68] sm:$0xff]
        %v363 = vld [vmem:[%s302 + $0x70] sm:$0xff]
        %v364 = vld [vmem:[%s302 + $0x78] sm:$0xff]
        %v365 = vld [vmem:[%s302 + $0x80] sm:$0xff]
        %v366 = vld [vmem:[%s302 + $0x88] sm:$0xff]
        %v367 = vld [vmem:[%s302 + $0x90] sm:$0xff]
        %v368 = vld [vmem:[%s302 + $0x98] sm:$0xff]
        %v369 = vld [vmem:[%s302 + $0xa0] sm:$0xff]
        %v370 = vld [vmem:[%s302 + $0xa8] sm:$0xff]
        %v371 = vld [vmem:[%s302 + $0xb0] sm:$0xff]
        %v372 = vld [vmem:[%s302 + $0xb8] sm:$0xff]
        %v373 = vld [vmem:[%s302 + $0xc0] sm:$0xff]
        %v374 = vld [vmem:[%s302 + $0xc8] sm:$0xff]
        %v375 = vld [vmem:[%s302 + $0xd0] sm:$0xff]
        %v376 = vld [vmem:[%s302 + $0xd8] sm:$0xff]
        %v377 = vld [vmem:[%s302 + $0xe0] sm:$0xff]
        %v378 = vld [vmem:[%s302 + $0xe8] sm:$0xff]
        %v379 = vld [vmem:[%s302 + $0xf0] sm:$0xff]
        %v380 = vld [vmem:[%s302 + $0xf8] sm:$0xff]
        %v381 = vld [vmem:[#allocation8] sm:$0xff]
        %v382 = vld [vmem:[#allocation8 + $0x8] sm:$0xff]
        %v383 = vld [vmem:[#allocation8 + $0x10] sm:$0xff]
        %v384 = vld [vmem:[#allocation8 + $0x18] sm:$0xff]
        %v385 = vld [vmem:[#allocation8 + $0x20] sm:$0xff]
        %v386 = vld [vmem:[#allocation8 + $0x28] sm:$0xff]
        %v387 = vld [vmem:[#allocation8 + $0x30] sm:$0xff]
        %v388 = vld [vmem:[#allocation8 + $0x38] sm:$0xff]
        %v389 = vld [vmem:[#allocation8 + $0x40] sm:$0xff]
        %v390 = vld [vmem:[#allocation8 + $0x48] sm:$0xff]
        %v391 = vld [vmem:[#allocation8 + $0x50] sm:$0xff]
        %v392 = vld [vmem:[#allocation8 + $0x58] sm:$0xff]
        %v393 = vld [vmem:[#allocation8 + $0x60] sm:$0xff]
        %v394 = vld [vmem:[#allocation8 + $0x68] sm:$0xff]
        %v395 = vld [vmem:[#allocation8 + $0x70] sm:$0xff]
        %v396 = vld [vmem:[#allocation8 + $0x78] sm:$0xff]
        %v397 = vld [vmem:[%s2] sm:$0x1]
        %v399 = vperm.slane %v397, 0
        %401 = vmatpush.msra.mxu0 %v396
        %402 = vmatpush.msra.mxu0 %v395
        %403 = vmatpush.msra.mxu0 %v394
        %404 = vmatpush.msra.mxu0 %v393
        %405 = vmatpush.msra.mxu0 %v392
        %406 = vmatpush.msra.mxu0 %v391
        %407 = vmatpush.msra.mxu0 %v390
        %408 = vmatpush.msra.mxu0 %v389
        %409 = vmatpush.msra.mxu0 %v388
        %410 = vmatpush.msra.mxu0 %v387
        %411 = vmatpush.msra.mxu0 %v386
        %412 = vmatpush.msra.mxu0 %v385
        %413 = vmatpush.msra.mxu0 %v384
        %414 = vmatpush.msra.mxu0 %v383
        %415 = vmatpush.msra.mxu0 %v382
        %416 = vmatpush.msra.mxu0 %v381
        %417 = vmatmul.f32.gmra.mxu0 %v349
        %v418 = vpop.f32.mrf.mxu0
        %v419 = vadd.f32 %v399, %v418
        %420 = vmatmul.f32.gmra.mxu0 %v350
        %v421 = vpop.f32.mrf.mxu0
        %v422 = vadd.f32 %v399, %v421
        %423 = vmatmul.f32.gmra.mxu0 %v351
        %v424 = vpop.f32.mrf.mxu0
        %v425 = vadd.f32 %v399, %v424
        %426 = vmatmul.f32.gmra.mxu0 %v352
        %v427 = vpop.f32.mrf.mxu0
        %v428 = vadd.f32 %v399, %v427
        %429 = vmatmul.f32.gmra.mxu0 %v353
        %v430 = vpop.f32.mrf.mxu0
        %v431 = vadd.f32 %v399, %v430
        %432 = vmatmul.f32.gmra.mxu0 %v354
        %v433 = vpop.f32.mrf.mxu0
        %v434 = vadd.f32 %v399, %v433
        %435 = vmatmul.f32.gmra.mxu0 %v355
        %v436 = vpop.f32.mrf.mxu0
        %v437 = vadd.f32 %v399, %v436
        %438 = vmatmul.f32.gmra.mxu0 %v356
        %v439 = vpop.f32.mrf.mxu0
        %v440 = vadd.f32 %v399, %v439
        %441 = vmatmul.f32.gmra.mxu0 %v357
        %v442 = vpop.f32.mrf.mxu0
        %v443 = vadd.f32 %v399, %v442
        %444 = vmatmul.f32.gmra.mxu0 %v358
        %v445 = vpop.f32.mrf.mxu0
        %v446 = vadd.f32 %v399, %v445
        %447 = vmatmul.f32.gmra.mxu0 %v359
        %v448 = vpop.f32.mrf.mxu0
        %v449 = vadd.f32 %v399, %v448
        %450 = vmatmul.f32.gmra.mxu0 %v360
        %v451 = vpop.f32.mrf.mxu0
        %v452 = vadd.f32 %v399, %v451
        %453 = vmatmul.f32.gmra.mxu0 %v361
        %v454 = vpop.f32.mrf.mxu0
        %v455 = vadd.f32 %v399, %v454
        %456 = vmatmul.f32.gmra.mxu0 %v362
        %v457 = vpop.f32.mrf.mxu0
        %v458 = vadd.f32 %v399, %v457
        %459 = vmatmul.f32.gmra.mxu0 %v363
        %v460 = vpop.f32.mrf.mxu0
        %v461 = vadd.f32 %v399, %v460
        %462 = vmatmul.f32.gmra.mxu0 %v364
        %v463 = vpop.f32.mrf.mxu0
        %v464 = vadd.f32 %v399, %v463
        %465 = vmatmul.f32.gmra.mxu0 %v365
        %v466 = vpop.f32.mrf.mxu0
        %v467 = vadd.f32 %v399, %v466
        %468 = vmatmul.f32.gmra.mxu0 %v366
        %v469 = vpop.f32.mrf.mxu0
        %v470 = vadd.f32 %v399, %v469
        %471 = vmatmul.f32.gmra.mxu0 %v367
        %v472 = vpop.f32.mrf.mxu0
        %v473 = vadd.f32 %v399, %v472
        %474 = vmatmul.f32.gmra.mxu0 %v368
        %v475 = vpop.f32.mrf.mxu0
        %v476 = vadd.f32 %v399, %v475
        %477 = vmatmul.f32.gmra.mxu0 %v369
        %v478 = vpop.f32.mrf.mxu0
        %v479 = vadd.f32 %v399, %v478
        %480 = vmatmul.f32.gmra.mxu0 %v370
        %v481 = vpop.f32.mrf.mxu0
        %v482 = vadd.f32 %v399, %v481
        %483 = vmatmul.f32.gmra.mxu0 %v371
        %v484 = vpop.f32.mrf.mxu0
        %v485 = vadd.f32 %v399, %v484
        %486 = vmatmul.f32.gmra.mxu0 %v372
        %v487 = vpop.f32.mrf.mxu0
        %v488 = vadd.f32 %v399, %v487
        %489 = vmatmul.f32.gmra.mxu0 %v373
        %v490 = vpop.f32.mrf.mxu0
        %v491 = vadd.f32 %v399, %v490
        %492 = vmatmul.f32.gmra.mxu0 %v374
        %v493 = vpop.f32.mrf.mxu0
        %v494 = vadd.f32 %v399, %v493
        %495 = vmatmul.f32.gmra.mxu0 %v375
        %v496 = vpop.f32.mrf.mxu0
        %v497 = vadd.f32 %v399, %v496
        %498 = vmatmul.f32.gmra.mxu0 %v376
        %v499 = vpop.f32.mrf.mxu0
        %v500 = vadd.f32 %v399, %v499
        %501 = vmatmul.f32.gmra.mxu0 %v377
        %v502 = vpop.f32.mrf.mxu0
        %v503 = vadd.f32 %v399, %v502
        %504 = vmatmul.f32.gmra.mxu0 %v378
        %v505 = vpop.f32.mrf.mxu0
        %v506 = vadd.f32 %v399, %v505
        %507 = vmatmul.f32.gmra.mxu0 %v379
        %v508 = vpop.f32.mrf.mxu0
        %v509 = vadd.f32 %v399, %v508
        %510 = vmatmul.f32.gmra.mxu0 %v380
        %v511 = vpop.f32.mrf.mxu0
        %v512 = vadd.f32 %v399, %v511
        %513 = vdwg.mxu0
        %v514 = vmax.f32 %v419, 0.0
        %v515 = vmax.f32 %v422, 0.0
        %v516 = vmax.f32 %v425, 0.0
        %v517 = vmax.f32 %v428, 0.0
        %v518 = vmax.f32 %v431, 0.0
        %v519 = vmax.f32 %v434, 0.0
        %v520 = vmax.f32 %v437, 0.0
        %v521 = vmax.f32 %v440, 0.0
        %v522 = vmax.f32 %v443, 0.0
        %v523 = vmax.f32 %v446, 0.0
        %v524 = vmax.f32 %v449, 0.0
        %v525 = vmax.f32 %v452, 0.0
        %v526 = vmax.f32 %v455, 0.0
        %v527 = vmax.f32 %v458, 0.0
        %v528 = vmax.f32 %v461, 0.0
        %v529 = vmax.f32 %v464, 0.0
        %v530 = vmax.f32 %v467, 0.0
        %v531 = vmax.f32 %v470, 0.0
        %v532 = vmax.f32 %v473, 0.0
        %v533 = vmax.f32 %v476, 0.0
        %v534 = vmax.f32 %v479, 0.0
        %v535 = vmax.f32 %v482, 0.0
        %v536 = vmax.f32 %v485, 0.0
        %v537 = vmax.f32 %v488, 0.0
        %v538 = vmax.f32 %v491, 0.0
        %v539 = vmax.f32 %v494, 0.0
        %v540 = vmax.f32 %v497, 0.0
        %v541 = vmax.f32 %v500, 0.0
        %v542 = vmax.f32 %v503, 0.0
        %v543 = vmax.f32 %v506, 0.0
        %v544 = vmax.f32 %v509, 0.0
        %v545 = vmax.f32 %v512, 0.0
        %v546 = vlaneseq
        %v547 = vshrl.u32 %v546, 7
        %v548 = vadd.s32 %v547, 8
        %v549 = vadd.s32 %v547, 16
        %v550 = vadd.s32 %v547, 24
        %v551 = vadd.s32 %v547, 32
        %v552 = vadd.s32 %v547, 40
        %v553 = vadd.s32 %v547, 48
        %v554 = vadd.s32 %v547, 56
        %v555 = vadd.s32 %v547, 64
        %v556 = vadd.s32 %v547, 72
        %v557 = vadd.s32 %v547, 80
        %v558 = vadd.s32 %v547, 88
        %v559 = vadd.s32 %v547, 96
        %v560 = vadd.s32 %v547, 104
        %v561 = vadd.s32 %v547, 112
        %v562 = vadd.s32 %v547, 120
        %v563 = vadd.s32 %v547, 128
        %v564 = vadd.s32 %v547, 136
        %v565 = vadd.s32 %v547, 144
        %v566 = vadd.s32 %v547, 152
        %v567 = vadd.s32 %v547, 160
        %v568 = vadd.s32 %v547, 168
        %v569 = vadd.s32 %v547, 176
        %v570 = vadd.s32 %v547, 184
        %v571 = vadd.s32 %v547, 192
        %v572 = vadd.s32 %v547, 200
        %v573 = vadd.s32 %v547, 208
        %v574 = vadd.s32 %v547, 216
        %v575 = vadd.s32 %v547, 224
        %v576 = vadd.s32 %v547, 232
        %v577 = vadd.s32 %v547, 240
        %v578 = vadd.s32 %v547, 248
        %vm579 = vcmp.lt.s32.totalorder %v547, 0
        %v580 = vsub.s32 0, %v547
        %v581 = vsel %vm579, %v580, %v547
        %v582 = vshrl.u32 %v581, 4
        %v583 = vand.u32 %v581, 15
        %v584 = vsub.s32 0, %v583
        %v585 = vsel %vm579, %v584, %v583
        %vm586 = vcmp.lt.s32.totalorder %v548, 0
        %v587 = vsub.s32 0, %v548
        %v588 = vsel %vm586, %v587, %v548
        %v589 = vshrl.u32 %v588, 4
        %v590 = vand.u32 %v588, 15
        %v591 = vsub.s32 0, %v590
        %v592 = vsel %vm586, %v591, %v590
        %vm593 = vcmp.lt.s32.totalorder %v549, 0
        %v594 = vsub.s32 0, %v549
        %v595 = vsel %vm593, %v594, %v549
        %v596 = vshrl.u32 %v595, 4
        %v597 = vand.u32 %v595, 15
        %v598 = vsub.s32 0, %v597
        %v599 = vsel %vm593, %v598, %v597
        %vm600 = vcmp.lt.s32.totalorder %v550, 0
        %v601 = vsub.s32 0, %v550
        %v602 = vsel %vm600, %v601, %v550
        %v603 = vshrl.u32 %v602, 4
        %v604 = vand.u32 %v602, 15
        %v605 = vsub.s32 0, %v604
        %v606 = vsel %vm600, %v605, %v604
        %vm607 = vcmp.lt.s32.totalorder %v551, 0
        %v608 = vsub.s32 0, %v551
        %v609 = vsel %vm607, %v608, %v551
        %v610 = vshrl.u32 %v609, 4
        %v611 = vand.u32 %v609, 15
        %v612 = vsub.s32 0, %v611
        %v613 = vsel %vm607, %v612, %v611
        %vm614 = vcmp.lt.s32.totalorder %v552, 0
        %v615 = vsub.s32 0, %v552
        %v616 = vsel %vm614, %v615, %v552
        %v617 = vshrl.u32 %v616, 4
        %v618 = vand.u32 %v616, 15
        %v619 = vsub.s32 0, %v618
        %v620 = vsel %vm614, %v619, %v618
        %vm621 = vcmp.lt.s32.totalorder %v553, 0
        %v622 = vsub.s32 0, %v553
        %v623 = vsel %vm621, %v622, %v553
        %v624 = vshrl.u32 %v623, 4
        %v625 = vand.u32 %v623, 15
        %v626 = vsub.s32 0, %v625
        %v627 = vsel %vm621, %v626, %v625
        %vm628 = vcmp.lt.s32.totalorder %v554, 0
        %v629 = vsub.s32 0, %v554
        %v630 = vsel %vm628, %v629, %v554
        %v631 = vshrl.u32 %v630, 4
        %v632 = vand.u32 %v630, 15
        %v633 = vsub.s32 0, %v632
        %v634 = vsel %vm628, %v633, %v632
        %vm635 = vcmp.lt.s32.totalorder %v555, 0
        %v636 = vsub.s32 0, %v555
        %v637 = vsel %vm635, %v636, %v555
        %v638 = vshrl.u32 %v637, 4
        %v639 = vand.u32 %v637, 15
        %v640 = vsub.s32 0, %v639
        %v641 = vsel %vm635, %v640, %v639
        %vm642 = vcmp.lt.s32.totalorder %v556, 0
        %v643 = vsub.s32 0, %v556
        %v644 = vsel %vm642, %v643, %v556
        %v645 = vshrl.u32 %v644, 4
        %v646 = vand.u32 %v644, 15
        %v647 = vsub.s32 0, %v646
        %v648 = vsel %vm642, %v647, %v646
        %vm649 = vcmp.lt.s32.totalorder %v557, 0
        %v650 = vsub.s32 0, %v557
        %v651 = vsel %vm649, %v650, %v557
        %v652 = vshrl.u32 %v651, 4
        %v653 = vand.u32 %v651, 15
        %v654 = vsub.s32 0, %v653
        %v655 = vsel %vm649, %v654, %v653
        %vm656 = vcmp.lt.s32.totalorder %v558, 0
        %v657 = vsub.s32 0, %v558
        %v658 = vsel %vm656, %v657, %v558
        %v659 = vshrl.u32 %v658, 4
        %v660 = vand.u32 %v658, 15
        %v661 = vsub.s32 0, %v660
        %v662 = vsel %vm656, %v661, %v660
        %vm663 = vcmp.lt.s32.totalorder %v559, 0
        %v664 = vsub.s32 0, %v559
        %v665 = vsel %vm663, %v664, %v559
        %v666 = vshrl.u32 %v665, 4
        %v667 = vand.u32 %v665, 15
        %v668 = vsub.s32 0, %v667
        %v669 = vsel %vm663, %v668, %v667
        %vm670 = vcmp.lt.s32.totalorder %v560, 0
        %v671 = vsub.s32 0, %v560
        %v672 = vsel %vm670, %v671, %v560
        %v673 = vshrl.u32 %v672, 4
        %v674 = vand.u32 %v672, 15
        %v675 = vsub.s32 0, %v674
        %v676 = vsel %vm670, %v675, %v674
        %vm677 = vcmp.lt.s32.totalorder %v561, 0
        %v678 = vsub.s32 0, %v561
        %v679 = vsel %vm677, %v678, %v561
        %v680 = vshrl.u32 %v679, 4
        %v681 = vand.u32 %v679, 15
        %v682 = vsub.s32 0, %v681
        %v683 = vsel %vm677, %v682, %v681
        %vm684 = vcmp.lt.s32.totalorder %v562, 0
        %v685 = vsub.s32 0, %v562
        %v686 = vsel %vm684, %v685, %v562
        %v687 = vshrl.u32 %v686, 4
        %v688 = vand.u32 %v686, 15
        %v689 = vsub.s32 0, %v688
        %v690 = vsel %vm684, %v689, %v688
        %vm691 = vcmp.lt.s32.totalorder %v563, 0
        %v692 = vsub.s32 0, %v563
        %v693 = vsel %vm691, %v692, %v563
        %v694 = vshrl.u32 %v693, 4
        %v695 = vand.u32 %v693, 15
        %v696 = vsub.s32 0, %v695
        %v697 = vsel %vm691, %v696, %v695
        %vm698 = vcmp.lt.s32.totalorder %v564, 0
        %v699 = vsub.s32 0, %v564
        %v700 = vsel %vm698, %v699, %v564
        %v701 = vshrl.u32 %v700, 4
        %v702 = vand.u32 %v700, 15
        %v703 = vsub.s32 0, %v702
        %v704 = vsel %vm698, %v703, %v702
        %vm705 = vcmp.lt.s32.totalorder %v565, 0
        %v706 = vsub.s32 0, %v565
        %v707 = vsel %vm705, %v706, %v565
        %v708 = vshrl.u32 %v707, 4
        %v709 = vand.u32 %v707, 15
        %v710 = vsub.s32 0, %v709
        %v711 = vsel %vm705, %v710, %v709
        %vm712 = vcmp.lt.s32.totalorder %v566, 0
        %v713 = vsub.s32 0, %v566
        %v714 = vsel %vm712, %v713, %v566
        %v715 = vshrl.u32 %v714, 4
        %v716 = vand.u32 %v714, 15
        %v717 = vsub.s32 0, %v716
        %v718 = vsel %vm712, %v717, %v716
        %vm719 = vcmp.lt.s32.totalorder %v567, 0
        %v720 = vsub.s32 0, %v567
        %v721 = vsel %vm719, %v720, %v567
        %v722 = vshrl.u32 %v721, 4
        %v723 = vand.u32 %v721, 15
        %v724 = vsub.s32 0, %v723
        %v725 = vsel %vm719, %v724, %v723
        %vm726 = vcmp.lt.s32.totalorder %v568, 0
        %v727 = vsub.s32 0, %v568
        %v728 = vsel %vm726, %v727, %v568
        %v729 = vshrl.u32 %v728, 4
        %v730 = vand.u32 %v728, 15
        %v731 = vsub.s32 0, %v730
        %v732 = vsel %vm726, %v731, %v730
        %vm733 = vcmp.lt.s32.totalorder %v569, 0
        %v734 = vsub.s32 0, %v569
        %v735 = vsel %vm733, %v734, %v569
        %v736 = vshrl.u32 %v735, 4
        %v737 = vand.u32 %v735, 15
        %v738 = vsub.s32 0, %v737
        %v739 = vsel %vm733, %v738, %v737
        %vm740 = vcmp.lt.s32.totalorder %v570, 0
        %v741 = vsub.s32 0, %v570
        %v742 = vsel %vm740, %v741, %v570
        %v743 = vshrl.u32 %v742, 4
        %v744 = vand.u32 %v742, 15
        %v745 = vsub.s32 0, %v744
        %v746 = vsel %vm740, %v745, %v744
        %vm747 = vcmp.lt.s32.totalorder %v571, 0
        %v748 = vsub.s32 0, %v571
        %v749 = vsel %vm747, %v748, %v571
        %v750 = vshrl.u32 %v749, 4
        %v751 = vand.u32 %v749, 15
        %v752 = vsub.s32 0, %v751
        %v753 = vsel %vm747, %v752, %v751
        %vm754 = vcmp.lt.s32.totalorder %v572, 0
        %v755 = vsub.s32 0, %v572
        %v756 = vsel %vm754, %v755, %v572
        %v757 = vshrl.u32 %v756, 4
        %v758 = vand.u32 %v756, 15
        %v759 = vsub.s32 0, %v758
        %v760 = vsel %vm754, %v759, %v758
        %vm761 = vcmp.lt.s32.totalorder %v573, 0
        %v762 = vsub.s32 0, %v573
        %v763 = vsel %vm761, %v762, %v573
        %v764 = vshrl.u32 %v763, 4
        %v765 = vand.u32 %v763, 15
        %v766 = vsub.s32 0, %v765
        %v767 = vsel %vm761, %v766, %v765
        %vm768 = vcmp.lt.s32.totalorder %v574, 0
        %v769 = vsub.s32 0, %v574
        %v770 = vsel %vm768, %v769, %v574
        %v771 = vshrl.u32 %v770, 4
        %v772 = vand.u32 %v770, 15
        %v773 = vsub.s32 0, %v772
        %v774 = vsel %vm768, %v773, %v772
        %vm775 = vcmp.lt.s32.totalorder %v575, 0
        %v776 = vsub.s32 0, %v575
        %v777 = vsel %vm775, %v776, %v575
        %v778 = vshrl.u32 %v777, 4
        %v779 = vand.u32 %v777, 15
        %v780 = vsub.s32 0, %v779
        %v781 = vsel %vm775, %v780, %v779
        %vm782 = vcmp.lt.s32.totalorder %v576, 0
        %v783 = vsub.s32 0, %v576
        %v784 = vsel %vm782, %v783, %v576
        %v785 = vshrl.u32 %v784, 4
        %v786 = vand.u32 %v784, 15
        %v787 = vsub.s32 0, %v786
        %v788 = vsel %vm782, %v787, %v786
        %vm789 = vcmp.lt.s32.totalorder %v577, 0
        %v790 = vsub.s32 0, %v577
        %v791 = vsel %vm789, %v790, %v577
        %v792 = vshrl.u32 %v791, 4
        %v793 = vand.u32 %v791, 15
        %v794 = vsub.s32 0, %v793
        %v795 = vsel %vm789, %v794, %v793
        %vm796 = vcmp.lt.s32.totalorder %v578, 0
        %v797 = vsub.s32 0, %v578
        %v798 = vsel %vm796, %v797, %v578
        %v799 = vshrl.u32 %v798, 4
        %v800 = vand.u32 %v798, 15
        %v801 = vsub.s32 0, %v800
        %v802 = vsel %vm796, %v801, %v800
        %vm803 = vcmp.ne.s32.totalorder %v585, 0
        %vm804 = vcmp.ne.s32.totalorder %v592, 0
        %vm805 = vcmp.ne.s32.totalorder %v599, 0
        %vm806 = vcmp.ne.s32.totalorder %v606, 0
        %vm807 = vcmp.ne.s32.totalorder %v613, 0
        %vm808 = vcmp.ne.s32.totalorder %v620, 0
        %vm809 = vcmp.ne.s32.totalorder %v627, 0
        %vm810 = vcmp.ne.s32.totalorder %v634, 0
        %vm811 = vcmp.ne.s32.totalorder %v641, 0
        %vm812 = vcmp.ne.s32.totalorder %v648, 0
        %vm813 = vcmp.ne.s32.totalorder %v655, 0
        %vm814 = vcmp.ne.s32.totalorder %v662, 0
        %vm815 = vcmp.ne.s32.totalorder %v669, 0
        %vm816 = vcmp.ne.s32.totalorder %v676, 0
        %vm817 = vcmp.ne.s32.totalorder %v683, 0
        %vm818 = vcmp.ne.s32.totalorder %v690, 0
        %vm819 = vcmp.ne.s32.totalorder %v697, 0
        %vm820 = vcmp.ne.s32.totalorder %v704, 0
        %vm821 = vcmp.ne.s32.totalorder %v711, 0
        %vm822 = vcmp.ne.s32.totalorder %v718, 0
        %vm823 = vcmp.ne.s32.totalorder %v725, 0
        %vm824 = vcmp.ne.s32.totalorder %v732, 0
        %vm825 = vcmp.ne.s32.totalorder %v739, 0
        %vm826 = vcmp.ne.s32.totalorder %v746, 0
        %vm827 = vcmp.ne.s32.totalorder %v753, 0
        %vm828 = vcmp.ne.s32.totalorder %v760, 0
        %vm829 = vcmp.ne.s32.totalorder %v767, 0
        %vm830 = vcmp.ne.s32.totalorder %v774, 0
        %vm831 = vcmp.ne.s32.totalorder %v781, 0
        %vm832 = vcmp.ne.s32.totalorder %v788, 0
        %vm833 = vcmp.ne.s32.totalorder %v795, 0
        %vm834 = vcmp.ne.s32.totalorder %v802, 0
        %vm835 = vcmp.lt.s32.totalorder %v585, 0
        %vm836 = vcmp.lt.s32.totalorder %v592, 0
        %vm837 = vcmp.lt.s32.totalorder %v599, 0
        %vm838 = vcmp.lt.s32.totalorder %v606, 0
        %vm839 = vcmp.lt.s32.totalorder %v613, 0
        %vm840 = vcmp.lt.s32.totalorder %v620, 0
        %vm841 = vcmp.lt.s32.totalorder %v627, 0
        %vm842 = vcmp.lt.s32.totalorder %v634, 0
        %vm843 = vcmp.lt.s32.totalorder %v641, 0
        %vm844 = vcmp.lt.s32.totalorder %v648, 0
        %vm845 = vcmp.lt.s32.totalorder %v655, 0
        %vm846 = vcmp.lt.s32.totalorder %v662, 0
        %vm847 = vcmp.lt.s32.totalorder %v669, 0
        %vm848 = vcmp.lt.s32.totalorder %v676, 0
        %vm849 = vcmp.lt.s32.totalorder %v683, 0
        %vm850 = vcmp.lt.s32.totalorder %v690, 0
        %vm851 = vcmp.lt.s32.totalorder %v697, 0
        %vm852 = vcmp.lt.s32.totalorder %v704, 0
        %vm853 = vcmp.lt.s32.totalorder %v711, 0
        %vm854 = vcmp.lt.s32.totalorder %v718, 0
        %vm855 = vcmp.lt.s32.totalorder %v725, 0
        %vm856 = vcmp.lt.s32.totalorder %v732, 0
        %vm857 = vcmp.lt.s32.totalorder %v739, 0
        %vm858 = vcmp.lt.s32.totalorder %v746, 0
        %vm859 = vcmp.lt.s32.totalorder %v753, 0
        %vm860 = vcmp.lt.s32.totalorder %v760, 0
        %vm861 = vcmp.lt.s32.totalorder %v767, 0
        %vm862 = vcmp.lt.s32.totalorder %v774, 0
        %vm863 = vcmp.lt.s32.totalorder %v781, 0
        %vm864 = vcmp.lt.s32.totalorder %v788, 0
        %vm865 = vcmp.lt.s32.totalorder %v795, 0
        %vm866 = vcmp.lt.s32.totalorder %v802, 0
        %vm867 = vmand %vm835, %vm803
        %vm868 = vmand %vm836, %vm804
        %vm869 = vmand %vm837, %vm805
        %vm870 = vmand %vm838, %vm806
        %vm871 = vmand %vm839, %vm807
        %vm872 = vmand %vm840, %vm808
        %vm873 = vmand %vm841, %vm809
        %vm874 = vmand %vm842, %vm810
        %vm875 = vmand %vm843, %vm811
        %vm876 = vmand %vm844, %vm812
        %vm877 = vmand %vm845, %vm813
        %vm878 = vmand %vm846, %vm814
        %vm879 = vmand %vm847, %vm815
        %vm880 = vmand %vm848, %vm816
        %vm881 = vmand %vm849, %vm817
        %vm882 = vmand %vm850, %vm818
        %vm883 = vmand %vm851, %vm819
        %vm884 = vmand %vm852, %vm820
        %vm885 = vmand %vm853, %vm821
        %vm886 = vmand %vm854, %vm822
        %vm887 = vmand %vm855, %vm823
        %vm888 = vmand %vm856, %vm824
        %vm889 = vmand %vm857, %vm825
        %vm890 = vmand %vm858, %vm826
        %vm891 = vmand %vm859, %vm827
        %vm892 = vmand %vm860, %vm828
        %vm893 = vmand %vm861, %vm829
        %vm894 = vmand %vm862, %vm830
        %vm895 = vmand %vm863, %vm831
        %vm896 = vmand %vm864, %vm832
        %vm897 = vmand %vm865, %vm833
        %vm898 = vmand %vm866, %vm834
        %v899 = vadd.s32 %v585, 16
        %v900 = vadd.s32 %v592, 16
        %v901 = vadd.s32 %v599, 16
        %v902 = vadd.s32 %v606, 16
        %v903 = vadd.s32 %v613, 16
        %v904 = vadd.s32 %v620, 16
        %v905 = vadd.s32 %v627, 16
        %v906 = vadd.s32 %v634, 16
        %v907 = vadd.s32 %v641, 16
        %v908 = vadd.s32 %v648, 16
        %v909 = vadd.s32 %v655, 16
        %v910 = vadd.s32 %v662, 16
        %v911 = vadd.s32 %v669, 16
        %v912 = vadd.s32 %v676, 16
        %v913 = vadd.s32 %v683, 16
        %v914 = vadd.s32 %v690, 16
        %v915 = vadd.s32 %v697, 16
        %v916 = vadd.s32 %v704, 16
        %v917 = vadd.s32 %v711, 16
        %v918 = vadd.s32 %v718, 16
        %v919 = vadd.s32 %v725, 16
        %v920 = vadd.s32 %v732, 16
        %v921 = vadd.s32 %v739, 16
        %v922 = vadd.s32 %v746, 16
        %v923 = vadd.s32 %v753, 16
        %v924 = vadd.s32 %v760, 16
        %v925 = vadd.s32 %v767, 16
        %v926 = vadd.s32 %v774, 16
        %v927 = vadd.s32 %v781, 16
        %v928 = vadd.s32 %v788, 16
        %v929 = vadd.s32 %v795, 16
        %v930 = vadd.s32 %v802, 16
        %v931 = vsel %vm867, %v899, %v585
        %v932 = vsel %vm868, %v900, %v592
        %v933 = vsel %vm869, %v901, %v599
        %v934 = vsel %vm870, %v902, %v606
        %v935 = vsel %vm871, %v903, %v613
        %v936 = vsel %vm872, %v904, %v620
        %v937 = vsel %vm873, %v905, %v627
        %v938 = vsel %vm874, %v906, %v634
        %v939 = vsel %vm875, %v907, %v641
        %v940 = vsel %vm876, %v908, %v648
        %v941 = vsel %vm877, %v909, %v655
        %v942 = vsel %vm878, %v910, %v662
        %v943 = vsel %vm879, %v911, %v669
        %v944 = vsel %vm880, %v912, %v676
        %v945 = vsel %vm881, %v913, %v683
        %v946 = vsel %vm882, %v914, %v690
        %v947 = vsel %vm883, %v915, %v697
        %v948 = vsel %vm884, %v916, %v704
        %v949 = vsel %vm885, %v917, %v711
        %v950 = vsel %vm886, %v918, %v718
        %v951 = vsel %vm887, %v919, %v725
        %v952 = vsel %vm888, %v920, %v732
        %v953 = vsel %vm889, %v921, %v739
        %v954 = vsel %vm890, %v922, %v746
        %v955 = vsel %vm891, %v923, %v753
        %v956 = vsel %vm892, %v924, %v760
        %v957 = vsel %vm893, %v925, %v767
        %v958 = vsel %vm894, %v926, %v774
        %v959 = vsel %vm895, %v927, %v781
        %v960 = vsel %vm896, %v928, %v788
        %v961 = vsel %vm897, %v929, %v795
        %v962 = vsel %vm898, %v930, %v802
        %vm963 = vcmp.eq.s32.totalorder %v931, 0
        %vm964 = vcmp.eq.s32.totalorder %v932, 0
        %vm965 = vcmp.eq.s32.totalorder %v933, 0
        %vm966 = vcmp.eq.s32.totalorder %v934, 0
        %vm967 = vcmp.eq.s32.totalorder %v935, 0
        %vm968 = vcmp.eq.s32.totalorder %v936, 0
        %vm969 = vcmp.eq.s32.totalorder %v937, 0
        %vm970 = vcmp.eq.s32.totalorder %v938, 0
        %vm971 = vcmp.eq.s32.totalorder %v939, 0
        %vm972 = vcmp.eq.s32.totalorder %v940, 0
        %vm973 = vcmp.eq.s32.totalorder %v941, 0
        %vm974 = vcmp.eq.s32.totalorder %v942, 0
        %vm975 = vcmp.eq.s32.totalorder %v943, 0
        %vm976 = vcmp.eq.s32.totalorder %v944, 0
        %vm977 = vcmp.eq.s32.totalorder %v945, 0
        %vm978 = vcmp.eq.s32.totalorder %v946, 0
        %vm979 = vcmp.eq.s32.totalorder %v947, 0
        %vm980 = vcmp.eq.s32.totalorder %v948, 0
        %vm981 = vcmp.eq.s32.totalorder %v949, 0
        %vm982 = vcmp.eq.s32.totalorder %v950, 0
        %vm983 = vcmp.eq.s32.totalorder %v951, 0
        %vm984 = vcmp.eq.s32.totalorder %v952, 0
        %vm985 = vcmp.eq.s32.totalorder %v953, 0
        %vm986 = vcmp.eq.s32.totalorder %v954, 0
        %vm987 = vcmp.eq.s32.totalorder %v955, 0
        %vm988 = vcmp.eq.s32.totalorder %v956, 0
        %vm989 = vcmp.eq.s32.totalorder %v957, 0
        %vm990 = vcmp.eq.s32.totalorder %v958, 0
        %vm991 = vcmp.eq.s32.totalorder %v959, 0
        %vm992 = vcmp.eq.s32.totalorder %v960, 0
        %vm993 = vcmp.eq.s32.totalorder %v961, 0
        %vm994 = vcmp.eq.s32.totalorder %v962, 0
        %v995 = vrot.slane %v514, 7
        %v996 = vrot.slane %v515, 7
        %v997 = vrot.slane %v516, 7
        %v998 = vrot.slane %v517, 7
        %v999 = vrot.slane %v518, 7
        %v1000 = vrot.slane %v519, 7
        %v1001 = vrot.slane %v520, 7
        %v1002 = vrot.slane %v521, 7
        %v1003 = vrot.slane %v522, 7
        %v1004 = vrot.slane %v523, 7
        %v1005 = vrot.slane %v524, 7
        %v1006 = vrot.slane %v525, 7
        %v1007 = vrot.slane %v526, 7
        %v1008 = vrot.slane %v527, 7
        %v1009 = vrot.slane %v528, 7
        %v1010 = vrot.slane %v529, 7
        %v1011 = vrot.slane %v530, 7
        %v1012 = vrot.slane %v531, 7
        %v1013 = vrot.slane %v532, 7
        %v1014 = vrot.slane %v533, 7
        %v1015 = vrot.slane %v534, 7
        %v1016 = vrot.slane %v535, 7
        %v1017 = vrot.slane %v536, 7
        %v1018 = vrot.slane %v537, 7
        %v1019 = vrot.slane %v538, 7
        %v1020 = vrot.slane %v539, 7
        %v1021 = vrot.slane %v540, 7
        %v1022 = vrot.slane %v541, 7
        %v1023 = vrot.slane %v542, 7
        %v1024 = vrot.slane %v543, 7
        %v1025 = vrot.slane %v544, 7
        %v1026 = vrot.slane %v545, 7
        %vm1027 = vcmp.lt.s32.totalorder %v547, 1
        %v1028 = vsel %vm1027, %v1025, %v1026
        %v1029 = vsel %vm1027, %v1024, %v1025
        %v1030 = vsel %vm1027, %v1023, %v1024
        %v1031 = vsel %vm1027, %v1022, %v1023
        %v1032 = vsel %vm1027, %v1021, %v1022
        %v1033 = vsel %vm1027, %v1020, %v1021
        %v1034 = vsel %vm1027, %v1019, %v1020
        %v1035 = vsel %vm1027, %v1018, %v1019
        %v1036 = vsel %vm1027, %v1017, %v1018
        %v1037 = vsel %vm1027, %v1016, %v1017
        %v1038 = vsel %vm1027, %v1015, %v1016
        %v1039 = vsel %vm1027, %v1014, %v1015
        %v1040 = vsel %vm1027, %v1013, %v1014
        %v1041 = vsel %vm1027, %v1012, %v1013
        %v1042 = vsel %vm1027, %v1011, %v1012
        %v1043 = vsel %vm1027, %v1010, %v1011
        %v1044 = vsel %vm1027, %v1009, %v1010
        %v1045 = vsel %vm1027, %v1008, %v1009
        %v1046 = vsel %vm1027, %v1007, %v1008
        %v1047 = vsel %vm1027, %v1006, %v1007
        %v1048 = vsel %vm1027, %v1005, %v1006
        %v1049 = vsel %vm1027, %v1004, %v1005
        %v1050 = vsel %vm1027, %v1003, %v1004
        %v1051 = vsel %vm1027, %v1002, %v1003
        %v1052 = vsel %vm1027, %v1001, %v1002
        %v1053 = vsel %vm1027, %v1000, %v1001
        %v1054 = vsel %vm1027, %v999, %v1000
        %v1055 = vsel %vm1027, %v998, %v999
        %v1056 = vsel %vm1027, %v997, %v998
        %v1057 = vsel %vm1027, %v996, %v997
        %v1058 = vsel %vm1027, %v995, %v996
        %v1059 = vsel %vm1027, %v1026, %v995
        %v1060 = vsel %vm963, 0.0, %v1059
        %v1061 = vsel %vm964, 0.0, %v1058
        %v1062 = vsel %vm965, 0.0, %v1057
        %v1063 = vsel %vm966, 0.0, %v1056
        %v1064 = vsel %vm967, 0.0, %v1055
        %v1065 = vsel %vm968, 0.0, %v1054
        %v1066 = vsel %vm969, 0.0, %v1053
        %v1067 = vsel %vm970, 0.0, %v1052
        %v1068 = vsel %vm971, 0.0, %v1051
        %v1069 = vsel %vm972, 0.0, %v1050
        %v1070 = vsel %vm973, 0.0, %v1049
        %v1071 = vsel %vm974, 0.0, %v1048
        %v1072 = vsel %vm975, 0.0, %v1047
        %v1073 = vsel %vm976, 0.0, %v1046
        %v1074 = vsel %vm977, 0.0, %v1045
        %v1075 = vsel %vm978, 0.0, %v1044
        %v1076 = vsel %vm979, 0.0, %v1043
        %v1077 = vsel %vm980, 0.0, %v1042
        %v1078 = vsel %vm981, 0.0, %v1041
        %v1079 = vsel %vm982, 0.0, %v1040
        %v1080 = vsel %vm983, 0.0, %v1039
        %v1081 = vsel %vm984, 0.0, %v1038
        %v1082 = vsel %vm985, 0.0, %v1037
        %v1083 = vsel %vm986, 0.0, %v1036
        %v1084 = vsel %vm987, 0.0, %v1035
        %v1085 = vsel %vm988, 0.0, %v1034
        %v1086 = vsel %vm989, 0.0, %v1033
        %v1087 = vsel %vm990, 0.0, %v1032
        %v1088 = vsel %vm991, 0.0, %v1031
        %v1089 = vsel %vm992, 0.0, %v1030
        %v1090 = vsel %vm993, 0.0, %v1029
        %v1091 = vsel %vm994, 0.0, %v1028
        %vm1092 = vcmp.eq.s32.totalorder %v931, 15
        %vm1093 = vcmp.eq.s32.totalorder %v932, 15
        %vm1094 = vcmp.eq.s32.totalorder %v933, 15
        %vm1095 = vcmp.eq.s32.totalorder %v934, 15
        %vm1096 = vcmp.eq.s32.totalorder %v935, 15
        %vm1097 = vcmp.eq.s32.totalorder %v936, 15
        %vm1098 = vcmp.eq.s32.totalorder %v937, 15
        %vm1099 = vcmp.eq.s32.totalorder %v938, 15
        %vm1100 = vcmp.eq.s32.totalorder %v939, 15
        %vm1101 = vcmp.eq.s32.totalorder %v940, 15
        %vm1102 = vcmp.eq.s32.totalorder %v941, 15
        %vm1103 = vcmp.eq.s32.totalorder %v942, 15
        %vm1104 = vcmp.eq.s32.totalorder %v943, 15
        %vm1105 = vcmp.eq.s32.totalorder %v944, 15
        %vm1106 = vcmp.eq.s32.totalorder %v945, 15
        %vm1107 = vcmp.eq.s32.totalorder %v946, 15
        %vm1108 = vcmp.eq.s32.totalorder %v947, 15
        %vm1109 = vcmp.eq.s32.totalorder %v948, 15
        %vm1110 = vcmp.eq.s32.totalorder %v949, 15
        %vm1111 = vcmp.eq.s32.totalorder %v950, 15
        %vm1112 = vcmp.eq.s32.totalorder %v951, 15
        %vm1113 = vcmp.eq.s32.totalorder %v952, 15
        %vm1114 = vcmp.eq.s32.totalorder %v953, 15
        %vm1115 = vcmp.eq.s32.totalorder %v954, 15
        %vm1116 = vcmp.eq.s32.totalorder %v955, 15
        %vm1117 = vcmp.eq.s32.totalorder %v956, 15
        %vm1118 = vcmp.eq.s32.totalorder %v957, 15
        %vm1119 = vcmp.eq.s32.totalorder %v958, 15
        %vm1120 = vcmp.eq.s32.totalorder %v959, 15
        %vm1121 = vcmp.eq.s32.totalorder %v960, 15
        %vm1122 = vcmp.eq.s32.totalorder %v961, 15
        %vm1123 = vcmp.eq.s32.totalorder %v962, 15
        %v1124 = vrot.slane %v514, 1
        %v1125 = vrot.slane %v515, 1
        %v1126 = vrot.slane %v516, 1
        %v1127 = vrot.slane %v517, 1
        %v1128 = vrot.slane %v518, 1
        %v1129 = vrot.slane %v519, 1
        %v1130 = vrot.slane %v520, 1
        %v1131 = vrot.slane %v521, 1
        %v1132 = vrot.slane %v522, 1
        %v1133 = vrot.slane %v523, 1
        %v1134 = vrot.slane %v524, 1
        %v1135 = vrot.slane %v525, 1
        %v1136 = vrot.slane %v526, 1
        %v1137 = vrot.slane %v527, 1
        %v1138 = vrot.slane %v528, 1
        %v1139 = vrot.slane %v529, 1
        %v1140 = vrot.slane %v530, 1
        %v1141 = vrot.slane %v531, 1
        %v1142 = vrot.slane %v532, 1
        %v1143 = vrot.slane %v533, 1
        %v1144 = vrot.slane %v534, 1
        %v1145 = vrot.slane %v535, 1
        %v1146 = vrot.slane %v536, 1
        %v1147 = vrot.slane %v537, 1
        %v1148 = vrot.slane %v538, 1
        %v1149 = vrot.slane %v539, 1
        %v1150 = vrot.slane %v540, 1
        %v1151 = vrot.slane %v541, 1
        %v1152 = vrot.slane %v542, 1
        %v1153 = vrot.slane %v543, 1
        %v1154 = vrot.slane %v544, 1
        %v1155 = vrot.slane %v545, 1
        %vm1156 = vcmp.lt.s32.totalorder %v547, 7
        %v1157 = vsel %vm1156, %v1154, %v1155
        %v1158 = vsel %vm1156, %v1153, %v1154
        %v1159 = vsel %vm1156, %v1152, %v1153
        %v1160 = vsel %vm1156, %v1151, %v1152
        %v1161 = vsel %vm1156, %v1150, %v1151
        %v1162 = vsel %vm1156, %v1149, %v1150
        %v1163 = vsel %vm1156, %v1148, %v1149
        %v1164 = vsel %vm1156, %v1147, %v1148
        %v1165 = vsel %vm1156, %v1146, %v1147
        %v1166 = vsel %vm1156, %v1145, %v1146
        %v1167 = vsel %vm1156, %v1144, %v1145
        %v1168 = vsel %vm1156, %v1143, %v1144
        %v1169 = vsel %vm1156, %v1142, %v1143
        %v1170 = vsel %vm1156, %v1141, %v1142
        %v1171 = vsel %vm1156, %v1140, %v1141
        %v1172 = vsel %vm1156, %v1139, %v1140
        %v1173 = vsel %vm1156, %v1138, %v1139
        %v1174 = vsel %vm1156, %v1137, %v1138
        %v1175 = vsel %vm1156, %v1136, %v1137
        %v1176 = vsel %vm1156, %v1135, %v1136
        %v1177 = vsel %vm1156, %v1134, %v1135
        %v1178 = vsel %vm1156, %v1133, %v1134
        %v1179 = vsel %vm1156, %v1132, %v1133
        %v1180 = vsel %vm1156, %v1131, %v1132
        %v1181 = vsel %vm1156, %v1130, %v1131
        %v1182 = vsel %vm1156, %v1129, %v1130
        %v1183 = vsel %vm1156, %v1128, %v1129
        %v1184 = vsel %vm1156, %v1127, %v1128
        %v1185 = vsel %vm1156, %v1126, %v1127
        %v1186 = vsel %vm1156, %v1125, %v1126
        %v1187 = vsel %vm1156, %v1124, %v1125
        %v1188 = vsel %vm1156, %v1155, %v1124
        %v1189 = vsel %vm1092, 0.0, %v1187
        %v1190 = vsel %vm1093, 0.0, %v1186
        %v1191 = vsel %vm1094, 0.0, %v1185
        %v1192 = vsel %vm1095, 0.0, %v1184
        %v1193 = vsel %vm1096, 0.0, %v1183
        %v1194 = vsel %vm1097, 0.0, %v1182
        %v1195 = vsel %vm1098, 0.0, %v1181
        %v1196 = vsel %vm1099, 0.0, %v1180
        %v1197 = vsel %vm1100, 0.0, %v1179
        %v1198 = vsel %vm1101, 0.0, %v1178
        %v1199 = vsel %vm1102, 0.0, %v1177
        %v1200 = vsel %vm1103, 0.0, %v1176
        %v1201 = vsel %vm1104, 0.0, %v1175
        %v1202 = vsel %vm1105, 0.0, %v1174
        %v1203 = vsel %vm1106, 0.0, %v1173
        %v1204 = vsel %vm1107, 0.0, %v1172
        %v1205 = vsel %vm1108, 0.0, %v1171
        %v1206 = vsel %vm1109, 0.0, %v1170
        %v1207 = vsel %vm1110, 0.0, %v1169
        %v1208 = vsel %vm1111, 0.0, %v1168
        %v1209 = vsel %vm1112, 0.0, %v1167
        %v1210 = vsel %vm1113, 0.0, %v1166
        %v1211 = vsel %vm1114, 0.0, %v1165
        %v1212 = vsel %vm1115, 0.0, %v1164
        %v1213 = vsel %vm1116, 0.0, %v1163
        %v1214 = vsel %vm1117, 0.0, %v1162
        %v1215 = vsel %vm1118, 0.0, %v1161
        %v1216 = vsel %vm1119, 0.0, %v1160
        %v1217 = vsel %vm1120, 0.0, %v1159
        %v1218 = vsel %vm1121, 0.0, %v1158
        %v1219 = vsel %vm1122, 0.0, %v1157
        %v1220 = vsel %vm1123, 0.0, %v1188
        %1221 = vst [vmem:[#allocation2] sm:$0xff] 0.0
        %1222 = vst [vmem:[#allocation2 + $0x8] sm:$0xff] 0.0
        %s1223 = scalar_lea.vmem [#allocation2], 272
        %1224 = vst [vmem:[%s1223] sm:$0xff] 0.0
        %1225 = vst [vmem:[%s1223 + $0x8] sm:$0xff] 0.0
        %s1226 = scalar_lea.vmem [#allocation2], 16
        %1227 = vst [vmem:[%s1226] sm:$0xff] %v1060
        %1228 = vst [vmem:[%s1226 + $0x8] sm:$0xff] %v1061
        %1229 = vst [vmem:[%s1226 + $0x10] sm:$0xff] %v1062
        %1230 = vst [vmem:[%s1226 + $0x18] sm:$0xff] %v1063
        %1231 = vst [vmem:[%s1226 + $0x20] sm:$0xff] %v1064
        %1232 = vst [vmem:[%s1226 + $0x28] sm:$0xff] %v1065
        %1233 = vst [vmem:[%s1226 + $0x30] sm:$0xff] %v1066
        %1234 = vst [vmem:[%s1226 + $0x38] sm:$0xff] %v1067
        %1235 = vst [vmem:[%s1226 + $0x40] sm:$0xff] %v1068
        %1236 = vst [vmem:[%s1226 + $0x48] sm:$0xff] %v1069
        %1237 = vst [vmem:[%s1226 + $0x50] sm:$0xff] %v1070
        %1238 = vst [vmem:[%s1226 + $0x58] sm:$0xff] %v1071
        %1239 = vst [vmem:[%s1226 + $0x60] sm:$0xff] %v1072
        %1240 = vst [vmem:[%s1226 + $0x68] sm:$0xff] %v1073
        %1241 = vst [vmem:[%s1226 + $0x70] sm:$0xff] %v1074
        %1242 = vst [vmem:[%s1226 + $0x78] sm:$0xff] %v1075
        %1243 = vst [vmem:[%s1226 + $0x80] sm:$0xff] %v1076
        %1244 = vst [vmem:[%s1226 + $0x88] sm:$0xff] %v1077
        %1245 = vst [vmem:[%s1226 + $0x90] sm:$0xff] %v1078
        %1246 = vst [vmem:[%s1226 + $0x98] sm:$0xff] %v1079
        %1247 = vst [vmem:[%s1226 + $0xa0] sm:$0xff] %v1080
        %1248 = vst [vmem:[%s1226 + $0xa8] sm:$0xff] %v1081
        %1249 = vst [vmem:[%s1226 + $0xb0] sm:$0xff] %v1082
        %1250 = vst [vmem:[%s1226 + $0xb8] sm:$0xff] %v1083
        %1251 = vst [vmem:[%s1226 + $0xc0] sm:$0xff] %v1084
        %1252 = vst [vmem:[%s1226 + $0xc8] sm:$0xff] %v1085
        %1253 = vst [vmem:[%s1226 + $0xd0] sm:$0xff] %v1086
        %1254 = vst [vmem:[%s1226 + $0xd8] sm:$0xff] %v1087
        %1255 = vst [vmem:[%s1226 + $0xe0] sm:$0xff] %v1088
        %1256 = vst [vmem:[%s1226 + $0xe8] sm:$0xff] %v1089
        %1257 = vst [vmem:[%s1226 + $0xf0] sm:$0xff] %v1090
        %1258 = vst [vmem:[%s1226 + $0xf8] sm:$0xff] %v1091
        %1259 = vst [vmem:[#allocation3] sm:$0xff] 0.0
        %1260 = vst [vmem:[#allocation3 + $0x8] sm:$0xff] 0.0
        %s1261 = scalar_lea.vmem [#allocation3], 272
        %1262 = vst [vmem:[%s1261] sm:$0xff] 0.0
        %1263 = vst [vmem:[%s1261 + $0x8] sm:$0xff] 0.0
        %s1264 = scalar_lea.vmem [#allocation3], 16
        %1265 = vst [vmem:[%s1264] sm:$0xff] %v514
        %1266 = vst [vmem:[%s1264 + $0x8] sm:$0xff] %v515
        %1267 = vst [vmem:[%s1264 + $0x10] sm:$0xff] %v516
        %1268 = vst [vmem:[%s1264 + $0x18] sm:$0xff] %v517
        %1269 = vst [vmem:[%s1264 + $0x20] sm:$0xff] %v518
        %1270 = vst [vmem:[%s1264 + $0x28] sm:$0xff] %v519
        %1271 = vst [vmem:[%s1264 + $0x30] sm:$0xff] %v520
        %1272 = vst [vmem:[%s1264 + $0x38] sm:$0xff] %v521
        %1273 = vst [vmem:[%s1264 + $0x40] sm:$0xff] %v522
        %1274 = vst [vmem:[%s1264 + $0x48] sm:$0xff] %v523
        %1275 = vst [vmem:[%s1264 + $0x50] sm:$0xff] %v524
        %1276 = vst [vmem:[%s1264 + $0x58] sm:$0xff] %v525
        %1277 = vst [vmem:[%s1264 + $0x60] sm:$0xff] %v526
        %1278 = vst [vmem:[%s1264 + $0x68] sm:$0xff] %v527
        %1279 = vst [vmem:[%s1264 + $0x70] sm:$0xff] %v528
        %1280 = vst [vmem:[%s1264 + $0x78] sm:$0xff] %v529
        %1281 = vst [vmem:[%s1264 + $0x80] sm:$0xff] %v530
        %1282 = vst [vmem:[%s1264 + $0x88] sm:$0xff] %v531
        %1283 = vst [vmem:[%s1264 + $0x90] sm:$0xff] %v532
        %1284 = vst [vmem:[%s1264 + $0x98] sm:$0xff] %v533
        %1285 = vst [vmem:[%s1264 + $0xa0] sm:$0xff] %v534
        %1286 = vst [vmem:[%s1264 + $0xa8] sm:$0xff] %v535
        %1287 = vst [vmem:[%s1264 + $0xb0] sm:$0xff] %v536
        %1288 = vst [vmem:[%s1264 + $0xb8] sm:$0xff] %v537
        %1289 = vst [vmem:[%s1264 + $0xc0] sm:$0xff] %v538
        %1290 = vst [vmem:[%s1264 + $0xc8] sm:$0xff] %v539
        %1291 = vst [vmem:[%s1264 + $0xd0] sm:$0xff] %v540
        %1292 = vst [vmem:[%s1264 + $0xd8] sm:$0xff] %v541
        %1293 = vst [vmem:[%s1264 + $0xe0] sm:$0xff] %v542
        %1294 = vst [vmem:[%s1264 + $0xe8] sm:$0xff] %v543
        %1295 = vst [vmem:[%s1264 + $0xf0] sm:$0xff] %v544
        %1296 = vst [vmem:[%s1264 + $0xf8] sm:$0xff] %v545
        %1297 = vst [vmem:[#allocation4] sm:$0xff] 0.0
        %1298 = vst [vmem:[#allocation4 + $0x8] sm:$0xff] 0.0
        %s1299 = scalar_lea.vmem [#allocation4], 272
        %1300 = vst [vmem:[%s1299] sm:$0xff] 0.0
        %1301 = vst [vmem:[%s1299 + $0x8] sm:$0xff] 0.0
        %s1302 = scalar_lea.vmem [#allocation4], 16
        %1303 = vst [vmem:[%s1302] sm:$0xff] %v1189
        %1304 = vst [vmem:[%s1302 + $0x8] sm:$0xff] %v1190
        %1305 = vst [vmem:[%s1302 + $0x10] sm:$0xff] %v1191
        %1306 = vst [vmem:[%s1302 + $0x18] sm:$0xff] %v1192
        %1307 = vst [vmem:[%s1302 + $0x20] sm:$0xff] %v1193
        %1308 = vst [vmem:[%s1302 + $0x28] sm:$0xff] %v1194
        %1309 = vst [vmem:[%s1302 + $0x30] sm:$0xff] %v1195
        %1310 = vst [vmem:[%s1302 + $0x38] sm:$0xff] %v1196
        %1311 = vst [vmem:[%s1302 + $0x40] sm:$0xff] %v1197
        %1312 = vst [vmem:[%s1302 + $0x48] sm:$0xff] %v1198
        %1313 = vst [vmem:[%s1302 + $0x50] sm:$0xff] %v1199
        %1314 = vst [vmem:[%s1302 + $0x58] sm:$0xff] %v1200
        %1315 = vst [vmem:[%s1302 + $0x60] sm:$0xff] %v1201
        %1316 = vst [vmem:[%s1302 + $0x68] sm:$0xff] %v1202
        %1317 = vst [vmem:[%s1302 + $0x70] sm:$0xff] %v1203
        %1318 = vst [vmem:[%s1302 + $0x78] sm:$0xff] %v1204
        %1319 = vst [vmem:[%s1302 + $0x80] sm:$0xff] %v1205
        %1320 = vst [vmem:[%s1302 + $0x88] sm:$0xff] %v1206
        %1321 = vst [vmem:[%s1302 + $0x90] sm:$0xff] %v1207
        %1322 = vst [vmem:[%s1302 + $0x98] sm:$0xff] %v1208
        %1323 = vst [vmem:[%s1302 + $0xa0] sm:$0xff] %v1209
        %1324 = vst [vmem:[%s1302 + $0xa8] sm:$0xff] %v1210
        %1325 = vst [vmem:[%s1302 + $0xb0] sm:$0xff] %v1211
        %1326 = vst [vmem:[%s1302 + $0xb8] sm:$0xff] %v1212
        %1327 = vst [vmem:[%s1302 + $0xc0] sm:$0xff] %v1213
        %1328 = vst [vmem:[%s1302 + $0xc8] sm:$0xff] %v1214
        %1329 = vst [vmem:[%s1302 + $0xd0] sm:$0xff] %v1215
        %1330 = vst [vmem:[%s1302 + $0xd8] sm:$0xff] %v1216
        %1331 = vst [vmem:[%s1302 + $0xe0] sm:$0xff] %v1217
        %1332 = vst [vmem:[%s1302 + $0xe8] sm:$0xff] %v1218
        %1333 = vst [vmem:[%s1302 + $0xf0] sm:$0xff] %v1219
        %1334 = vst [vmem:[%s1302 + $0xf8] sm:$0xff] %v1220
        %v1335 = vld [vmem:[#allocation2] sm:$0xff]
        %v1336 = vld [vmem:[#allocation2 + $0x8] sm:$0xff]
        %v1337 = vld [vmem:[#allocation2 + $0x10] sm:$0xff]
        %v1338 = vld [vmem:[#allocation2 + $0x18] sm:$0xff]
        %v1339 = vld [vmem:[#allocation2 + $0x20] sm:$0xff]
        %v1340 = vld [vmem:[#allocation2 + $0x28] sm:$0xff]
        %v1341 = vld [vmem:[#allocation2 + $0x30] sm:$0xff]
        %v1342 = vld [vmem:[#allocation2 + $0x38] sm:$0xff]
        %v1343 = vld [vmem:[#allocation2 + $0x40] sm:$0xff]
        %v1344 = vld [vmem:[#allocation2 + $0x48] sm:$0xff]
        %v1345 = vld [vmem:[#allocation2 + $0x50] sm:$0xff]
        %v1346 = vld [vmem:[#allocation2 + $0x58] sm:$0xff]
        %v1347 = vld [vmem:[#allocation2 + $0x60] sm:$0xff]
        %v1348 = vld [vmem:[#allocation2 + $0x68] sm:$0xff]
        %v1349 = vld [vmem:[#allocation2 + $0x70] sm:$0xff]
        %v1350 = vld [vmem:[#allocation2 + $0x78] sm:$0xff]
        %v1351 = vld [vmem:[#allocation2 + $0x80] sm:$0xff]
        %v1352 = vld [vmem:[#allocation2 + $0x88] sm:$0xff]
        %v1353 = vld [vmem:[#allocation2 + $0x90] sm:$0xff]
        %v1354 = vld [vmem:[#allocation2 + $0x98] sm:$0xff]
        %v1355 = vld [vmem:[#allocation2 + $0xa0] sm:$0xff]
        %v1356 = vld [vmem:[#allocation2 + $0xa8] sm:$0xff]
        %v1357 = vld [vmem:[#allocation2 + $0xb0] sm:$0xff]
        %v1358 = vld [vmem:[#allocation2 + $0xb8] sm:$0xff]
        %v1359 = vld [vmem:[#allocation2 + $0xc0] sm:$0xff]
        %v1360 = vld [vmem:[#allocation2 + $0xc8] sm:$0xff]
        %v1361 = vld [vmem:[#allocation2 + $0xd0] sm:$0xff]
        %v1362 = vld [vmem:[#allocation2 + $0xd8] sm:$0xff]
        %v1363 = vld [vmem:[#allocation2 + $0xe0] sm:$0xff]
        %v1364 = vld [vmem:[#allocation2 + $0xe8] sm:$0xff]
        %v1365 = vld [vmem:[#allocation2 + $0xf0] sm:$0xff]
        %v1366 = vld [vmem:[#allocation2 + $0xf8] sm:$0xff]
        %v1367 = vld [vmem:[#allocation10] sm:$0xff]
        %v1368 = vld [vmem:[#allocation10 + $0x8] sm:$0xff]
        %v1369 = vld [vmem:[#allocation10 + $0x10] sm:$0xff]
        %v1370 = vld [vmem:[#allocation10 + $0x18] sm:$0xff]
        %v1371 = vld [vmem:[#allocation10 + $0x20] sm:$0xff]
        %v1372 = vld [vmem:[#allocation10 + $0x28] sm:$0xff]
        %v1373 = vld [vmem:[#allocation10 + $0x30] sm:$0xff]
        %v1374 = vld [vmem:[#allocation10 + $0x38] sm:$0xff]
        %v1375 = vld [vmem:[#allocation10 + $0x40] sm:$0xff]
        %v1376 = vld [vmem:[#allocation10 + $0x48] sm:$0xff]
        %v1377 = vld [vmem:[#allocation10 + $0x50] sm:$0xff]
        %v1378 = vld [vmem:[#allocation10 + $0x58] sm:$0xff]
        %v1379 = vld [vmem:[#allocation10 + $0x60] sm:$0xff]
        %v1380 = vld [vmem:[#allocation10 + $0x68] sm:$0xff]
        %v1381 = vld [vmem:[#allocation10 + $0x70] sm:$0xff]
        %v1382 = vld [vmem:[#allocation10 + $0x78] sm:$0xff]
        %v1383 = vld [vmem:[#allocation3] sm:$0xff]
        %v1384 = vld [vmem:[#allocation3 + $0x8] sm:$0xff]
        %v1385 = vld [vmem:[#allocation3 + $0x10] sm:$0xff]
        %v1386 = vld [vmem:[#allocation3 + $0x18] sm:$0xff]
        %v1387 = vld [vmem:[#allocation3 + $0x20] sm:$0xff]
        %v1388 = vld [vmem:[#allocation3 + $0x28] sm:$0xff]
        %v1389 = vld [vmem:[#allocation3 + $0x30] sm:$0xff]
        %v1390 = vld [vmem:[#allocation3 + $0x38] sm:$0xff]
        %v1391 = vld [vmem:[#allocation3 + $0x40] sm:$0xff]
        %v1392 = vld [vmem:[#allocation3 + $0x48] sm:$0xff]
        %v1393 = vld [vmem:[#allocation3 + $0x50] sm:$0xff]
        %v1394 = vld [vmem:[#allocation3 + $0x58] sm:$0xff]
        %v1395 = vld [vmem:[#allocation3 + $0x60] sm:$0xff]
        %v1396 = vld [vmem:[#allocation3 + $0x68] sm:$0xff]
        %v1397 = vld [vmem:[#allocation3 + $0x70] sm:$0xff]
        %v1398 = vld [vmem:[#allocation3 + $0x78] sm:$0xff]
        %v1399 = vld [vmem:[#allocation3 + $0x80] sm:$0xff]
        %v1400 = vld [vmem:[#allocation3 + $0x88] sm:$0xff]
        %v1401 = vld [vmem:[#allocation3 + $0x90] sm:$0xff]
        %v1402 = vld [vmem:[#allocation3 + $0x98] sm:$0xff]
        %v1403 = vld [vmem:[#allocation3 + $0xa0] sm:$0xff]
        %v1404 = vld [vmem:[#allocation3 + $0xa8] sm:$0xff]
        %v1405 = vld [vmem:[#allocation3 + $0xb0] sm:$0xff]
        %v1406 = vld [vmem:[#allocation3 + $0xb8] sm:$0xff]
        %v1407 = vld [vmem:[#allocation3 + $0xc0] sm:$0xff]
        %v1408 = vld [vmem:[#allocation3 + $0xc8] sm:$0xff]
        %v1409 = vld [vmem:[#allocation3 + $0xd0] sm:$0xff]
        %v1410 = vld [vmem:[#allocation3 + $0xd8] sm:$0xff]
        %v1411 = vld [vmem:[#allocation3 + $0xe0] sm:$0xff]
        %v1412 = vld [vmem:[#allocation3 + $0xe8] sm:$0xff]
        %v1413 = vld [vmem:[#allocation3 + $0xf0] sm:$0xff]
        %v1414 = vld [vmem:[#allocation3 + $0xf8] sm:$0xff]
        %s1415 = scalar_lea.vmem [#allocation10], 128
        %v1416 = vld [vmem:[%s1415] sm:$0xff]
        %v1417 = vld [vmem:[%s1415 + $0x8] sm:$0xff]
        %v1418 = vld [vmem:[%s1415 + $0x10] sm:$0xff]
        %v1419 = vld [vmem:[%s1415 + $0x18] sm:$0xff]
        %v1420 = vld [vmem:[%s1415 + $0x20] sm:$0xff]
        %v1421 = vld [vmem:[%s1415 + $0x28] sm:$0xff]
        %v1422 = vld [vmem:[%s1415 + $0x30] sm:$0xff]
        %v1423 = vld [vmem:[%s1415 + $0x38] sm:$0xff]
        %v1424 = vld [vmem:[%s1415 + $0x40] sm:$0xff]
        %v1425 = vld [vmem:[%s1415 + $0x48] sm:$0xff]
        %v1426 = vld [vmem:[%s1415 + $0x50] sm:$0xff]
        %v1427 = vld [vmem:[%s1415 + $0x58] sm:$0xff]
        %v1428 = vld [vmem:[%s1415 + $0x60] sm:$0xff]
        %v1429 = vld [vmem:[%s1415 + $0x68] sm:$0xff]
        %v1430 = vld [vmem:[%s1415 + $0x70] sm:$0xff]
        %v1431 = vld [vmem:[%s1415 + $0x78] sm:$0xff]
        %1432 = vmatpush.msra.mxu0 %v1431
        %1433 = vmatpush.msra.mxu0 %v1430
        %1434 = vmatpush.msra.mxu0 %v1429
        %1435 = vmatpush.msra.mxu0 %v1428
        %1436 = vmatpush.msra.mxu0 %v1427
        %1437 = vmatpush.msra.mxu0 %v1426
        %1438 = vmatpush.msra.mxu0 %v1425
        %1439 = vmatpush.msra.mxu0 %v1424
        %1440 = vmatpush.msra.mxu0 %v1423
        %1441 = vmatpush.msra.mxu0 %v1422
        %1442 = vmatpush.msra.mxu0 %v1421
        %1443 = vmatpush.msra.mxu0 %v1420
        %1444 = vmatpush.msra.mxu0 %v1419
        %1445 = vmatpush.msra.mxu0 %v1418
        %1446 = vmatpush.msra.mxu0 %v1417
        %1447 = vmatpush.msra.mxu0 %v1416
        %1448 = vmatmul.f32.gmra.mxu0 %v1383
        %v1449 = vpop.f32.mrf.mxu0
        %v1450 = vadd.f32 0.0, %v1449
        %1451 = vmatmul.f32.gmra.mxu0 %v1384
        %v1452 = vpop.f32.mrf.mxu0
        %v1453 = vadd.f32 0.0, %v1452
        %1454 = vmatmul.f32.gmra.mxu0 %v1385
        %v1455 = vpop.f32.mrf.mxu0
        %v1456 = vadd.f32 0.0, %v1455
        %1457 = vmatmul.f32.gmra.mxu0 %v1386
        %v1458 = vpop.f32.mrf.mxu0
        %v1459 = vadd.f32 0.0, %v1458
        %1460 = vmatmul.f32.gmra.mxu0 %v1387
        %v1461 = vpop.f32.mrf.mxu0
        %v1462 = vadd.f32 0.0, %v1461
        %1463 = vmatmul.f32.gmra.mxu0 %v1388
        %v1464 = vpop.f32.mrf.mxu0
        %v1465 = vadd.f32 0.0, %v1464
        %1466 = vmatmul.f32.gmra.mxu0 %v1389
        %v1467 = vpop.f32.mrf.mxu0
        %v1468 = vadd.f32 0.0, %v1467
        %1469 = vmatmul.f32.gmra.mxu0 %v1390
        %v1470 = vpop.f32.mrf.mxu0
        %v1471 = vadd.f32 0.0, %v1470
        %1472 = vmatmul.f32.gmra.mxu0 %v1391
        %v1473 = vpop.f32.mrf.mxu0
        %v1474 = vadd.f32 0.0, %v1473
        %1475 = vmatmul.f32.gmra.mxu0 %v1392
        %v1476 = vpop.f32.mrf.mxu0
        %v1477 = vadd.f32 0.0, %v1476
        %1478 = vmatmul.f32.gmra.mxu0 %v1393
        %v1479 = vpop.f32.mrf.mxu0
        %v1480 = vadd.f32 0.0, %v1479
        %1481 = vmatmul.f32.gmra.mxu0 %v1394
        %v1482 = vpop.f32.mrf.mxu0
        %v1483 = vadd.f32 0.0, %v1482
        %1484 = vmatmul.f32.gmra.mxu0 %v1395
        %v1485 = vpop.f32.mrf.mxu0
        %v1486 = vadd.f32 0.0, %v1485
        %1487 = vmatmul.f32.gmra.mxu0 %v1396
        %v1488 = vpop.f32.mrf.mxu0
        %v1489 = vadd.f32 0.0, %v1488
        %1490 = vmatmul.f32.gmra.mxu0 %v1397
        %v1491 = vpop.f32.mrf.mxu0
        %v1492 = vadd.f32 0.0, %v1491
        %1493 = vmatmul.f32.gmra.mxu0 %v1398
        %v1494 = vpop.f32.mrf.mxu0
        %v1495 = vadd.f32 0.0, %v1494
        %1496 = vmatmul.f32.gmra.mxu0 %v1399
        %v1497 = vpop.f32.mrf.mxu0
        %v1498 = vadd.f32 0.0, %v1497
        %1499 = vmatmul.f32.gmra.mxu0 %v1400
        %v1500 = vpop.f32.mrf.mxu0
        %v1501 = vadd.f32 0.0, %v1500
        %1502 = vmatmul.f32.gmra.mxu0 %v1401
        %v1503 = vpop.f32.mrf.mxu0
        %v1504 = vadd.f32 0.0, %v1503
        %1505 = vmatmul.f32.gmra.mxu0 %v1402
        %v1506 = vpop.f32.mrf.mxu0
        %v1507 = vadd.f32 0.0, %v1506
        %1508 = vmatmul.f32.gmra.mxu0 %v1403
        %v1509 = vpop.f32.mrf.mxu0
        %v1510 = vadd.f32 0.0, %v1509
        %1511 = vmatmul.f32.gmra.mxu0 %v1404
        %v1512 = vpop.f32.mrf.mxu0
        %v1513 = vadd.f32 0.0, %v1512
        %1514 = vmatmul.f32.gmra.mxu0 %v1405
        %v1515 = vpop.f32.mrf.mxu0
        %v1516 = vadd.f32 0.0, %v1515
        %1517 = vmatmul.f32.gmra.mxu0 %v1406
        %v1518 = vpop.f32.mrf.mxu0
        %v1519 = vadd.f32 0.0, %v1518
        %1520 = vmatmul.f32.gmra.mxu0 %v1407
        %v1521 = vpop.f32.mrf.mxu0
        %v1522 = vadd.f32 0.0, %v1521
        %1523 = vmatmul.f32.gmra.mxu0 %v1408
        %v1524 = vpop.f32.mrf.mxu0
        %v1525 = vadd.f32 0.0, %v1524
        %1526 = vmatmul.f32.gmra.mxu0 %v1409
        %v1527 = vpop.f32.mrf.mxu0
        %v1528 = vadd.f32 0.0, %v1527
        %1529 = vmatmul.f32.gmra.mxu0 %v1410
        %v1530 = vpop.f32.mrf.mxu0
        %v1531 = vadd.f32 0.0, %v1530
        %1532 = vmatmul.f32.gmra.mxu0 %v1411
        %v1533 = vpop.f32.mrf.mxu0
        %v1534 = vadd.f32 0.0, %v1533
        %1535 = vmatmul.f32.gmra.mxu0 %v1412
        %v1536 = vpop.f32.mrf.mxu0
        %v1537 = vadd.f32 0.0, %v1536
        %1538 = vmatmul.f32.gmra.mxu0 %v1413
        %v1539 = vpop.f32.mrf.mxu0
        %v1540 = vadd.f32 0.0, %v1539
        %1541 = vmatmul.f32.gmra.mxu0 %v1414
        %v1542 = vpop.f32.mrf.mxu0
        %v1543 = vadd.f32 0.0, %v1542
        %1544 = vdwg.mxu0
        %1545 = vmatpush.msra.mxu0 %v1382
        %1546 = vmatpush.msra.mxu0 %v1381
        %1547 = vmatpush.msra.mxu0 %v1380
        %1548 = vmatpush.msra.mxu0 %v1379
        %1549 = vmatpush.msra.mxu0 %v1378
        %1550 = vmatpush.msra.mxu0 %v1377
        %1551 = vmatpush.msra.mxu0 %v1376
        %1552 = vmatpush.msra.mxu0 %v1375
        %1553 = vmatpush.msra.mxu0 %v1374
        %1554 = vmatpush.msra.mxu0 %v1373
        %1555 = vmatpush.msra.mxu0 %v1372
        %1556 = vmatpush.msra.mxu0 %v1371
        %1557 = vmatpush.msra.mxu0 %v1370
        %1558 = vmatpush.msra.mxu0 %v1369
        %1559 = vmatpush.msra.mxu0 %v1368
        %1560 = vmatpush.msra.mxu0 %v1367
        %1561 = vmatmul.f32.gmra.mxu0 %v1335
        %v1562 = vpop.f32.mrf.mxu0
        %v1563 = vadd.f32 %v1450, %v1562
        %1564 = vmatmul.f32.gmra.mxu0 %v1336
        %v1565 = vpop.f32.mrf.mxu0
        %v1566 = vadd.f32 %v1453, %v1565
        %1567 = vmatmul.f32.gmra.mxu0 %v1337
        %v1568 = vpop.f32.mrf.mxu0
        %v1569 = vadd.f32 %v1456, %v1568
        %1570 = vmatmul.f32.gmra.mxu0 %v1338
        %v1571 = vpop.f32.mrf.mxu0
        %v1572 = vadd.f32 %v1459, %v1571
        %1573 = vmatmul.f32.gmra.mxu0 %v1339
        %v1574 = vpop.f32.mrf.mxu0
        %v1575 = vadd.f32 %v1462, %v1574
        %1576 = vmatmul.f32.gmra.mxu0 %v1340
        %v1577 = vpop.f32.mrf.mxu0
        %v1578 = vadd.f32 %v1465, %v1577
        %1579 = vmatmul.f32.gmra.mxu0 %v1341
        %v1580 = vpop.f32.mrf.mxu0
        %v1581 = vadd.f32 %v1468, %v1580
        %1582 = vmatmul.f32.gmra.mxu0 %v1342
        %v1583 = vpop.f32.mrf.mxu0
        %v1584 = vadd.f32 %v1471, %v1583
        %1585 = vmatmul.f32.gmra.mxu0 %v1343
        %v1586 = vpop.f32.mrf.mxu0
        %v1587 = vadd.f32 %v1474, %v1586
        %1588 = vmatmul.f32.gmra.mxu0 %v1344
        %v1589 = vpop.f32.mrf.mxu0
        %v1590 = vadd.f32 %v1477, %v1589
        %1591 = vmatmul.f32.gmra.mxu0 %v1345
        %v1592 = vpop.f32.mrf.mxu0
        %v1593 = vadd.f32 %v1480, %v1592
        %1594 = vmatmul.f32.gmra.mxu0 %v1346
        %v1595 = vpop.f32.mrf.mxu0
        %v1596 = vadd.f32 %v1483, %v1595
        %1597 = vmatmul.f32.gmra.mxu0 %v1347
        %v1598 = vpop.f32.mrf.mxu0
        %v1599 = vadd.f32 %v1486, %v1598
        %1600 = vmatmul.f32.gmra.mxu0 %v1348
        %v1601 = vpop.f32.mrf.mxu0
        %v1602 = vadd.f32 %v1489, %v1601
        %1603 = vmatmul.f32.gmra.mxu0 %v1349
        %v1604 = vpop.f32.mrf.mxu0
        %v1605 = vadd.f32 %v1492, %v1604
        %1606 = vmatmul.f32.gmra.mxu0 %v1350
        %v1607 = vpop.f32.mrf.mxu0
        %v1608 = vadd.f32 %v1495, %v1607
        %1609 = vmatmul.f32.gmra.mxu0 %v1351
        %v1610 = vpop.f32.mrf.mxu0
        %v1611 = vadd.f32 %v1498, %v1610
        %1612 = vmatmul.f32.gmra.mxu0 %v1352
        %v1613 = vpop.f32.mrf.mxu0
        %v1614 = vadd.f32 %v1501, %v1613
        %1615 = vmatmul.f32.gmra.mxu0 %v1353
        %v1616 = vpop.f32.mrf.mxu0
        %v1617 = vadd.f32 %v1504, %v1616
        %1618 = vmatmul.f32.gmra.mxu0 %v1354
        %v1619 = vpop.f32.mrf.mxu0
        %v1620 = vadd.f32 %v1507, %v1619
        %1621 = vmatmul.f32.gmra.mxu0 %v1355
        %v1622 = vpop.f32.mrf.mxu0
        %v1623 = vadd.f32 %v1510, %v1622
        %1624 = vmatmul.f32.gmra.mxu0 %v1356
        %v1625 = vpop.f32.mrf.mxu0
        %v1626 = vadd.f32 %v1513, %v1625
        %1627 = vmatmul.f32.gmra.mxu0 %v1357
        %v1628 = vpop.f32.mrf.mxu0
        %v1629 = vadd.f32 %v1516, %v1628
        %1630 = vmatmul.f32.gmra.mxu0 %v1358
        %v1631 = vpop.f32.mrf.mxu0
        %v1632 = vadd.f32 %v1519, %v1631
        %1633 = vmatmul.f32.gmra.mxu0 %v1359
        %v1634 = vpop.f32.mrf.mxu0
        %v1635 = vadd.f32 %v1522, %v1634
        %1636 = vmatmul.f32.gmra.mxu0 %v1360
        %v1637 = vpop.f32.mrf.mxu0
        %v1638 = vadd.f32 %v1525, %v1637
        %1639 = vmatmul.f32.gmra.mxu0 %v1361
        %v1640 = vpop.f32.mrf.mxu0
        %v1641 = vadd.f32 %v1528, %v1640
        %1642 = vmatmul.f32.gmra.mxu0 %v1362
        %v1643 = vpop.f32.mrf.mxu0
        %v1644 = vadd.f32 %v1531, %v1643
        %1645 = vmatmul.f32.gmra.mxu0 %v1363
        %v1646 = vpop.f32.mrf.mxu0
        %v1647 = vadd.f32 %v1534, %v1646
        %1648 = vmatmul.f32.gmra.mxu0 %v1364
        %v1649 = vpop.f32.mrf.mxu0
        %v1650 = vadd.f32 %v1537, %v1649
        %1651 = vmatmul.f32.gmra.mxu0 %v1365
        %v1652 = vpop.f32.mrf.mxu0
        %v1653 = vadd.f32 %v1540, %v1652
        %1654 = vmatmul.f32.gmra.mxu0 %v1366
        %v1655 = vpop.f32.mrf.mxu0
        %v1656 = vadd.f32 %v1543, %v1655
        %1657 = vdwg.mxu0
        %v1658 = vld [vmem:[#allocation4] sm:$0xff]
        %v1659 = vld [vmem:[#allocation4 + $0x8] sm:$0xff]
        %v1660 = vld [vmem:[#allocation4 + $0x10] sm:$0xff]
        %v1661 = vld [vmem:[#allocation4 + $0x18] sm:$0xff]
        %v1662 = vld [vmem:[#allocation4 + $0x20] sm:$0xff]
        %v1663 = vld [vmem:[#allocation4 + $0x28] sm:$0xff]
        %v1664 = vld [vmem:[#allocation4 + $0x30] sm:$0xff]
        %v1665 = vld [vmem:[#allocation4 + $0x38] sm:$0xff]
        %v1666 = vld [vmem:[#allocation4 + $0x40] sm:$0xff]
        %v1667 = vld [vmem:[#allocation4 + $0x48] sm:$0xff]
        %v1668 = vld [vmem:[#allocation4 + $0x50] sm:$0xff]
        %v1669 = vld [vmem:[#allocation4 + $0x58] sm:$0xff]
        %v1670 = vld [vmem:[#allocation4 + $0x60] sm:$0xff]
        %v1671 = vld [vmem:[#allocation4 + $0x68] sm:$0xff]
        %v1672 = vld [vmem:[#allocation4 + $0x70] sm:$0xff]
        %v1673 = vld [vmem:[#allocation4 + $0x78] sm:$0xff]
        %v1674 = vld [vmem:[#allocation4 + $0x80] sm:$0xff]
        %v1675 = vld [vmem:[#allocation4 + $0x88] sm:$0xff]
        %v1676 = vld [vmem:[#allocation4 + $0x90] sm:$0xff]
        %v1677 = vld [vmem:[#allocation4 + $0x98] sm:$0xff]
        %v1678 = vld [vmem:[#allocation4 + $0xa0] sm:$0xff]
        %v1679 = vld [vmem:[#allocation4 + $0xa8] sm:$0xff]
        %v1680 = vld [vmem:[#allocation4 + $0xb0] sm:$0xff]
        %v1681 = vld [vmem:[#allocation4 + $0xb8] sm:$0xff]
        %v1682 = vld [vmem:[#allocation4 + $0xc0] sm:$0xff]
        %v1683 = vld [vmem:[#allocation4 + $0xc8] sm:$0xff]
        %v1684 = vld [vmem:[#allocation4 + $0xd0] sm:$0xff]
        %v1685 = vld [vmem:[#allocation4 + $0xd8] sm:$0xff]
        %v1686 = vld [vmem:[#allocation4 + $0xe0] sm:$0xff]
        %v1687 = vld [vmem:[#allocation4 + $0xe8] sm:$0xff]
        %v1688 = vld [vmem:[#allocation4 + $0xf0] sm:$0xff]
        %v1689 = vld [vmem:[#allocation4 + $0xf8] sm:$0xff]
        %s1690 = scalar_lea.vmem [#allocation10], 256
        %v1691 = vld [vmem:[%s1690] sm:$0xff]
        %v1692 = vld [vmem:[%s1690 + $0x8] sm:$0xff]
        %v1693 = vld [vmem:[%s1690 + $0x10] sm:$0xff]
        %v1694 = vld [vmem:[%s1690 + $0x18] sm:$0xff]
        %v1695 = vld [vmem:[%s1690 + $0x20] sm:$0xff]
        %v1696 = vld [vmem:[%s1690 + $0x28] sm:$0xff]
        %v1697 = vld [vmem:[%s1690 + $0x30] sm:$0xff]
        %v1698 = vld [vmem:[%s1690 + $0x38] sm:$0xff]
        %v1699 = vld [vmem:[%s1690 + $0x40] sm:$0xff]
        %v1700 = vld [vmem:[%s1690 + $0x48] sm:$0xff]
        %v1701 = vld [vmem:[%s1690 + $0x50] sm:$0xff]
        %v1702 = vld [vmem:[%s1690 + $0x58] sm:$0xff]
        %v1703 = vld [vmem:[%s1690 + $0x60] sm:$0xff]
        %v1704 = vld [vmem:[%s1690 + $0x68] sm:$0xff]
        %v1705 = vld [vmem:[%s1690 + $0x70] sm:$0xff]
        %v1706 = vld [vmem:[%s1690 + $0x78] sm:$0xff]
        %1707 = vmatpush.msra.mxu0 %v1706
        %1708 = vmatpush.msra.mxu0 %v1705
        %1709 = vmatpush.msra.mxu0 %v1704
        %1710 = vmatpush.msra.mxu0 %v1703
        %1711 = vmatpush.msra.mxu0 %v1702
        %1712 = vmatpush.msra.mxu0 %v1701
        %1713 = vmatpush.msra.mxu0 %v1700
        %1714 = vmatpush.msra.mxu0 %v1699
        %1715 = vmatpush.msra.mxu0 %v1698
        %1716 = vmatpush.msra.mxu0 %v1697
        %1717 = vmatpush.msra.mxu0 %v1696
        %1718 = vmatpush.msra.mxu0 %v1695
        %1719 = vmatpush.msra.mxu0 %v1694
        %1720 = vmatpush.msra.mxu0 %v1693
        %1721 = vmatpush.msra.mxu0 %v1692
        %1722 = vmatpush.msra.mxu0 %v1691
        %1723 = vmatmul.f32.gmra.mxu0 %v1658
        %v1724 = vpop.f32.mrf.mxu0
        %v1725 = vadd.f32 0.0, %v1724
        %1726 = vmatmul.f32.gmra.mxu0 %v1659
        %v1727 = vpop.f32.mrf.mxu0
        %v1728 = vadd.f32 0.0, %v1727
        %1729 = vmatmul.f32.gmra.mxu0 %v1660
        %v1730 = vpop.f32.mrf.mxu0
        %v1731 = vadd.f32 0.0, %v1730
        %1732 = vmatmul.f32.gmra.mxu0 %v1661
        %v1733 = vpop.f32.mrf.mxu0
        %v1734 = vadd.f32 0.0, %v1733
        %1735 = vmatmul.f32.gmra.mxu0 %v1662
        %v1736 = vpop.f32.mrf.mxu0
        %v1737 = vadd.f32 0.0, %v1736
        %1738 = vmatmul.f32.gmra.mxu0 %v1663
        %v1739 = vpop.f32.mrf.mxu0
        %v1740 = vadd.f32 0.0, %v1739
        %1741 = vmatmul.f32.gmra.mxu0 %v1664
        %v1742 = vpop.f32.mrf.mxu0
        %v1743 = vadd.f32 0.0, %v1742
        %1744 = vmatmul.f32.gmra.mxu0 %v1665
        %v1745 = vpop.f32.mrf.mxu0
        %v1746 = vadd.f32 0.0, %v1745
        %1747 = vmatmul.f32.gmra.mxu0 %v1666
        %v1748 = vpop.f32.mrf.mxu0
        %v1749 = vadd.f32 0.0, %v1748
        %1750 = vmatmul.f32.gmra.mxu0 %v1667
        %v1751 = vpop.f32.mrf.mxu0
        %v1752 = vadd.f32 0.0, %v1751
        %1753 = vmatmul.f32.gmra.mxu0 %v1668
        %v1754 = vpop.f32.mrf.mxu0
        %v1755 = vadd.f32 0.0, %v1754
        %1756 = vmatmul.f32.gmra.mxu0 %v1669
        %v1757 = vpop.f32.mrf.mxu0
        %v1758 = vadd.f32 0.0, %v1757
        %1759 = vmatmul.f32.gmra.mxu0 %v1670
        %v1760 = vpop.f32.mrf.mxu0
        %v1761 = vadd.f32 0.0, %v1760
        %1762 = vmatmul.f32.gmra.mxu0 %v1671
        %v1763 = vpop.f32.mrf.mxu0
        %v1764 = vadd.f32 0.0, %v1763
        %1765 = vmatmul.f32.gmra.mxu0 %v1672
        %v1766 = vpop.f32.mrf.mxu0
        %v1767 = vadd.f32 0.0, %v1766
        %1768 = vmatmul.f32.gmra.mxu0 %v1673
        %v1769 = vpop.f32.mrf.mxu0
        %v1770 = vadd.f32 0.0, %v1769
        %1771 = vmatmul.f32.gmra.mxu0 %v1674
        %v1772 = vpop.f32.mrf.mxu0
        %v1773 = vadd.f32 0.0, %v1772
        %1774 = vmatmul.f32.gmra.mxu0 %v1675
        %v1775 = vpop.f32.mrf.mxu0
        %v1776 = vadd.f32 0.0, %v1775
        %1777 = vmatmul.f32.gmra.mxu0 %v1676
        %v1778 = vpop.f32.mrf.mxu0
        %v1779 = vadd.f32 0.0, %v1778
        %1780 = vmatmul.f32.gmra.mxu0 %v1677
        %v1781 = vpop.f32.mrf.mxu0
        %v1782 = vadd.f32 0.0, %v1781
        %1783 = vmatmul.f32.gmra.mxu0 %v1678
        %v1784 = vpop.f32.mrf.mxu0
        %v1785 = vadd.f32 0.0, %v1784
        %1786 = vmatmul.f32.gmra.mxu0 %v1679
        %v1787 = vpop.f32.mrf.mxu0
        %v1788 = vadd.f32 0.0, %v1787
        %1789 = vmatmul.f32.gmra.mxu0 %v1680
        %v1790 = vpop.f32.mrf.mxu0
        %v1791 = vadd.f32 0.0, %v1790
        %1792 = vmatmul.f32.gmra.mxu0 %v1681
        %v1793 = vpop.f32.mrf.mxu0
        %v1794 = vadd.f32 0.0, %v1793
        %1795 = vmatmul.f32.gmra.mxu0 %v1682
        %v1796 = vpop.f32.mrf.mxu0
        %v1797 = vadd.f32 0.0, %v1796
        %1798 = vmatmul.f32.gmra.mxu0 %v1683
        %v1799 = vpop.f32.mrf.mxu0
        %v1800 = vadd.f32 0.0, %v1799
        %1801 = vmatmul.f32.gmra.mxu0 %v1684
        %v1802 = vpop.f32.mrf.mxu0
        %v1803 = vadd.f32 0.0, %v1802
        %1804 = vmatmul.f32.gmra.mxu0 %v1685
        %v1805 = vpop.f32.mrf.mxu0
        %v1806 = vadd.f32 0.0, %v1805
        %1807 = vmatmul.f32.gmra.mxu0 %v1686
        %v1808 = vpop.f32.mrf.mxu0
        %v1809 = vadd.f32 0.0, %v1808
        %1810 = vmatmul.f32.gmra.mxu0 %v1687
        %v1811 = vpop.f32.mrf.mxu0
        %v1812 = vadd.f32 0.0, %v1811
        %1813 = vmatmul.f32.gmra.mxu0 %v1688
        %v1814 = vpop.f32.mrf.mxu0
        %v1815 = vadd.f32 0.0, %v1814
        %1816 = vmatmul.f32.gmra.mxu0 %v1689
        %v1817 = vpop.f32.mrf.mxu0
        %v1818 = vadd.f32 0.0, %v1817
        %1819 = vdwg.mxu0
        %v1820 = vadd.f32 %v1563, %v1725
        %v1821 = vadd.f32 %v1566, %v1728
        %v1822 = vadd.f32 %v1569, %v1731
        %v1823 = vadd.f32 %v1572, %v1734
        %v1824 = vadd.f32 %v1575, %v1737
        %v1825 = vadd.f32 %v1578, %v1740
        %v1826 = vadd.f32 %v1581, %v1743
        %v1827 = vadd.f32 %v1584, %v1746
        %v1828 = vadd.f32 %v1587, %v1749
        %v1829 = vadd.f32 %v1590, %v1752
        %v1830 = vadd.f32 %v1593, %v1755
        %v1831 = vadd.f32 %v1596, %v1758
        %v1832 = vadd.f32 %v1599, %v1761
        %v1833 = vadd.f32 %v1602, %v1764
        %v1834 = vadd.f32 %v1605, %v1767
        %v1835 = vadd.f32 %v1608, %v1770
        %v1836 = vadd.f32 %v1611, %v1773
        %v1837 = vadd.f32 %v1614, %v1776
        %v1838 = vadd.f32 %v1617, %v1779
        %v1839 = vadd.f32 %v1620, %v1782
        %v1840 = vadd.f32 %v1623, %v1785
        %v1841 = vadd.f32 %v1626, %v1788
        %v1842 = vadd.f32 %v1629, %v1791
        %v1843 = vadd.f32 %v1632, %v1794
        %v1844 = vadd.f32 %v1635, %v1797
        %v1845 = vadd.f32 %v1638, %v1800
        %v1846 = vadd.f32 %v1641, %v1803
        %v1847 = vadd.f32 %v1644, %v1806
        %v1848 = vadd.f32 %v1647, %v1809
        %v1849 = vadd.f32 %v1650, %v1812
        %v1850 = vadd.f32 %v1653, %v1815
        %v1851 = vadd.f32 %v1656, %v1818
        %v1852 = vld [vmem:[%s1226] sm:$0xff]
        %v1853 = vld [vmem:[%s1226 + $0x8] sm:$0xff]
        %v1854 = vld [vmem:[%s1226 + $0x10] sm:$0xff]
        %v1855 = vld [vmem:[%s1226 + $0x18] sm:$0xff]
        %v1856 = vld [vmem:[%s1226 + $0x20] sm:$0xff]
        %v1857 = vld [vmem:[%s1226 + $0x28] sm:$0xff]
        %v1858 = vld [vmem:[%s1226 + $0x30] sm:$0xff]
        %v1859 = vld [vmem:[%s1226 + $0x38] sm:$0xff]
        %v1860 = vld [vmem:[%s1226 + $0x40] sm:$0xff]
        %v1861 = vld [vmem:[%s1226 + $0x48] sm:$0xff]
        %v1862 = vld [vmem:[%s1226 + $0x50] sm:$0xff]
        %v1863 = vld [vmem:[%s1226 + $0x58] sm:$0xff]
        %v1864 = vld [vmem:[%s1226 + $0x60] sm:$0xff]
        %v1865 = vld [vmem:[%s1226 + $0x68] sm:$0xff]
        %v1866 = vld [vmem:[%s1226 + $0x70] sm:$0xff]
        %v1867 = vld [vmem:[%s1226 + $0x78] sm:$0xff]
        %v1868 = vld [vmem:[%s1226 + $0x80] sm:$0xff]
        %v1869 = vld [vmem:[%s1226 + $0x88] sm:$0xff]
        %v1870 = vld [vmem:[%s1226 + $0x90] sm:$0xff]
        %v1871 = vld [vmem:[%s1226 + $0x98] sm:$0xff]
        %v1872 = vld [vmem:[%s1226 + $0xa0] sm:$0xff]
        %v1873 = vld [vmem:[%s1226 + $0xa8] sm:$0xff]
        %v1874 = vld [vmem:[%s1226 + $0xb0] sm:$0xff]
        %v1875 = vld [vmem:[%s1226 + $0xb8] sm:$0xff]
        %v1876 = vld [vmem:[%s1226 + $0xc0] sm:$0xff]
        %v1877 = vld [vmem:[%s1226 + $0xc8] sm:$0xff]
        %v1878 = vld [vmem:[%s1226 + $0xd0] sm:$0xff]
        %v1879 = vld [vmem:[%s1226 + $0xd8] sm:$0xff]
        %v1880 = vld [vmem:[%s1226 + $0xe0] sm:$0xff]
        %v1881 = vld [vmem:[%s1226 + $0xe8] sm:$0xff]
        %v1882 = vld [vmem:[%s1226 + $0xf0] sm:$0xff]
        %v1883 = vld [vmem:[%s1226 + $0xf8] sm:$0xff]
        %s1884 = scalar_lea.vmem [#allocation10], 384
        %v1885 = vld [vmem:[%s1884] sm:$0xff]
        %v1886 = vld [vmem:[%s1884 + $0x8] sm:$0xff]
        %v1887 = vld [vmem:[%s1884 + $0x10] sm:$0xff]
        %v1888 = vld [vmem:[%s1884 + $0x18] sm:$0xff]
        %v1889 = vld [vmem:[%s1884 + $0x20] sm:$0xff]
        %v1890 = vld [vmem:[%s1884 + $0x28] sm:$0xff]
        %v1891 = vld [vmem:[%s1884 + $0x30] sm:$0xff]
        %v1892 = vld [vmem:[%s1884 + $0x38] sm:$0xff]
        %v1893 = vld [vmem:[%s1884 + $0x40] sm:$0xff]
        %v1894 = vld [vmem:[%s1884 + $0x48] sm:$0xff]
        %v1895 = vld [vmem:[%s1884 + $0x50] sm:$0xff]
        %v1896 = vld [vmem:[%s1884 + $0x58] sm:$0xff]
        %v1897 = vld [vmem:[%s1884 + $0x60] sm:$0xff]
        %v1898 = vld [vmem:[%s1884 + $0x68] sm:$0xff]
        %v1899 = vld [vmem:[%s1884 + $0x70] sm:$0xff]
        %v1900 = vld [vmem:[%s1884 + $0x78] sm:$0xff]
        %1901 = vmatpush.msra.mxu0 %v1900
        %1902 = vmatpush.msra.mxu0 %v1899
        %1903 = vmatpush.msra.mxu0 %v1898
        %1904 = vmatpush.msra.mxu0 %v1897
        %1905 = vmatpush.msra.mxu0 %v1896
        %1906 = vmatpush.msra.mxu0 %v1895
        %1907 = vmatpush.msra.mxu0 %v1894
        %1908 = vmatpush.msra.mxu0 %v1893
        %1909 = vmatpush.msra.mxu0 %v1892
        %1910 = vmatpush.msra.mxu0 %v1891
        %1911 = vmatpush.msra.mxu0 %v1890
        %1912 = vmatpush.msra.mxu0 %v1889
        %1913 = vmatpush.msra.mxu0 %v1888
        %1914 = vmatpush.msra.mxu0 %v1887
        %1915 = vmatpush.msra.mxu0 %v1886
        %1916 = vmatpush.msra.mxu0 %v1885
        %1917 = vmatmul.f32.gmra.mxu0 %v1852
        %v1918 = vpop.f32.mrf.mxu0
        %v1919 = vadd.f32 0.0, %v1918
        %1920 = vmatmul.f32.gmra.mxu0 %v1853
        %v1921 = vpop.f32.mrf.mxu0
        %v1922 = vadd.f32 0.0, %v1921
        %1923 = vmatmul.f32.gmra.mxu0 %v1854
        %v1924 = vpop.f32.mrf.mxu0
        %v1925 = vadd.f32 0.0, %v1924
        %1926 = vmatmul.f32.gmra.mxu0 %v1855
        %v1927 = vpop.f32.mrf.mxu0
        %v1928 = vadd.f32 0.0, %v1927
        %1929 = vmatmul.f32.gmra.mxu0 %v1856
        %v1930 = vpop.f32.mrf.mxu0
        %v1931 = vadd.f32 0.0, %v1930
        %1932 = vmatmul.f32.gmra.mxu0 %v1857
        %v1933 = vpop.f32.mrf.mxu0
        %v1934 = vadd.f32 0.0, %v1933
        %1935 = vmatmul.f32.gmra.mxu0 %v1858
        %v1936 = vpop.f32.mrf.mxu0
        %v1937 = vadd.f32 0.0, %v1936
        %1938 = vmatmul.f32.gmra.mxu0 %v1859
        %v1939 = vpop.f32.mrf.mxu0
        %v1940 = vadd.f32 0.0, %v1939
        %1941 = vmatmul.f32.gmra.mxu0 %v1860
        %v1942 = vpop.f32.mrf.mxu0
        %v1943 = vadd.f32 0.0, %v1942
        %1944 = vmatmul.f32.gmra.mxu0 %v1861
        %v1945 = vpop.f32.mrf.mxu0
        %v1946 = vadd.f32 0.0, %v1945
        %1947 = vmatmul.f32.gmra.mxu0 %v1862
        %v1948 = vpop.f32.mrf.mxu0
        %v1949 = vadd.f32 0.0, %v1948
        %1950 = vmatmul.f32.gmra.mxu0 %v1863
        %v1951 = vpop.f32.mrf.mxu0
        %v1952 = vadd.f32 0.0, %v1951
        %1953 = vmatmul.f32.gmra.mxu0 %v1864
        %v1954 = vpop.f32.mrf.mxu0
        %v1955 = vadd.f32 0.0, %v1954
        %1956 = vmatmul.f32.gmra.mxu0 %v1865
        %v1957 = vpop.f32.mrf.mxu0
        %v1958 = vadd.f32 0.0, %v1957
        %1959 = vmatmul.f32.gmra.mxu0 %v1866
        %v1960 = vpop.f32.mrf.mxu0
        %v1961 = vadd.f32 0.0, %v1960
        %1962 = vmatmul.f32.gmra.mxu0 %v1867
        %v1963 = vpop.f32.mrf.mxu0
        %v1964 = vadd.f32 0.0, %v1963
        %1965 = vmatmul.f32.gmra.mxu0 %v1868
        %v1966 = vpop.f32.mrf.mxu0
        %v1967 = vadd.f32 0.0, %v1966
        %1968 = vmatmul.f32.gmra.mxu0 %v1869
        %v1969 = vpop.f32.mrf.mxu0
        %v1970 = vadd.f32 0.0, %v1969
        %1971 = vmatmul.f32.gmra.mxu0 %v1870
        %v1972 = vpop.f32.mrf.mxu0
        %v1973 = vadd.f32 0.0, %v1972
        %1974 = vmatmul.f32.gmra.mxu0 %v1871
        %v1975 = vpop.f32.mrf.mxu0
        %v1976 = vadd.f32 0.0, %v1975
        %1977 = vmatmul.f32.gmra.mxu0 %v1872
        %v1978 = vpop.f32.mrf.mxu0
        %v1979 = vadd.f32 0.0, %v1978
        %1980 = vmatmul.f32.gmra.mxu0 %v1873
        %v1981 = vpop.f32.mrf.mxu0
        %v1982 = vadd.f32 0.0, %v1981
        %1983 = vmatmul.f32.gmra.mxu0 %v1874
        %v1984 = vpop.f32.mrf.mxu0
        %v1985 = vadd.f32 0.0, %v1984
        %1986 = vmatmul.f32.gmra.mxu0 %v1875
        %v1987 = vpop.f32.mrf.mxu0
        %v1988 = vadd.f32 0.0, %v1987
        %1989 = vmatmul.f32.gmra.mxu0 %v1876
        %v1990 = vpop.f32.mrf.mxu0
        %v1991 = vadd.f32 0.0, %v1990
        %1992 = vmatmul.f32.gmra.mxu0 %v1877
        %v1993 = vpop.f32.mrf.mxu0
        %v1994 = vadd.f32 0.0, %v1993
        %1995 = vmatmul.f32.gmra.mxu0 %v1878
        %v1996 = vpop.f32.mrf.mxu0
        %v1997 = vadd.f32 0.0, %v1996
        %1998 = vmatmul.f32.gmra.mxu0 %v1879
        %v1999 = vpop.f32.mrf.mxu0
        %v2000 = vadd.f32 0.0, %v1999
        %2001 = vmatmul.f32.gmra.mxu0 %v1880
        %v2002 = vpop.f32.mrf.mxu0
        %v2003 = vadd.f32 0.0, %v2002
        %2004 = vmatmul.f32.gmra.mxu0 %v1881
        %v2005 = vpop.f32.mrf.mxu0
        %v2006 = vadd.f32 0.0, %v2005
        %2007 = vmatmul.f32.gmra.mxu0 %v1882
        %v2008 = vpop.f32.mrf.mxu0
        %v2009 = vadd.f32 0.0, %v2008
        %2010 = vmatmul.f32.gmra.mxu0 %v1883
        %v2011 = vpop.f32.mrf.mxu0
        %v2012 = vadd.f32 0.0, %v2011
        %2013 = vdwg.mxu0
        %v2014 = vadd.f32 %v1820, %v1919
        %v2015 = vadd.f32 %v1821, %v1922
        %v2016 = vadd.f32 %v1822, %v1925
        %v2017 = vadd.f32 %v1823, %v1928
        %v2018 = vadd.f32 %v1824, %v1931
        %v2019 = vadd.f32 %v1825, %v1934
        %v2020 = vadd.f32 %v1826, %v1937
        %v2021 = vadd.f32 %v1827, %v1940
        %v2022 = vadd.f32 %v1828, %v1943
        %v2023 = vadd.f32 %v1829, %v1946
        %v2024 = vadd.f32 %v1830, %v1949
        %v2025 = vadd.f32 %v1831, %v1952
        %v2026 = vadd.f32 %v1832, %v1955
        %v2027 = vadd.f32 %v1833, %v1958
        %v2028 = vadd.f32 %v1834, %v1961
        %v2029 = vadd.f32 %v1835, %v1964
        %v2030 = vadd.f32 %v1836, %v1967
        %v2031 = vadd.f32 %v1837, %v1970
        %v2032 = vadd.f32 %v1838, %v1973
        %v2033 = vadd.f32 %v1839, %v1976
        %v2034 = vadd.f32 %v1840, %v1979
        %v2035 = vadd.f32 %v1841, %v1982
        %v2036 = vadd.f32 %v1842, %v1985
        %v2037 = vadd.f32 %v1843, %v1988
        %v2038 = vadd.f32 %v1844, %v1991
        %v2039 = vadd.f32 %v1845, %v1994
        %v2040 = vadd.f32 %v1846, %v1997
        %v2041 = vadd.f32 %v1847, %v2000
        %v2042 = vadd.f32 %v1848, %v2003
        %v2043 = vadd.f32 %v1849, %v2006
        %v2044 = vadd.f32 %v1850, %v2009
        %v2045 = vadd.f32 %v1851, %v2012
        %v2046 = vld [vmem:[%s1264] sm:$0xff]
        %v2047 = vld [vmem:[%s1264 + $0x8] sm:$0xff]
        %v2048 = vld [vmem:[%s1264 + $0x10] sm:$0xff]
        %v2049 = vld [vmem:[%s1264 + $0x18] sm:$0xff]
        %v2050 = vld [vmem:[%s1264 + $0x20] sm:$0xff]
        %v2051 = vld [vmem:[%s1264 + $0x28] sm:$0xff]
        %v2052 = vld [vmem:[%s1264 + $0x30] sm:$0xff]
        %v2053 = vld [vmem:[%s1264 + $0x38] sm:$0xff]
        %v2054 = vld [vmem:[%s1264 + $0x40] sm:$0xff]
        %v2055 = vld [vmem:[%s1264 + $0x48] sm:$0xff]
        %v2056 = vld [vmem:[%s1264 + $0x50] sm:$0xff]
        %v2057 = vld [vmem:[%s1264 + $0x58] sm:$0xff]
        %v2058 = vld [vmem:[%s1264 + $0x60] sm:$0xff]
        %v2059 = vld [vmem:[%s1264 + $0x68] sm:$0xff]
        %v2060 = vld [vmem:[%s1264 + $0x70] sm:$0xff]
        %v2061 = vld [vmem:[%s1264 + $0x78] sm:$0xff]
        %v2062 = vld [vmem:[%s1264 + $0x80] sm:$0xff]
        %v2063 = vld [vmem:[%s1264 + $0x88] sm:$0xff]
        %v2064 = vld [vmem:[%s1264 + $0x90] sm:$0xff]
        %v2065 = vld [vmem:[%s1264 + $0x98] sm:$0xff]
        %v2066 = vld [vmem:[%s1264 + $0xa0] sm:$0xff]
        %v2067 = vld [vmem:[%s1264 + $0xa8] sm:$0xff]
        %v2068 = vld [vmem:[%s1264 + $0xb0] sm:$0xff]
        %v2069 = vld [vmem:[%s1264 + $0xb8] sm:$0xff]
        %v2070 = vld [vmem:[%s1264 + $0xc0] sm:$0xff]
        %v2071 = vld [vmem:[%s1264 + $0xc8] sm:$0xff]
        %v2072 = vld [vmem:[%s1264 + $0xd0] sm:$0xff]
        %v2073 = vld [vmem:[%s1264 + $0xd8] sm:$0xff]
        %v2074 = vld [vmem:[%s1264 + $0xe0] sm:$0xff]
        %v2075 = vld [vmem:[%s1264 + $0xe8] sm:$0xff]
        %v2076 = vld [vmem:[%s1264 + $0xf0] sm:$0xff]
        %v2077 = vld [vmem:[%s1264 + $0xf8] sm:$0xff]
        %s2078 = scalar_lea.vmem [#allocation10], 512
        %v2079 = vld [vmem:[%s2078] sm:$0xff]
        %v2080 = vld [vmem:[%s2078 + $0x8] sm:$0xff]
        %v2081 = vld [vmem:[%s2078 + $0x10] sm:$0xff]
        %v2082 = vld [vmem:[%s2078 + $0x18] sm:$0xff]
        %v2083 = vld [vmem:[%s2078 + $0x20] sm:$0xff]
        %v2084 = vld [vmem:[%s2078 + $0x28] sm:$0xff]
        %v2085 = vld [vmem:[%s2078 + $0x30] sm:$0xff]
        %v2086 = vld [vmem:[%s2078 + $0x38] sm:$0xff]
        %v2087 = vld [vmem:[%s2078 + $0x40] sm:$0xff]
        %v2088 = vld [vmem:[%s2078 + $0x48] sm:$0xff]
        %v2089 = vld [vmem:[%s2078 + $0x50] sm:$0xff]
        %v2090 = vld [vmem:[%s2078 + $0x58] sm:$0xff]
        %v2091 = vld [vmem:[%s2078 + $0x60] sm:$0xff]
        %v2092 = vld [vmem:[%s2078 + $0x68] sm:$0xff]
        %v2093 = vld [vmem:[%s2078 + $0x70] sm:$0xff]
        %v2094 = vld [vmem:[%s2078 + $0x78] sm:$0xff]
        %2095 = vmatpush.msra.mxu0 %v2094
        %2096 = vmatpush.msra.mxu0 %v2093
        %2097 = vmatpush.msra.mxu0 %v2092
        %2098 = vmatpush.msra.mxu0 %v2091
        %2099 = vmatpush.msra.mxu0 %v2090
        %2100 = vmatpush.msra.mxu0 %v2089
        %2101 = vmatpush.msra.mxu0 %v2088
        %2102 = vmatpush.msra.mxu0 %v2087
        %2103 = vmatpush.msra.mxu0 %v2086
        %2104 = vmatpush.msra.mxu0 %v2085
        %2105 = vmatpush.msra.mxu0 %v2084
        %2106 = vmatpush.msra.mxu0 %v2083
        %2107 = vmatpush.msra.mxu0 %v2082
        %2108 = vmatpush.msra.mxu0 %v2081
        %2109 = vmatpush.msra.mxu0 %v2080
        %2110 = vmatpush.msra.mxu0 %v2079
        %2111 = vmatmul.f32.gmra.mxu0 %v2046
        %v2112 = vpop.f32.mrf.mxu0
        %v2113 = vadd.f32 0.0, %v2112
        %2114 = vmatmul.f32.gmra.mxu0 %v2047
        %v2115 = vpop.f32.mrf.mxu0
        %v2116 = vadd.f32 0.0, %v2115
        %2117 = vmatmul.f32.gmra.mxu0 %v2048
        %v2118 = vpop.f32.mrf.mxu0
        %v2119 = vadd.f32 0.0, %v2118
        %2120 = vmatmul.f32.gmra.mxu0 %v2049
        %v2121 = vpop.f32.mrf.mxu0
        %v2122 = vadd.f32 0.0, %v2121
        %2123 = vmatmul.f32.gmra.mxu0 %v2050
        %v2124 = vpop.f32.mrf.mxu0
        %v2125 = vadd.f32 0.0, %v2124
        %2126 = vmatmul.f32.gmra.mxu0 %v2051
        %v2127 = vpop.f32.mrf.mxu0
        %v2128 = vadd.f32 0.0, %v2127
        %2129 = vmatmul.f32.gmra.mxu0 %v2052
        %v2130 = vpop.f32.mrf.mxu0
        %v2131 = vadd.f32 0.0, %v2130
        %2132 = vmatmul.f32.gmra.mxu0 %v2053
        %v2133 = vpop.f32.mrf.mxu0
        %v2134 = vadd.f32 0.0, %v2133
        %2135 = vmatmul.f32.gmra.mxu0 %v2054
        %v2136 = vpop.f32.mrf.mxu0
        %v2137 = vadd.f32 0.0, %v2136
        %2138 = vmatmul.f32.gmra.mxu0 %v2055
        %v2139 = vpop.f32.mrf.mxu0
        %v2140 = vadd.f32 0.0, %v2139
        %2141 = vmatmul.f32.gmra.mxu0 %v2056
        %v2142 = vpop.f32.mrf.mxu0
        %v2143 = vadd.f32 0.0, %v2142
        %2144 = vmatmul.f32.gmra.mxu0 %v2057
        %v2145 = vpop.f32.mrf.mxu0
        %v2146 = vadd.f32 0.0, %v2145
        %2147 = vmatmul.f32.gmra.mxu0 %v2058
        %v2148 = vpop.f32.mrf.mxu0
        %v2149 = vadd.f32 0.0, %v2148
        %2150 = vmatmul.f32.gmra.mxu0 %v2059
        %v2151 = vpop.f32.mrf.mxu0
        %v2152 = vadd.f32 0.0, %v2151
        %2153 = vmatmul.f32.gmra.mxu0 %v2060
        %v2154 = vpop.f32.mrf.mxu0
        %v2155 = vadd.f32 0.0, %v2154
        %2156 = vmatmul.f32.gmra.mxu0 %v2061
        %v2157 = vpop.f32.mrf.mxu0
        %v2158 = vadd.f32 0.0, %v2157
        %2159 = vmatmul.f32.gmra.mxu0 %v2062
        %v2160 = vpop.f32.mrf.mxu0
        %v2161 = vadd.f32 0.0, %v2160
        %2162 = vmatmul.f32.gmra.mxu0 %v2063
        %v2163 = vpop.f32.mrf.mxu0
        %v2164 = vadd.f32 0.0, %v2163
        %2165 = vmatmul.f32.gmra.mxu0 %v2064
        %v2166 = vpop.f32.mrf.mxu0
        %v2167 = vadd.f32 0.0, %v2166
        %2168 = vmatmul.f32.gmra.mxu0 %v2065
        %v2169 = vpop.f32.mrf.mxu0
        %v2170 = vadd.f32 0.0, %v2169
        %2171 = vmatmul.f32.gmra.mxu0 %v2066
        %v2172 = vpop.f32.mrf.mxu0
        %v2173 = vadd.f32 0.0, %v2172
        %2174 = vmatmul.f32.gmra.mxu0 %v2067
        %v2175 = vpop.f32.mrf.mxu0
        %v2176 = vadd.f32 0.0, %v2175
        %2177 = vmatmul.f32.gmra.mxu0 %v2068
        %v2178 = vpop.f32.mrf.mxu0
        %v2179 = vadd.f32 0.0, %v2178
        %2180 = vmatmul.f32.gmra.mxu0 %v2069
        %v2181 = vpop.f32.mrf.mxu0
        %v2182 = vadd.f32 0.0, %v2181
        %2183 = vmatmul.f32.gmra.mxu0 %v2070
        %v2184 = vpop.f32.mrf.mxu0
        %v2185 = vadd.f32 0.0, %v2184
        %2186 = vmatmul.f32.gmra.mxu0 %v2071
        %v2187 = vpop.f32.mrf.mxu0
        %v2188 = vadd.f32 0.0, %v2187
        %2189 = vmatmul.f32.gmra.mxu0 %v2072
        %v2190 = vpop.f32.mrf.mxu0
        %v2191 = vadd.f32 0.0, %v2190
        %2192 = vmatmul.f32.gmra.mxu0 %v2073
        %v2193 = vpop.f32.mrf.mxu0
        %v2194 = vadd.f32 0.0, %v2193
        %2195 = vmatmul.f32.gmra.mxu0 %v2074
        %v2196 = vpop.f32.mrf.mxu0
        %v2197 = vadd.f32 0.0, %v2196
        %2198 = vmatmul.f32.gmra.mxu0 %v2075
        %v2199 = vpop.f32.mrf.mxu0
        %v2200 = vadd.f32 0.0, %v2199
        %2201 = vmatmul.f32.gmra.mxu0 %v2076
        %v2202 = vpop.f32.mrf.mxu0
        %v2203 = vadd.f32 0.0, %v2202
        %2204 = vmatmul.f32.gmra.mxu0 %v2077
        %v2205 = vpop.f32.mrf.mxu0
        %v2206 = vadd.f32 0.0, %v2205
        %2207 = vdwg.mxu0
        %v2208 = vadd.f32 %v2014, %v2113
        %v2209 = vadd.f32 %v2015, %v2116
        %v2210 = vadd.f32 %v2016, %v2119
        %v2211 = vadd.f32 %v2017, %v2122
        %v2212 = vadd.f32 %v2018, %v2125
        %v2213 = vadd.f32 %v2019, %v2128
        %v2214 = vadd.f32 %v2020, %v2131
        %v2215 = vadd.f32 %v2021, %v2134
        %v2216 = vadd.f32 %v2022, %v2137
        %v2217 = vadd.f32 %v2023, %v2140
        %v2218 = vadd.f32 %v2024, %v2143
        %v2219 = vadd.f32 %v2025, %v2146
        %v2220 = vadd.f32 %v2026, %v2149
        %v2221 = vadd.f32 %v2027, %v2152
        %v2222 = vadd.f32 %v2028, %v2155
        %v2223 = vadd.f32 %v2029, %v2158
        %v2224 = vadd.f32 %v2030, %v2161
        %v2225 = vadd.f32 %v2031, %v2164
        %v2226 = vadd.f32 %v2032, %v2167
        %v2227 = vadd.f32 %v2033, %v2170
        %v2228 = vadd.f32 %v2034, %v2173
        %v2229 = vadd.f32 %v2035, %v2176
        %v2230 = vadd.f32 %v2036, %v2179
        %v2231 = vadd.f32 %v2037, %v2182
        %v2232 = vadd.f32 %v2038, %v2185
        %v2233 = vadd.f32 %v2039, %v2188
        %v2234 = vadd.f32 %v2040, %v2191
        %v2235 = vadd.f32 %v2041, %v2194
        %v2236 = vadd.f32 %v2042, %v2197
        %v2237 = vadd.f32 %v2043, %v2200
        %v2238 = vadd.f32 %v2044, %v2203
        %v2239 = vadd.f32 %v2045, %v2206
        %v2240 = vld [vmem:[%s1302] sm:$0xff]
        %v2241 = vld [vmem:[%s1302 + $0x8] sm:$0xff]
        %v2242 = vld [vmem:[%s1302 + $0x10] sm:$0xff]
        %v2243 = vld [vmem:[%s1302 + $0x18] sm:$0xff]
        %v2244 = vld [vmem:[%s1302 + $0x20] sm:$0xff]
        %v2245 = vld [vmem:[%s1302 + $0x28] sm:$0xff]
        %v2246 = vld [vmem:[%s1302 + $0x30] sm:$0xff]
        %v2247 = vld [vmem:[%s1302 + $0x38] sm:$0xff]
        %v2248 = vld [vmem:[%s1302 + $0x40] sm:$0xff]
        %v2249 = vld [vmem:[%s1302 + $0x48] sm:$0xff]
        %v2250 = vld [vmem:[%s1302 + $0x50] sm:$0xff]
        %v2251 = vld [vmem:[%s1302 + $0x58] sm:$0xff]
        %v2252 = vld [vmem:[%s1302 + $0x60] sm:$0xff]
        %v2253 = vld [vmem:[%s1302 + $0x68] sm:$0xff]
        %v2254 = vld [vmem:[%s1302 + $0x70] sm:$0xff]
        %v2255 = vld [vmem:[%s1302 + $0x78] sm:$0xff]
        %v2256 = vld [vmem:[%s1302 + $0x80] sm:$0xff]
        %v2257 = vld [vmem:[%s1302 + $0x88] sm:$0xff]
        %v2258 = vld [vmem:[%s1302 + $0x90] sm:$0xff]
        %v2259 = vld [vmem:[%s1302 + $0x98] sm:$0xff]
        %v2260 = vld [vmem:[%s1302 + $0xa0] sm:$0xff]
        %v2261 = vld [vmem:[%s1302 + $0xa8] sm:$0xff]
        %v2262 = vld [vmem:[%s1302 + $0xb0] sm:$0xff]
        %v2263 = vld [vmem:[%s1302 + $0xb8] sm:$0xff]
        %v2264 = vld [vmem:[%s1302 + $0xc0] sm:$0xff]
        %v2265 = vld [vmem:[%s1302 + $0xc8] sm:$0xff]
        %v2266 = vld [vmem:[%s1302 + $0xd0] sm:$0xff]
        %v2267 = vld [vmem:[%s1302 + $0xd8] sm:$0xff]
        %v2268 = vld [vmem:[%s1302 + $0xe0] sm:$0xff]
        %v2269 = vld [vmem:[%s1302 + $0xe8] sm:$0xff]
        %v2270 = vld [vmem:[%s1302 + $0xf0] sm:$0xff]
        %v2271 = vld [vmem:[%s1302 + $0xf8] sm:$0xff]
        %s2272 = scalar_lea.vmem [#allocation10], 640
        %v2273 = vld [vmem:[%s2272] sm:$0xff]
        %v2274 = vld [vmem:[%s2272 + $0x8] sm:$0xff]
        %v2275 = vld [vmem:[%s2272 + $0x10] sm:$0xff]
        %v2276 = vld [vmem:[%s2272 + $0x18] sm:$0xff]
        %v2277 = vld [vmem:[%s2272 + $0x20] sm:$0xff]
        %v2278 = vld [vmem:[%s2272 + $0x28] sm:$0xff]
        %v2279 = vld [vmem:[%s2272 + $0x30] sm:$0xff]
        %v2280 = vld [vmem:[%s2272 + $0x38] sm:$0xff]
        %v2281 = vld [vmem:[%s2272 + $0x40] sm:$0xff]
        %v2282 = vld [vmem:[%s2272 + $0x48] sm:$0xff]
        %v2283 = vld [vmem:[%s2272 + $0x50] sm:$0xff]
        %v2284 = vld [vmem:[%s2272 + $0x58] sm:$0xff]
        %v2285 = vld [vmem:[%s2272 + $0x60] sm:$0xff]
        %v2286 = vld [vmem:[%s2272 + $0x68] sm:$0xff]
        %v2287 = vld [vmem:[%s2272 + $0x70] sm:$0xff]
        %v2288 = vld [vmem:[%s2272 + $0x78] sm:$0xff]
        %2289 = vmatpush.msra.mxu0 %v2288
        %2290 = vmatpush.msra.mxu0 %v2287
        %2291 = vmatpush.msra.mxu0 %v2286
        %2292 = vmatpush.msra.mxu0 %v2285
        %2293 = vmatpush.msra.mxu0 %v2284
        %2294 = vmatpush.msra.mxu0 %v2283
        %2295 = vmatpush.msra.mxu0 %v2282
        %2296 = vmatpush.msra.mxu0 %v2281
        %2297 = vmatpush.msra.mxu0 %v2280
        %2298 = vmatpush.msra.mxu0 %v2279
        %2299 = vmatpush.msra.mxu0 %v2278
        %2300 = vmatpush.msra.mxu0 %v2277
        %2301 = vmatpush.msra.mxu0 %v2276
        %2302 = vmatpush.msra.mxu0 %v2275
        %2303 = vmatpush.msra.mxu0 %v2274
        %2304 = vmatpush.msra.mxu0 %v2273
        %2305 = vmatmul.f32.gmra.mxu0 %v2240
        %v2306 = vpop.f32.mrf.mxu0
        %v2307 = vadd.f32 0.0, %v2306
        %2308 = vmatmul.f32.gmra.mxu0 %v2241
        %v2309 = vpop.f32.mrf.mxu0
        %v2310 = vadd.f32 0.0, %v2309
        %2311 = vmatmul.f32.gmra.mxu0 %v2242
        %v2312 = vpop.f32.mrf.mxu0
        %v2313 = vadd.f32 0.0, %v2312
        %2314 = vmatmul.f32.gmra.mxu0 %v2243
        %v2315 = vpop.f32.mrf.mxu0
        %v2316 = vadd.f32 0.0, %v2315
        %2317 = vmatmul.f32.gmra.mxu0 %v2244
        %v2318 = vpop.f32.mrf.mxu0
        %v2319 = vadd.f32 0.0, %v2318
        %2320 = vmatmul.f32.gmra.mxu0 %v2245
        %v2321 = vpop.f32.mrf.mxu0
        %v2322 = vadd.f32 0.0, %v2321
        %2323 = vmatmul.f32.gmra.mxu0 %v2246
        %v2324 = vpop.f32.mrf.mxu0
        %v2325 = vadd.f32 0.0, %v2324
        %2326 = vmatmul.f32.gmra.mxu0 %v2247
        %v2327 = vpop.f32.mrf.mxu0
        %v2328 = vadd.f32 0.0, %v2327
        %2329 = vmatmul.f32.gmra.mxu0 %v2248
        %v2330 = vpop.f32.mrf.mxu0
        %v2331 = vadd.f32 0.0, %v2330
        %2332 = vmatmul.f32.gmra.mxu0 %v2249
        %v2333 = vpop.f32.mrf.mxu0
        %v2334 = vadd.f32 0.0, %v2333
        %2335 = vmatmul.f32.gmra.mxu0 %v2250
        %v2336 = vpop.f32.mrf.mxu0
        %v2337 = vadd.f32 0.0, %v2336
        %2338 = vmatmul.f32.gmra.mxu0 %v2251
        %v2339 = vpop.f32.mrf.mxu0
        %v2340 = vadd.f32 0.0, %v2339
        %2341 = vmatmul.f32.gmra.mxu0 %v2252
        %v2342 = vpop.f32.mrf.mxu0
        %v2343 = vadd.f32 0.0, %v2342
        %2344 = vmatmul.f32.gmra.mxu0 %v2253
        %v2345 = vpop.f32.mrf.mxu0
        %v2346 = vadd.f32 0.0, %v2345
        %2347 = vmatmul.f32.gmra.mxu0 %v2254
        %v2348 = vpop.f32.mrf.mxu0
        %v2349 = vadd.f32 0.0, %v2348
        %2350 = vmatmul.f32.gmra.mxu0 %v2255
        %v2351 = vpop.f32.mrf.mxu0
        %v2352 = vadd.f32 0.0, %v2351
        %2353 = vmatmul.f32.gmra.mxu0 %v2256
        %v2354 = vpop.f32.mrf.mxu0
        %v2355 = vadd.f32 0.0, %v2354
        %2356 = vmatmul.f32.gmra.mxu0 %v2257
        %v2357 = vpop.f32.mrf.mxu0
        %v2358 = vadd.f32 0.0, %v2357
        %2359 = vmatmul.f32.gmra.mxu0 %v2258
        %v2360 = vpop.f32.mrf.mxu0
        %v2361 = vadd.f32 0.0, %v2360
        %2362 = vmatmul.f32.gmra.mxu0 %v2259
        %v2363 = vpop.f32.mrf.mxu0
        %v2364 = vadd.f32 0.0, %v2363
        %2365 = vmatmul.f32.gmra.mxu0 %v2260
        %v2366 = vpop.f32.mrf.mxu0
        %v2367 = vadd.f32 0.0, %v2366
        %2368 = vmatmul.f32.gmra.mxu0 %v2261
        %v2369 = vpop.f32.mrf.mxu0
        %v2370 = vadd.f32 0.0, %v2369
        %2371 = vmatmul.f32.gmra.mxu0 %v2262
        %v2372 = vpop.f32.mrf.mxu0
        %v2373 = vadd.f32 0.0, %v2372
        %2374 = vmatmul.f32.gmra.mxu0 %v2263
        %v2375 = vpop.f32.mrf.mxu0
        %v2376 = vadd.f32 0.0, %v2375
        %2377 = vmatmul.f32.gmra.mxu0 %v2264
        %v2378 = vpop.f32.mrf.mxu0
        %v2379 = vadd.f32 0.0, %v2378
        %2380 = vmatmul.f32.gmra.mxu0 %v2265
        %v2381 = vpop.f32.mrf.mxu0
        %v2382 = vadd.f32 0.0, %v2381
        %2383 = vmatmul.f32.gmra.mxu0 %v2266
        %v2384 = vpop.f32.mrf.mxu0
        %v2385 = vadd.f32 0.0, %v2384
        %2386 = vmatmul.f32.gmra.mxu0 %v2267
        %v2387 = vpop.f32.mrf.mxu0
        %v2388 = vadd.f32 0.0, %v2387
        %2389 = vmatmul.f32.gmra.mxu0 %v2268
        %v2390 = vpop.f32.mrf.mxu0
        %v2391 = vadd.f32 0.0, %v2390
        %2392 = vmatmul.f32.gmra.mxu0 %v2269
        %v2393 = vpop.f32.mrf.mxu0
        %v2394 = vadd.f32 0.0, %v2393
        %2395 = vmatmul.f32.gmra.mxu0 %v2270
        %v2396 = vpop.f32.mrf.mxu0
        %v2397 = vadd.f32 0.0, %v2396
        %2398 = vmatmul.f32.gmra.mxu0 %v2271
        %v2399 = vpop.f32.mrf.mxu0
        %v2400 = vadd.f32 0.0, %v2399
        %2401 = vdwg.mxu0
        %v2402 = vadd.f32 %v2208, %v2307
        %v2403 = vadd.f32 %v2209, %v2310
        %v2404 = vadd.f32 %v2210, %v2313
        %v2405 = vadd.f32 %v2211, %v2316
        %v2406 = vadd.f32 %v2212, %v2319
        %v2407 = vadd.f32 %v2213, %v2322
        %v2408 = vadd.f32 %v2214, %v2325
        %v2409 = vadd.f32 %v2215, %v2328
        %v2410 = vadd.f32 %v2216, %v2331
        %v2411 = vadd.f32 %v2217, %v2334
        %v2412 = vadd.f32 %v2218, %v2337
        %v2413 = vadd.f32 %v2219, %v2340
        %v2414 = vadd.f32 %v2220, %v2343
        %v2415 = vadd.f32 %v2221, %v2346
        %v2416 = vadd.f32 %v2222, %v2349
        %v2417 = vadd.f32 %v2223, %v2352
        %v2418 = vadd.f32 %v2224, %v2355
        %v2419 = vadd.f32 %v2225, %v2358
        %v2420 = vadd.f32 %v2226, %v2361
        %v2421 = vadd.f32 %v2227, %v2364
        %v2422 = vadd.f32 %v2228, %v2367
        %v2423 = vadd.f32 %v2229, %v2370
        %v2424 = vadd.f32 %v2230, %v2373
        %v2425 = vadd.f32 %v2231, %v2376
        %v2426 = vadd.f32 %v2232, %v2379
        %v2427 = vadd.f32 %v2233, %v2382
        %v2428 = vadd.f32 %v2234, %v2385
        %v2429 = vadd.f32 %v2235, %v2388
        %v2430 = vadd.f32 %v2236, %v2391
        %v2431 = vadd.f32 %v2237, %v2394
        %v2432 = vadd.f32 %v2238, %v2397
        %v2433 = vadd.f32 %v2239, %v2400
        %s2434 = scalar_lea.vmem [#allocation2], 32
        %v2435 = vld [vmem:[%s2434] sm:$0xff]
        %v2436 = vld [vmem:[%s2434 + $0x8] sm:$0xff]
        %v2437 = vld [vmem:[%s2434 + $0x10] sm:$0xff]
        %v2438 = vld [vmem:[%s2434 + $0x18] sm:$0xff]
        %v2439 = vld [vmem:[%s2434 + $0x20] sm:$0xff]
        %v2440 = vld [vmem:[%s2434 + $0x28] sm:$0xff]
        %v2441 = vld [vmem:[%s2434 + $0x30] sm:$0xff]
        %v2442 = vld [vmem:[%s2434 + $0x38] sm:$0xff]
        %v2443 = vld [vmem:[%s2434 + $0x40] sm:$0xff]
        %v2444 = vld [vmem:[%s2434 + $0x48] sm:$0xff]
        %v2445 = vld [vmem:[%s2434 + $0x50] sm:$0xff]
        %v2446 = vld [vmem:[%s2434 + $0x58] sm:$0xff]
        %v2447 = vld [vmem:[%s2434 + $0x60] sm:$0xff]
        %v2448 = vld [vmem:[%s2434 + $0x68] sm:$0xff]
        %v2449 = vld [vmem:[%s2434 + $0x70] sm:$0xff]
        %v2450 = vld [vmem:[%s2434 + $0x78] sm:$0xff]
        %v2451 = vld [vmem:[%s2434 + $0x80] sm:$0xff]
        %v2452 = vld [vmem:[%s2434 + $0x88] sm:$0xff]
        %v2453 = vld [vmem:[%s2434 + $0x90] sm:$0xff]
        %v2454 = vld [vmem:[%s2434 + $0x98] sm:$0xff]
        %v2455 = vld [vmem:[%s2434 + $0xa0] sm:$0xff]
        %v2456 = vld [vmem:[%s2434 + $0xa8] sm:$0xff]
        %v2457 = vld [vmem:[%s2434 + $0xb0] sm:$0xff]
        %v2458 = vld [vmem:[%s2434 + $0xb8] sm:$0xff]
        %v2459 = vld [vmem:[%s2434 + $0xc0] sm:$0xff]
        %v2460 = vld [vmem:[%s2434 + $0xc8] sm:$0xff]
        %v2461 = vld [vmem:[%s2434 + $0xd0] sm:$0xff]
        %v2462 = vld [vmem:[%s2434 + $0xd8] sm:$0xff]
        %v2463 = vld [vmem:[%s2434 + $0xe0] sm:$0xff]
        %v2464 = vld [vmem:[%s2434 + $0xe8] sm:$0xff]
        %v2465 = vld [vmem:[%s2434 + $0xf0] sm:$0xff]
        %v2466 = vld [vmem:[%s2434 + $0xf8] sm:$0xff]
        %s2467 = scalar_lea.vmem [#allocation10], 768
        %v2468 = vld [vmem:[%s2467] sm:$0xff]
        %v2469 = vld [vmem:[%s2467 + $0x8] sm:$0xff]
        %v2470 = vld [vmem:[%s2467 + $0x10] sm:$0xff]
        %v2471 = vld [vmem:[%s2467 + $0x18] sm:$0xff]
        %v2472 = vld [vmem:[%s2467 + $0x20] sm:$0xff]
        %v2473 = vld [vmem:[%s2467 + $0x28] sm:$0xff]
        %v2474 = vld [vmem:[%s2467 + $0x30] sm:$0xff]
        %v2475 = vld [vmem:[%s2467 + $0x38] sm:$0xff]
        %v2476 = vld [vmem:[%s2467 + $0x40] sm:$0xff]
        %v2477 = vld [vmem:[%s2467 + $0x48] sm:$0xff]
        %v2478 = vld [vmem:[%s2467 + $0x50] sm:$0xff]
        %v2479 = vld [vmem:[%s2467 + $0x58] sm:$0xff]
        %v2480 = vld [vmem:[%s2467 + $0x60] sm:$0xff]
        %v2481 = vld [vmem:[%s2467 + $0x68] sm:$0xff]
        %v2482 = vld [vmem:[%s2467 + $0x70] sm:$0xff]
        %v2483 = vld [vmem:[%s2467 + $0x78] sm:$0xff]
        %2484 = vmatpush.msra.mxu0 %v2483
        %2485 = vmatpush.msra.mxu0 %v2482
        %2486 = vmatpush.msra.mxu0 %v2481
        %2487 = vmatpush.msra.mxu0 %v2480
        %2488 = vmatpush.msra.mxu0 %v2479
        %2489 = vmatpush.msra.mxu0 %v2478
        %2490 = vmatpush.msra.mxu0 %v2477
        %2491 = vmatpush.msra.mxu0 %v2476
        %2492 = vmatpush.msra.mxu0 %v2475
        %2493 = vmatpush.msra.mxu0 %v2474
        %2494 = vmatpush.msra.mxu0 %v2473
        %2495 = vmatpush.msra.mxu0 %v2472
        %2496 = vmatpush.msra.mxu0 %v2471
        %2497 = vmatpush.msra.mxu0 %v2470
        %2498 = vmatpush.msra.mxu0 %v2469
        %2499 = vmatpush.msra.mxu0 %v2468
        %2500 = vmatmul.f32.gmra.mxu0 %v2435
        %v2501 = vpop.f32.mrf.mxu0
        %v2502 = vadd.f32 0.0, %v2501
        %2503 = vmatmul.f32.gmra.mxu0 %v2436
        %v2504 = vpop.f32.mrf.mxu0
        %v2505 = vadd.f32 0.0, %v2504
        %2506 = vmatmul.f32.gmra.mxu0 %v2437
        %v2507 = vpop.f32.mrf.mxu0
        %v2508 = vadd.f32 0.0, %v2507
        %2509 = vmatmul.f32.gmra.mxu0 %v2438
        %v2510 = vpop.f32.mrf.mxu0
        %v2511 = vadd.f32 0.0, %v2510
        %2512 = vmatmul.f32.gmra.mxu0 %v2439
        %v2513 = vpop.f32.mrf.mxu0
        %v2514 = vadd.f32 0.0, %v2513
        %2515 = vmatmul.f32.gmra.mxu0 %v2440
        %v2516 = vpop.f32.mrf.mxu0
        %v2517 = vadd.f32 0.0, %v2516
        %2518 = vmatmul.f32.gmra.mxu0 %v2441
        %v2519 = vpop.f32.mrf.mxu0
        %v2520 = vadd.f32 0.0, %v2519
        %2521 = vmatmul.f32.gmra.mxu0 %v2442
        %v2522 = vpop.f32.mrf.mxu0
        %v2523 = vadd.f32 0.0, %v2522
        %2524 = vmatmul.f32.gmra.mxu0 %v2443
        %v2525 = vpop.f32.mrf.mxu0
        %v2526 = vadd.f32 0.0, %v2525
        %2527 = vmatmul.f32.gmra.mxu0 %v2444
        %v2528 = vpop.f32.mrf.mxu0
        %v2529 = vadd.f32 0.0, %v2528
        %2530 = vmatmul.f32.gmra.mxu0 %v2445
        %v2531 = vpop.f32.mrf.mxu0
        %v2532 = vadd.f32 0.0, %v2531
        %2533 = vmatmul.f32.gmra.mxu0 %v2446
        %v2534 = vpop.f32.mrf.mxu0
        %v2535 = vadd.f32 0.0, %v2534
        %2536 = vmatmul.f32.gmra.mxu0 %v2447
        %v2537 = vpop.f32.mrf.mxu0
        %v2538 = vadd.f32 0.0, %v2537
        %2539 = vmatmul.f32.gmra.mxu0 %v2448
        %v2540 = vpop.f32.mrf.mxu0
        %v2541 = vadd.f32 0.0, %v2540
        %2542 = vmatmul.f32.gmra.mxu0 %v2449
        %v2543 = vpop.f32.mrf.mxu0
        %v2544 = vadd.f32 0.0, %v2543
        %2545 = vmatmul.f32.gmra.mxu0 %v2450
        %v2546 = vpop.f32.mrf.mxu0
        %v2547 = vadd.f32 0.0, %v2546
        %2548 = vmatmul.f32.gmra.mxu0 %v2451
        %v2549 = vpop.f32.mrf.mxu0
        %v2550 = vadd.f32 0.0, %v2549
        %2551 = vmatmul.f32.gmra.mxu0 %v2452
        %v2552 = vpop.f32.mrf.mxu0
        %v2553 = vadd.f32 0.0, %v2552
        %2554 = vmatmul.f32.gmra.mxu0 %v2453
        %v2555 = vpop.f32.mrf.mxu0
        %v2556 = vadd.f32 0.0, %v2555
        %2557 = vmatmul.f32.gmra.mxu0 %v2454
        %v2558 = vpop.f32.mrf.mxu0
        %v2559 = vadd.f32 0.0, %v2558
        %2560 = vmatmul.f32.gmra.mxu0 %v2455
        %v2561 = vpop.f32.mrf.mxu0
        %v2562 = vadd.f32 0.0, %v2561
        %2563 = vmatmul.f32.gmra.mxu0 %v2456
        %v2564 = vpop.f32.mrf.mxu0
        %v2565 = vadd.f32 0.0, %v2564
        %2566 = vmatmul.f32.gmra.mxu0 %v2457
        %v2567 = vpop.f32.mrf.mxu0
        %v2568 = vadd.f32 0.0, %v2567
        %2569 = vmatmul.f32.gmra.mxu0 %v2458
        %v2570 = vpop.f32.mrf.mxu0
        %v2571 = vadd.f32 0.0, %v2570
        %2572 = vmatmul.f32.gmra.mxu0 %v2459
        %v2573 = vpop.f32.mrf.mxu0
        %v2574 = vadd.f32 0.0, %v2573
        %2575 = vmatmul.f32.gmra.mxu0 %v2460
        %v2576 = vpop.f32.mrf.mxu0
        %v2577 = vadd.f32 0.0, %v2576
        %2578 = vmatmul.f32.gmra.mxu0 %v2461
        %v2579 = vpop.f32.mrf.mxu0
        %v2580 = vadd.f32 0.0, %v2579
        %2581 = vmatmul.f32.gmra.mxu0 %v2462
        %v2582 = vpop.f32.mrf.mxu0
        %v2583 = vadd.f32 0.0, %v2582
        %2584 = vmatmul.f32.gmra.mxu0 %v2463
        %v2585 = vpop.f32.mrf.mxu0
        %v2586 = vadd.f32 0.0, %v2585
        %2587 = vmatmul.f32.gmra.mxu0 %v2464
        %v2588 = vpop.f32.mrf.mxu0
        %v2589 = vadd.f32 0.0, %v2588
        %2590 = vmatmul.f32.gmra.mxu0 %v2465
        %v2591 = vpop.f32.mrf.mxu0
        %v2592 = vadd.f32 0.0, %v2591
        %2593 = vmatmul.f32.gmra.mxu0 %v2466
        %v2594 = vpop.f32.mrf.mxu0
        %v2595 = vadd.f32 0.0, %v2594
        %2596 = vdwg.mxu0
        %v2597 = vadd.f32 %v2402, %v2502
        %v2598 = vadd.f32 %v2403, %v2505
        %v2599 = vadd.f32 %v2404, %v2508
        %v2600 = vadd.f32 %v2405, %v2511
        %v2601 = vadd.f32 %v2406, %v2514
        %v2602 = vadd.f32 %v2407, %v2517
        %v2603 = vadd.f32 %v2408, %v2520
        %v2604 = vadd.f32 %v2409, %v2523
        %v2605 = vadd.f32 %v2410, %v2526
        %v2606 = vadd.f32 %v2411, %v2529
        %v2607 = vadd.f32 %v2412, %v2532
        %v2608 = vadd.f32 %v2413, %v2535
        %v2609 = vadd.f32 %v2414, %v2538
        %v2610 = vadd.f32 %v2415, %v2541
        %v2611 = vadd.f32 %v2416, %v2544
        %v2612 = vadd.f32 %v2417, %v2547
        %v2613 = vadd.f32 %v2418, %v2550
        %v2614 = vadd.f32 %v2419, %v2553
        %v2615 = vadd.f32 %v2420, %v2556
        %v2616 = vadd.f32 %v2421, %v2559
        %v2617 = vadd.f32 %v2422, %v2562
        %v2618 = vadd.f32 %v2423, %v2565
        %v2619 = vadd.f32 %v2424, %v2568
        %v2620 = vadd.f32 %v2425, %v2571
        %v2621 = vadd.f32 %v2426, %v2574
        %v2622 = vadd.f32 %v2427, %v2577
        %v2623 = vadd.f32 %v2428, %v2580
        %v2624 = vadd.f32 %v2429, %v2583
        %v2625 = vadd.f32 %v2430, %v2586
        %v2626 = vadd.f32 %v2431, %v2589
        %v2627 = vadd.f32 %v2432, %v2592
        %v2628 = vadd.f32 %v2433, %v2595
        %s2629 = scalar_lea.vmem [#allocation3], 32
        %v2630 = vld [vmem:[%s2629] sm:$0xff]
        %v2631 = vld [vmem:[%s2629 + $0x8] sm:$0xff]
        %v2632 = vld [vmem:[%s2629 + $0x10] sm:$0xff]
        %v2633 = vld [vmem:[%s2629 + $0x18] sm:$0xff]
        %v2634 = vld [vmem:[%s2629 + $0x20] sm:$0xff]
        %v2635 = vld [vmem:[%s2629 + $0x28] sm:$0xff]
        %v2636 = vld [vmem:[%s2629 + $0x30] sm:$0xff]
        %v2637 = vld [vmem:[%s2629 + $0x38] sm:$0xff]
        %v2638 = vld [vmem:[%s2629 + $0x40] sm:$0xff]
        %v2639 = vld [vmem:[%s2629 + $0x48] sm:$0xff]
        %v2640 = vld [vmem:[%s2629 + $0x50] sm:$0xff]
        %v2641 = vld [vmem:[%s2629 + $0x58] sm:$0xff]
        %v2642 = vld [vmem:[%s2629 + $0x60] sm:$0xff]
        %v2643 = vld [vmem:[%s2629 + $0x68] sm:$0xff]
        %v2644 = vld [vmem:[%s2629 + $0x70] sm:$0xff]
        %v2645 = vld [vmem:[%s2629 + $0x78] sm:$0xff]
        %v2646 = vld [vmem:[%s2629 + $0x80] sm:$0xff]
        %v2647 = vld [vmem:[%s2629 + $0x88] sm:$0xff]
        %v2648 = vld [vmem:[%s2629 + $0x90] sm:$0xff]
        %v2649 = vld [vmem:[%s2629 + $0x98] sm:$0xff]
        %v2650 = vld [vmem:[%s2629 + $0xa0] sm:$0xff]
        %v2651 = vld [vmem:[%s2629 + $0xa8] sm:$0xff]
        %v2652 = vld [vmem:[%s2629 + $0xb0] sm:$0xff]
        %v2653 = vld [vmem:[%s2629 + $0xb8] sm:$0xff]
        %v2654 = vld [vmem:[%s2629 + $0xc0] sm:$0xff]
        %v2655 = vld [vmem:[%s2629 + $0xc8] sm:$0xff]
        %v2656 = vld [vmem:[%s2629 + $0xd0] sm:$0xff]
        %v2657 = vld [vmem:[%s2629 + $0xd8] sm:$0xff]
        %v2658 = vld [vmem:[%s2629 + $0xe0] sm:$0xff]
        %v2659 = vld [vmem:[%s2629 + $0xe8] sm:$0xff]
        %v2660 = vld [vmem:[%s2629 + $0xf0] sm:$0xff]
        %v2661 = vld [vmem:[%s2629 + $0xf8] sm:$0xff]
        %s2662 = scalar_lea.vmem [#allocation10], 896
        %v2663 = vld [vmem:[%s2662] sm:$0xff]
        %v2664 = vld [vmem:[%s2662 + $0x8] sm:$0xff]
        %v2665 = vld [vmem:[%s2662 + $0x10] sm:$0xff]
        %v2666 = vld [vmem:[%s2662 + $0x18] sm:$0xff]
        %v2667 = vld [vmem:[%s2662 + $0x20] sm:$0xff]
        %v2668 = vld [vmem:[%s2662 + $0x28] sm:$0xff]
        %v2669 = vld [vmem:[%s2662 + $0x30] sm:$0xff]
        %v2670 = vld [vmem:[%s2662 + $0x38] sm:$0xff]
        %v2671 = vld [vmem:[%s2662 + $0x40] sm:$0xff]
        %v2672 = vld [vmem:[%s2662 + $0x48] sm:$0xff]
        %v2673 = vld [vmem:[%s2662 + $0x50] sm:$0xff]
        %v2674 = vld [vmem:[%s2662 + $0x58] sm:$0xff]
        %v2675 = vld [vmem:[%s2662 + $0x60] sm:$0xff]
        %v2676 = vld [vmem:[%s2662 + $0x68] sm:$0xff]
        %v2677 = vld [vmem:[%s2662 + $0x70] sm:$0xff]
        %v2678 = vld [vmem:[%s2662 + $0x78] sm:$0xff]
        %2679 = vmatpush.msra.mxu0 %v2678
        %2680 = vmatpush.msra.mxu0 %v2677
        %2681 = vmatpush.msra.mxu0 %v2676
        %2682 = vmatpush.msra.mxu0 %v2675
        %2683 = vmatpush.msra.mxu0 %v2674
        %2684 = vmatpush.msra.mxu0 %v2673
        %2685 = vmatpush.msra.mxu0 %v2672
        %2686 = vmatpush.msra.mxu0 %v2671
        %2687 = vmatpush.msra.mxu0 %v2670
        %2688 = vmatpush.msra.mxu0 %v2669
        %2689 = vmatpush.msra.mxu0 %v2668
        %2690 = vmatpush.msra.mxu0 %v2667
        %2691 = vmatpush.msra.mxu0 %v2666
        %2692 = vmatpush.msra.mxu0 %v2665
        %2693 = vmatpush.msra.mxu0 %v2664
        %2694 = vmatpush.msra.mxu0 %v2663
        %2695 = vmatmul.f32.gmra.mxu0 %v2630
        %v2696 = vpop.f32.mrf.mxu0
        %v2697 = vadd.f32 0.0, %v2696
        %2698 = vmatmul.f32.gmra.mxu0 %v2631
        %v2699 = vpop.f32.mrf.mxu0
        %v2700 = vadd.f32 0.0, %v2699
        %2701 = vmatmul.f32.gmra.mxu0 %v2632
        %v2702 = vpop.f32.mrf.mxu0
        %v2703 = vadd.f32 0.0, %v2702
        %2704 = vmatmul.f32.gmra.mxu0 %v2633
        %v2705 = vpop.f32.mrf.mxu0
        %v2706 = vadd.f32 0.0, %v2705
        %2707 = vmatmul.f32.gmra.mxu0 %v2634
        %v2708 = vpop.f32.mrf.mxu0
        %v2709 = vadd.f32 0.0, %v2708
        %2710 = vmatmul.f32.gmra.mxu0 %v2635
        %v2711 = vpop.f32.mrf.mxu0
        %v2712 = vadd.f32 0.0, %v2711
        %2713 = vmatmul.f32.gmra.mxu0 %v2636
        %v2714 = vpop.f32.mrf.mxu0
        %v2715 = vadd.f32 0.0, %v2714
        %2716 = vmatmul.f32.gmra.mxu0 %v2637
        %v2717 = vpop.f32.mrf.mxu0
        %v2718 = vadd.f32 0.0, %v2717
        %2719 = vmatmul.f32.gmra.mxu0 %v2638
        %v2720 = vpop.f32.mrf.mxu0
        %v2721 = vadd.f32 0.0, %v2720
        %2722 = vmatmul.f32.gmra.mxu0 %v2639
        %v2723 = vpop.f32.mrf.mxu0
        %v2724 = vadd.f32 0.0, %v2723
        %2725 = vmatmul.f32.gmra.mxu0 %v2640
        %v2726 = vpop.f32.mrf.mxu0
        %v2727 = vadd.f32 0.0, %v2726
        %2728 = vmatmul.f32.gmra.mxu0 %v2641
        %v2729 = vpop.f32.mrf.mxu0
        %v2730 = vadd.f32 0.0, %v2729
        %2731 = vmatmul.f32.gmra.mxu0 %v2642
        %v2732 = vpop.f32.mrf.mxu0
        %v2733 = vadd.f32 0.0, %v2732
        %2734 = vmatmul.f32.gmra.mxu0 %v2643
        %v2735 = vpop.f32.mrf.mxu0
        %v2736 = vadd.f32 0.0, %v2735
        %2737 = vmatmul.f32.gmra.mxu0 %v2644
        %v2738 = vpop.f32.mrf.mxu0
        %v2739 = vadd.f32 0.0, %v2738
        %2740 = vmatmul.f32.gmra.mxu0 %v2645
        %v2741 = vpop.f32.mrf.mxu0
        %v2742 = vadd.f32 0.0, %v2741
        %2743 = vmatmul.f32.gmra.mxu0 %v2646
        %v2744 = vpop.f32.mrf.mxu0
        %v2745 = vadd.f32 0.0, %v2744
        %2746 = vmatmul.f32.gmra.mxu0 %v2647
        %v2747 = vpop.f32.mrf.mxu0
        %v2748 = vadd.f32 0.0, %v2747
        %2749 = vmatmul.f32.gmra.mxu0 %v2648
        %v2750 = vpop.f32.mrf.mxu0
        %v2751 = vadd.f32 0.0, %v2750
        %2752 = vmatmul.f32.gmra.mxu0 %v2649
        %v2753 = vpop.f32.mrf.mxu0
        %v2754 = vadd.f32 0.0, %v2753
        %2755 = vmatmul.f32.gmra.mxu0 %v2650
        %v2756 = vpop.f32.mrf.mxu0
        %v2757 = vadd.f32 0.0, %v2756
        %2758 = vmatmul.f32.gmra.mxu0 %v2651
        %v2759 = vpop.f32.mrf.mxu0
        %v2760 = vadd.f32 0.0, %v2759
        %2761 = vmatmul.f32.gmra.mxu0 %v2652
        %v2762 = vpop.f32.mrf.mxu0
        %v2763 = vadd.f32 0.0, %v2762
        %2764 = vmatmul.f32.gmra.mxu0 %v2653
        %v2765 = vpop.f32.mrf.mxu0
        %v2766 = vadd.f32 0.0, %v2765
        %2767 = vmatmul.f32.gmra.mxu0 %v2654
        %v2768 = vpop.f32.mrf.mxu0
        %v2769 = vadd.f32 0.0, %v2768
        %2770 = vmatmul.f32.gmra.mxu0 %v2655
        %v2771 = vpop.f32.mrf.mxu0
        %v2772 = vadd.f32 0.0, %v2771
        %2773 = vmatmul.f32.gmra.mxu0 %v2656
        %v2774 = vpop.f32.mrf.mxu0
        %v2775 = vadd.f32 0.0, %v2774
        %2776 = vmatmul.f32.gmra.mxu0 %v2657
        %v2777 = vpop.f32.mrf.mxu0
        %v2778 = vadd.f32 0.0, %v2777
        %2779 = vmatmul.f32.gmra.mxu0 %v2658
        %v2780 = vpop.f32.mrf.mxu0
        %v2781 = vadd.f32 0.0, %v2780
        %2782 = vmatmul.f32.gmra.mxu0 %v2659
        %v2783 = vpop.f32.mrf.mxu0
        %v2784 = vadd.f32 0.0, %v2783
        %2785 = vmatmul.f32.gmra.mxu0 %v2660
        %v2786 = vpop.f32.mrf.mxu0
        %v2787 = vadd.f32 0.0, %v2786
        %2788 = vmatmul.f32.gmra.mxu0 %v2661
        %v2789 = vpop.f32.mrf.mxu0
        %v2790 = vadd.f32 0.0, %v2789
        %2791 = vdwg.mxu0
        %v2792 = vadd.f32 %v2597, %v2697
        %v2793 = vadd.f32 %v2598, %v2700
        %v2794 = vadd.f32 %v2599, %v2703
        %v2795 = vadd.f32 %v2600, %v2706
        %v2796 = vadd.f32 %v2601, %v2709
        %v2797 = vadd.f32 %v2602, %v2712
        %v2798 = vadd.f32 %v2603, %v2715
        %v2799 = vadd.f32 %v2604, %v2718
        %v2800 = vadd.f32 %v2605, %v2721
        %v2801 = vadd.f32 %v2606, %v2724
        %v2802 = vadd.f32 %v2607, %v2727
        %v2803 = vadd.f32 %v2608, %v2730
        %v2804 = vadd.f32 %v2609, %v2733
        %v2805 = vadd.f32 %v2610, %v2736
        %v2806 = vadd.f32 %v2611, %v2739
        %v2807 = vadd.f32 %v2612, %v2742
        %v2808 = vadd.f32 %v2613, %v2745
        %v2809 = vadd.f32 %v2614, %v2748
        %v2810 = vadd.f32 %v2615, %v2751
        %v2811 = vadd.f32 %v2616, %v2754
        %v2812 = vadd.f32 %v2617, %v2757
        %v2813 = vadd.f32 %v2618, %v2760
        %v2814 = vadd.f32 %v2619, %v2763
        %v2815 = vadd.f32 %v2620, %v2766
        %v2816 = vadd.f32 %v2621, %v2769
        %v2817 = vadd.f32 %v2622, %v2772
        %v2818 = vadd.f32 %v2623, %v2775
        %v2819 = vadd.f32 %v2624, %v2778
        %v2820 = vadd.f32 %v2625, %v2781
        %v2821 = vadd.f32 %v2626, %v2784
        %v2822 = vadd.f32 %v2627, %v2787
        %v2823 = vadd.f32 %v2628, %v2790
        %s2824 = scalar_lea.vmem [#allocation4], 32
        %v2825 = vld [vmem:[%s2824] sm:$0xff]
        %v2826 = vld [vmem:[%s2824 + $0x8] sm:$0xff]
        %v2827 = vld [vmem:[%s2824 + $0x10] sm:$0xff]
        %v2828 = vld [vmem:[%s2824 + $0x18] sm:$0xff]
        %v2829 = vld [vmem:[%s2824 + $0x20] sm:$0xff]
        %v2830 = vld [vmem:[%s2824 + $0x28] sm:$0xff]
        %v2831 = vld [vmem:[%s2824 + $0x30] sm:$0xff]
        %v2832 = vld [vmem:[%s2824 + $0x38] sm:$0xff]
        %v2833 = vld [vmem:[%s2824 + $0x40] sm:$0xff]
        %v2834 = vld [vmem:[%s2824 + $0x48] sm:$0xff]
        %v2835 = vld [vmem:[%s2824 + $0x50] sm:$0xff]
        %v2836 = vld [vmem:[%s2824 + $0x58] sm:$0xff]
        %v2837 = vld [vmem:[%s2824 + $0x60] sm:$0xff]
        %v2838 = vld [vmem:[%s2824 + $0x68] sm:$0xff]
        %v2839 = vld [vmem:[%s2824 + $0x70] sm:$0xff]
        %v2840 = vld [vmem:[%s2824 + $0x78] sm:$0xff]
        %v2841 = vld [vmem:[%s2824 + $0x80] sm:$0xff]
        %v2842 = vld [vmem:[%s2824 + $0x88] sm:$0xff]
        %v2843 = vld [vmem:[%s2824 + $0x90] sm:$0xff]
        %v2844 = vld [vmem:[%s2824 + $0x98] sm:$0xff]
        %v2845 = vld [vmem:[%s2824 + $0xa0] sm:$0xff]
        %v2846 = vld [vmem:[%s2824 + $0xa8] sm:$0xff]
        %v2847 = vld [vmem:[%s2824 + $0xb0] sm:$0xff]
        %v2848 = vld [vmem:[%s2824 + $0xb8] sm:$0xff]
        %v2849 = vld [vmem:[%s2824 + $0xc0] sm:$0xff]
        %v2850 = vld [vmem:[%s2824 + $0xc8] sm:$0xff]
        %v2851 = vld [vmem:[%s2824 + $0xd0] sm:$0xff]
        %v2852 = vld [vmem:[%s2824 + $0xd8] sm:$0xff]
        %v2853 = vld [vmem:[%s2824 + $0xe0] sm:$0xff]
        %v2854 = vld [vmem:[%s2824 + $0xe8] sm:$0xff]
        %v2855 = vld [vmem:[%s2824 + $0xf0] sm:$0xff]
        %v2856 = vld [vmem:[%s2824 + $0xf8] sm:$0xff]
        %s2857 = scalar_lea.vmem [#allocation10], 1024
        %v2858 = vld [vmem:[%s2857] sm:$0xff]
        %v2859 = vld [vmem:[%s2857 + $0x8] sm:$0xff]
        %v2860 = vld [vmem:[%s2857 + $0x10] sm:$0xff]
        %v2861 = vld [vmem:[%s2857 + $0x18] sm:$0xff]
        %v2862 = vld [vmem:[%s2857 + $0x20] sm:$0xff]
        %v2863 = vld [vmem:[%s2857 + $0x28] sm:$0xff]
        %v2864 = vld [vmem:[%s2857 + $0x30] sm:$0xff]
        %v2865 = vld [vmem:[%s2857 + $0x38] sm:$0xff]
        %v2866 = vld [vmem:[%s2857 + $0x40] sm:$0xff]
        %v2867 = vld [vmem:[%s2857 + $0x48] sm:$0xff]
        %v2868 = vld [vmem:[%s2857 + $0x50] sm:$0xff]
        %v2869 = vld [vmem:[%s2857 + $0x58] sm:$0xff]
        %v2870 = vld [vmem:[%s2857 + $0x60] sm:$0xff]
        %v2871 = vld [vmem:[%s2857 + $0x68] sm:$0xff]
        %v2872 = vld [vmem:[%s2857 + $0x70] sm:$0xff]
        %v2873 = vld [vmem:[%s2857 + $0x78] sm:$0xff]
        %2874 = vmatpush.msra.mxu0 %v2873
        %2875 = vmatpush.msra.mxu0 %v2872
        %2876 = vmatpush.msra.mxu0 %v2871
        %2877 = vmatpush.msra.mxu0 %v2870
        %2878 = vmatpush.msra.mxu0 %v2869
        %2879 = vmatpush.msra.mxu0 %v2868
        %2880 = vmatpush.msra.mxu0 %v2867
        %2881 = vmatpush.msra.mxu0 %v2866
        %2882 = vmatpush.msra.mxu0 %v2865
        %2883 = vmatpush.msra.mxu0 %v2864
        %2884 = vmatpush.msra.mxu0 %v2863
        %2885 = vmatpush.msra.mxu0 %v2862
        %2886 = vmatpush.msra.mxu0 %v2861
        %2887 = vmatpush.msra.mxu0 %v2860
        %2888 = vmatpush.msra.mxu0 %v2859
        %2889 = vmatpush.msra.mxu0 %v2858
        %2890 = vmatmul.f32.gmra.mxu0 %v2825
        %v2891 = vpop.f32.mrf.mxu0
        %v2892 = vadd.f32 0.0, %v2891
        %2893 = vmatmul.f32.gmra.mxu0 %v2826
        %v2894 = vpop.f32.mrf.mxu0
        %v2895 = vadd.f32 0.0, %v2894
        %2896 = vmatmul.f32.gmra.mxu0 %v2827
        %v2897 = vpop.f32.mrf.mxu0
        %v2898 = vadd.f32 0.0, %v2897
        %2899 = vmatmul.f32.gmra.mxu0 %v2828
        %v2900 = vpop.f32.mrf.mxu0
        %v2901 = vadd.f32 0.0, %v2900
        %2902 = vmatmul.f32.gmra.mxu0 %v2829
        %v2903 = vpop.f32.mrf.mxu0
        %v2904 = vadd.f32 0.0, %v2903
        %2905 = vmatmul.f32.gmra.mxu0 %v2830
        %v2906 = vpop.f32.mrf.mxu0
        %v2907 = vadd.f32 0.0, %v2906
        %2908 = vmatmul.f32.gmra.mxu0 %v2831
        %v2909 = vpop.f32.mrf.mxu0
        %v2910 = vadd.f32 0.0, %v2909
        %2911 = vmatmul.f32.gmra.mxu0 %v2832
        %v2912 = vpop.f32.mrf.mxu0
        %v2913 = vadd.f32 0.0, %v2912
        %2914 = vmatmul.f32.gmra.mxu0 %v2833
        %v2915 = vpop.f32.mrf.mxu0
        %v2916 = vadd.f32 0.0, %v2915
        %2917 = vmatmul.f32.gmra.mxu0 %v2834
        %v2918 = vpop.f32.mrf.mxu0
        %v2919 = vadd.f32 0.0, %v2918
        %2920 = vmatmul.f32.gmra.mxu0 %v2835
        %v2921 = vpop.f32.mrf.mxu0
        %v2922 = vadd.f32 0.0, %v2921
        %2923 = vmatmul.f32.gmra.mxu0 %v2836
        %v2924 = vpop.f32.mrf.mxu0
        %v2925 = vadd.f32 0.0, %v2924
        %2926 = vmatmul.f32.gmra.mxu0 %v2837
        %v2927 = vpop.f32.mrf.mxu0
        %v2928 = vadd.f32 0.0, %v2927
        %2929 = vmatmul.f32.gmra.mxu0 %v2838
        %v2930 = vpop.f32.mrf.mxu0
        %v2931 = vadd.f32 0.0, %v2930
        %2932 = vmatmul.f32.gmra.mxu0 %v2839
        %v2933 = vpop.f32.mrf.mxu0
        %v2934 = vadd.f32 0.0, %v2933
        %2935 = vmatmul.f32.gmra.mxu0 %v2840
        %v2936 = vpop.f32.mrf.mxu0
        %v2937 = vadd.f32 0.0, %v2936
        %2938 = vmatmul.f32.gmra.mxu0 %v2841
        %v2939 = vpop.f32.mrf.mxu0
        %v2940 = vadd.f32 0.0, %v2939
        %2941 = vmatmul.f32.gmra.mxu0 %v2842
        %v2942 = vpop.f32.mrf.mxu0
        %v2943 = vadd.f32 0.0, %v2942
        %2944 = vmatmul.f32.gmra.mxu0 %v2843
        %v2945 = vpop.f32.mrf.mxu0
        %v2946 = vadd.f32 0.0, %v2945
        %2947 = vmatmul.f32.gmra.mxu0 %v2844
        %v2948 = vpop.f32.mrf.mxu0
        %v2949 = vadd.f32 0.0, %v2948
        %2950 = vmatmul.f32.gmra.mxu0 %v2845
        %v2951 = vpop.f32.mrf.mxu0
        %v2952 = vadd.f32 0.0, %v2951
        %2953 = vmatmul.f32.gmra.mxu0 %v2846
        %v2954 = vpop.f32.mrf.mxu0
        %v2955 = vadd.f32 0.0, %v2954
        %2956 = vmatmul.f32.gmra.mxu0 %v2847
        %v2957 = vpop.f32.mrf.mxu0
        %v2958 = vadd.f32 0.0, %v2957
        %2959 = vmatmul.f32.gmra.mxu0 %v2848
        %v2960 = vpop.f32.mrf.mxu0
        %v2961 = vadd.f32 0.0, %v2960
        %2962 = vmatmul.f32.gmra.mxu0 %v2849
        %v2963 = vpop.f32.mrf.mxu0
        %v2964 = vadd.f32 0.0, %v2963
        %2965 = vmatmul.f32.gmra.mxu0 %v2850
        %v2966 = vpop.f32.mrf.mxu0
        %v2967 = vadd.f32 0.0, %v2966
        %2968 = vmatmul.f32.gmra.mxu0 %v2851
        %v2969 = vpop.f32.mrf.mxu0
        %v2970 = vadd.f32 0.0, %v2969
        %2971 = vmatmul.f32.gmra.mxu0 %v2852
        %v2972 = vpop.f32.mrf.mxu0
        %v2973 = vadd.f32 0.0, %v2972
        %2974 = vmatmul.f32.gmra.mxu0 %v2853
        %v2975 = vpop.f32.mrf.mxu0
        %v2976 = vadd.f32 0.0, %v2975
        %2977 = vmatmul.f32.gmra.mxu0 %v2854
        %v2978 = vpop.f32.mrf.mxu0
        %v2979 = vadd.f32 0.0, %v2978
        %2980 = vmatmul.f32.gmra.mxu0 %v2855
        %v2981 = vpop.f32.mrf.mxu0
        %v2982 = vadd.f32 0.0, %v2981
        %2983 = vmatmul.f32.gmra.mxu0 %v2856
        %v2984 = vpop.f32.mrf.mxu0
        %v2985 = vadd.f32 0.0, %v2984
        %2986 = vdwg.mxu0
        %v2987 = vadd.f32 %v2792, %v2892
        %v2988 = vadd.f32 %v2793, %v2895
        %v2989 = vadd.f32 %v2794, %v2898
        %v2990 = vadd.f32 %v2795, %v2901
        %v2991 = vadd.f32 %v2796, %v2904
        %v2992 = vadd.f32 %v2797, %v2907
        %v2993 = vadd.f32 %v2798, %v2910
        %v2994 = vadd.f32 %v2799, %v2913
        %v2995 = vadd.f32 %v2800, %v2916
        %v2996 = vadd.f32 %v2801, %v2919
        %v2997 = vadd.f32 %v2802, %v2922
        %v2998 = vadd.f32 %v2803, %v2925
        %v2999 = vadd.f32 %v2804, %v2928
        %v3000 = vadd.f32 %v2805, %v2931
        %v3001 = vadd.f32 %v2806, %v2934
        %v3002 = vadd.f32 %v2807, %v2937
        %v3003 = vadd.f32 %v2808, %v2940
        %v3004 = vadd.f32 %v2809, %v2943
        %v3005 = vadd.f32 %v2810, %v2946
        %v3006 = vadd.f32 %v2811, %v2949
        %v3007 = vadd.f32 %v2812, %v2952
        %v3008 = vadd.f32 %v2813, %v2955
        %v3009 = vadd.f32 %v2814, %v2958
        %v3010 = vadd.f32 %v2815, %v2961
        %v3011 = vadd.f32 %v2816, %v2964
        %v3012 = vadd.f32 %v2817, %v2967
        %v3013 = vadd.f32 %v2818, %v2970
        %v3014 = vadd.f32 %v2819, %v2973
        %v3015 = vadd.f32 %v2820, %v2976
        %v3016 = vadd.f32 %v2821, %v2979
        %v3017 = vadd.f32 %v2822, %v2982
        %v3018 = vadd.f32 %v2823, %v2985
        %v3019 = vld [vmem:[%s4] sm:$0x1]
        %v3021 = vperm.slane %v3019, 0
        %v3023 = vadd.f32 %v2987, %v3021
        %v3024 = vadd.f32 %v2988, %v3021
        %v3025 = vadd.f32 %v2989, %v3021
        %v3026 = vadd.f32 %v2990, %v3021
        %v3027 = vadd.f32 %v2991, %v3021
        %v3028 = vadd.f32 %v2992, %v3021
        %v3029 = vadd.f32 %v2993, %v3021
        %v3030 = vadd.f32 %v2994, %v3021
        %v3031 = vadd.f32 %v2995, %v3021
        %v3032 = vadd.f32 %v2996, %v3021
        %v3033 = vadd.f32 %v2997, %v3021
        %v3034 = vadd.f32 %v2998, %v3021
        %v3035 = vadd.f32 %v2999, %v3021
        %v3036 = vadd.f32 %v3000, %v3021
        %v3037 = vadd.f32 %v3001, %v3021
        %v3038 = vadd.f32 %v3002, %v3021
        %v3039 = vadd.f32 %v3003, %v3021
        %v3040 = vadd.f32 %v3004, %v3021
        %v3041 = vadd.f32 %v3005, %v3021
        %v3042 = vadd.f32 %v3006, %v3021
        %v3043 = vadd.f32 %v3007, %v3021
        %v3044 = vadd.f32 %v3008, %v3021
        %v3045 = vadd.f32 %v3009, %v3021
        %v3046 = vadd.f32 %v3010, %v3021
        %v3047 = vadd.f32 %v3011, %v3021
        %v3048 = vadd.f32 %v3012, %v3021
        %v3049 = vadd.f32 %v3013, %v3021
        %v3050 = vadd.f32 %v3014, %v3021
        %v3051 = vadd.f32 %v3015, %v3021
        %v3052 = vadd.f32 %v3016, %v3021
        %v3053 = vadd.f32 %v3017, %v3021
        %v3054 = vadd.f32 %v3018, %v3021
        %v3055 = vmax.f32 %v3023, 0.0
        %v3056 = vmax.f32 %v3024, 0.0
        %v3057 = vmax.f32 %v3025, 0.0
        %v3058 = vmax.f32 %v3026, 0.0
        %v3059 = vmax.f32 %v3027, 0.0
        %v3060 = vmax.f32 %v3028, 0.0
        %v3061 = vmax.f32 %v3029, 0.0
        %v3062 = vmax.f32 %v3030, 0.0
        %v3063 = vmax.f32 %v3031, 0.0
        %v3064 = vmax.f32 %v3032, 0.0
        %v3065 = vmax.f32 %v3033, 0.0
        %v3066 = vmax.f32 %v3034, 0.0
        %v3067 = vmax.f32 %v3035, 0.0
        %v3068 = vmax.f32 %v3036, 0.0
        %v3069 = vmax.f32 %v3037, 0.0
        %v3070 = vmax.f32 %v3038, 0.0
        %v3071 = vmax.f32 %v3039, 0.0
        %v3072 = vmax.f32 %v3040, 0.0
        %v3073 = vmax.f32 %v3041, 0.0
        %v3074 = vmax.f32 %v3042, 0.0
        %v3075 = vmax.f32 %v3043, 0.0
        %v3076 = vmax.f32 %v3044, 0.0
        %v3077 = vmax.f32 %v3045, 0.0
        %v3078 = vmax.f32 %v3046, 0.0
        %v3079 = vmax.f32 %v3047, 0.0
        %v3080 = vmax.f32 %v3048, 0.0
        %v3081 = vmax.f32 %v3049, 0.0
        %v3082 = vmax.f32 %v3050, 0.0
        %v3083 = vmax.f32 %v3051, 0.0
        %v3084 = vmax.f32 %v3052, 0.0
        %v3085 = vmax.f32 %v3053, 0.0
        %v3086 = vmax.f32 %v3054, 0.0
        %v3087 = vld [vmem:[#allocation11] sm:$0xff]
        %v3088 = vld [vmem:[#allocation11 + $0x8] sm:$0xff]
        %v3089 = vld [vmem:[#allocation11 + $0x10] sm:$0xff]
        %v3090 = vld [vmem:[#allocation11 + $0x18] sm:$0xff]
        %v3091 = vld [vmem:[#allocation11 + $0x20] sm:$0xff]
        %v3092 = vld [vmem:[#allocation11 + $0x28] sm:$0xff]
        %v3093 = vld [vmem:[#allocation11 + $0x30] sm:$0xff]
        %v3094 = vld [vmem:[#allocation11 + $0x38] sm:$0xff]
        %v3095 = vld [vmem:[#allocation11 + $0x40] sm:$0xff]
        %v3096 = vld [vmem:[#allocation11 + $0x48] sm:$0xff]
        %v3097 = vld [vmem:[#allocation11 + $0x50] sm:$0xff]
        %v3098 = vld [vmem:[#allocation11 + $0x58] sm:$0xff]
        %v3099 = vld [vmem:[#allocation11 + $0x60] sm:$0xff]
        %v3100 = vld [vmem:[#allocation11 + $0x68] sm:$0xff]
        %v3101 = vld [vmem:[#allocation11 + $0x70] sm:$0xff]
        %v3102 = vld [vmem:[#allocation11 + $0x78] sm:$0xff]
        %v3103 = vld [vmem:[%s6] sm:$0x1]
        %v3105 = vperm.slane %v3103, 0
        %3107 = vmatpush.msra.mxu0 %v3102
        %3108 = vmatpush.msra.mxu0 %v3101
        %3109 = vmatpush.msra.mxu0 %v3100
        %3110 = vmatpush.msra.mxu0 %v3099
        %3111 = vmatpush.msra.mxu0 %v3098
        %3112 = vmatpush.msra.mxu0 %v3097
        %3113 = vmatpush.msra.mxu0 %v3096
        %3114 = vmatpush.msra.mxu0 %v3095
        %3115 = vmatpush.msra.mxu0 %v3094
        %3116 = vmatpush.msra.mxu0 %v3093
        %3117 = vmatpush.msra.mxu0 %v3092
        %3118 = vmatpush.msra.mxu0 %v3091
        %3119 = vmatpush.msra.mxu0 %v3090
        %3120 = vmatpush.msra.mxu0 %v3089
        %3121 = vmatpush.msra.mxu0 %v3088
        %3122 = vmatpush.msra.mxu0 %v3087
        %3123 = vmatmul.f32.gmra.mxu0 %v3055
        %v3124 = vpop.f32.mrf.mxu0
        %v3125 = vadd.f32 %v3105, %v3124
        %3126 = vmatmul.f32.gmra.mxu0 %v3056
        %v3127 = vpop.f32.mrf.mxu0
        %v3128 = vadd.f32 %v3105, %v3127
        %3129 = vmatmul.f32.gmra.mxu0 %v3057
        %v3130 = vpop.f32.mrf.mxu0
        %v3131 = vadd.f32 %v3105, %v3130
        %3132 = vmatmul.f32.gmra.mxu0 %v3058
        %v3133 = vpop.f32.mrf.mxu0
        %v3134 = vadd.f32 %v3105, %v3133
        %3135 = vmatmul.f32.gmra.mxu0 %v3059
        %v3136 = vpop.f32.mrf.mxu0
        %v3137 = vadd.f32 %v3105, %v3136
        %3138 = vmatmul.f32.gmra.mxu0 %v3060
        %v3139 = vpop.f32.mrf.mxu0
        %v3140 = vadd.f32 %v3105, %v3139
        %3141 = vmatmul.f32.gmra.mxu0 %v3061
        %v3142 = vpop.f32.mrf.mxu0
        %v3143 = vadd.f32 %v3105, %v3142
        %3144 = vmatmul.f32.gmra.mxu0 %v3062
        %v3145 = vpop.f32.mrf.mxu0
        %v3146 = vadd.f32 %v3105, %v3145
        %3147 = vmatmul.f32.gmra.mxu0 %v3063
        %v3148 = vpop.f32.mrf.mxu0
        %v3149 = vadd.f32 %v3105, %v3148
        %3150 = vmatmul.f32.gmra.mxu0 %v3064
        %v3151 = vpop.f32.mrf.mxu0
        %v3152 = vadd.f32 %v3105, %v3151
        %3153 = vmatmul.f32.gmra.mxu0 %v3065
        %v3154 = vpop.f32.mrf.mxu0
        %v3155 = vadd.f32 %v3105, %v3154
        %3156 = vmatmul.f32.gmra.mxu0 %v3066
        %v3157 = vpop.f32.mrf.mxu0
        %v3158 = vadd.f32 %v3105, %v3157
        %3159 = vmatmul.f32.gmra.mxu0 %v3067
        %v3160 = vpop.f32.mrf.mxu0
        %v3161 = vadd.f32 %v3105, %v3160
        %3162 = vmatmul.f32.gmra.mxu0 %v3068
        %v3163 = vpop.f32.mrf.mxu0
        %v3164 = vadd.f32 %v3105, %v3163
        %3165 = vmatmul.f32.gmra.mxu0 %v3069
        %v3166 = vpop.f32.mrf.mxu0
        %v3167 = vadd.f32 %v3105, %v3166
        %3168 = vmatmul.f32.gmra.mxu0 %v3070
        %v3169 = vpop.f32.mrf.mxu0
        %v3170 = vadd.f32 %v3105, %v3169
        %3171 = vmatmul.f32.gmra.mxu0 %v3071
        %v3172 = vpop.f32.mrf.mxu0
        %v3173 = vadd.f32 %v3105, %v3172
        %3174 = vmatmul.f32.gmra.mxu0 %v3072
        %v3175 = vpop.f32.mrf.mxu0
        %v3176 = vadd.f32 %v3105, %v3175
        %3177 = vmatmul.f32.gmra.mxu0 %v3073
        %v3178 = vpop.f32.mrf.mxu0
        %v3179 = vadd.f32 %v3105, %v3178
        %3180 = vmatmul.f32.gmra.mxu0 %v3074
        %v3181 = vpop.f32.mrf.mxu0
        %v3182 = vadd.f32 %v3105, %v3181
        %3183 = vmatmul.f32.gmra.mxu0 %v3075
        %v3184 = vpop.f32.mrf.mxu0
        %v3185 = vadd.f32 %v3105, %v3184
        %3186 = vmatmul.f32.gmra.mxu0 %v3076
        %v3187 = vpop.f32.mrf.mxu0
        %v3188 = vadd.f32 %v3105, %v3187
        %3189 = vmatmul.f32.gmra.mxu0 %v3077
        %v3190 = vpop.f32.mrf.mxu0
        %v3191 = vadd.f32 %v3105, %v3190
        %3192 = vmatmul.f32.gmra.mxu0 %v3078
        %v3193 = vpop.f32.mrf.mxu0
        %v3194 = vadd.f32 %v3105, %v3193
        %3195 = vmatmul.f32.gmra.mxu0 %v3079
        %v3196 = vpop.f32.mrf.mxu0
        %v3197 = vadd.f32 %v3105, %v3196
        %3198 = vmatmul.f32.gmra.mxu0 %v3080
        %v3199 = vpop.f32.mrf.mxu0
        %v3200 = vadd.f32 %v3105, %v3199
        %3201 = vmatmul.f32.gmra.mxu0 %v3081
        %v3202 = vpop.f32.mrf.mxu0
        %v3203 = vadd.f32 %v3105, %v3202
        %3204 = vmatmul.f32.gmra.mxu0 %v3082
        %v3205 = vpop.f32.mrf.mxu0
        %v3206 = vadd.f32 %v3105, %v3205
        %3207 = vmatmul.f32.gmra.mxu0 %v3083
        %v3208 = vpop.f32.mrf.mxu0
        %v3209 = vadd.f32 %v3105, %v3208
        %3210 = vmatmul.f32.gmra.mxu0 %v3084
        %v3211 = vpop.f32.mrf.mxu0
        %v3212 = vadd.f32 %v3105, %v3211
        %3213 = vmatmul.f32.gmra.mxu0 %v3085
        %v3214 = vpop.f32.mrf.mxu0
        %v3215 = vadd.f32 %v3105, %v3214
        %3216 = vmatmul.f32.gmra.mxu0 %v3086
        %v3217 = vpop.f32.mrf.mxu0
        %v3218 = vadd.f32 %v3105, %v3217
        %3219 = vdwg.mxu0
        %v3220 = vadd.f32 %v3125, %v349
        %v3221 = vadd.f32 %v3128, %v350
        %v3222 = vadd.f32 %v3131, %v351
        %v3223 = vadd.f32 %v3134, %v352
        %v3224 = vadd.f32 %v3137, %v353
        %v3225 = vadd.f32 %v3140, %v354
        %v3226 = vadd.f32 %v3143, %v355
        %v3227 = vadd.f32 %v3146, %v356
        %v3228 = vadd.f32 %v3149, %v357
        %v3229 = vadd.f32 %v3152, %v358
        %v3230 = vadd.f32 %v3155, %v359
        %v3231 = vadd.f32 %v3158, %v360
        %v3232 = vadd.f32 %v3161, %v361
        %v3233 = vadd.f32 %v3164, %v362
        %v3234 = vadd.f32 %v3167, %v363
        %v3235 = vadd.f32 %v3170, %v364
        %v3236 = vadd.f32 %v3173, %v365
        %v3237 = vadd.f32 %v3176, %v366
        %v3238 = vadd.f32 %v3179, %v367
        %v3239 = vadd.f32 %v3182, %v368
        %v3240 = vadd.f32 %v3185, %v369
        %v3241 = vadd.f32 %v3188, %v370
        %v3242 = vadd.f32 %v3191, %v371
        %v3243 = vadd.f32 %v3194, %v372
        %v3244 = vadd.f32 %v3197, %v373
        %v3245 = vadd.f32 %v3200, %v374
        %v3246 = vadd.f32 %v3203, %v375
        %v3247 = vadd.f32 %v3206, %v376
        %v3248 = vadd.f32 %v3209, %v377
        %v3249 = vadd.f32 %v3212, %v378
        %v3250 = vadd.f32 %v3215, %v379
        %v3251 = vadd.f32 %v3218, %v380
        %v3252 = vmax.f32 %v3220, 0.0
        %v3253 = vmax.f32 %v3221, 0.0
        %v3254 = vmax.f32 %v3222, 0.0
        %v3255 = vmax.f32 %v3223, 0.0
        %v3256 = vmax.f32 %v3224, 0.0
        %v3257 = vmax.f32 %v3225, 0.0
        %v3258 = vmax.f32 %v3226, 0.0
        %v3259 = vmax.f32 %v3227, 0.0
        %v3260 = vmax.f32 %v3228, 0.0
        %v3261 = vmax.f32 %v3229, 0.0
        %v3262 = vmax.f32 %v3230, 0.0
        %v3263 = vmax.f32 %v3231, 0.0
        %v3264 = vmax.f32 %v3232, 0.0
        %v3265 = vmax.f32 %v3233, 0.0
        %v3266 = vmax.f32 %v3234, 0.0
        %v3267 = vmax.f32 %v3235, 0.0
        %v3268 = vmax.f32 %v3236, 0.0
        %v3269 = vmax.f32 %v3237, 0.0
        %v3270 = vmax.f32 %v3238, 0.0
        %v3271 = vmax.f32 %v3239, 0.0
        %v3272 = vmax.f32 %v3240, 0.0
        %v3273 = vmax.f32 %v3241, 0.0
        %v3274 = vmax.f32 %v3242, 0.0
        %v3275 = vmax.f32 %v3243, 0.0
        %v3276 = vmax.f32 %v3244, 0.0
        %v3277 = vmax.f32 %v3245, 0.0
        %v3278 = vmax.f32 %v3246, 0.0
        %v3279 = vmax.f32 %v3247, 0.0
        %v3280 = vmax.f32 %v3248, 0.0
        %v3281 = vmax.f32 %v3249, 0.0
        %v3282 = vmax.f32 %v3250, 0.0
        %v3283 = vmax.f32 %v3251, 0.0
        %3284 = vst [vmem:[%s348] sm:$0xff] %v3252
        %3285 = vst [vmem:[%s348 + $0x8] sm:$0xff] %v3253
        %3286 = vst [vmem:[%s348 + $0x10] sm:$0xff] %v3254
        %3287 = vst [vmem:[%s348 + $0x18] sm:$0xff] %v3255
        %3288 = vst [vmem:[%s348 + $0x20] sm:$0xff] %v3256
        %3289 = vst [vmem:[%s348 + $0x28] sm:$0xff] %v3257
        %3290 = vst [vmem:[%s348 + $0x30] sm:$0xff] %v3258
        %3291 = vst [vmem:[%s348 + $0x38] sm:$0xff] %v3259
        %3292 = vst [vmem:[%s348 + $0x40] sm:$0xff] %v3260
        %3293 = vst [vmem:[%s348 + $0x48] sm:$0xff] %v3261
        %3294 = vst [vmem:[%s348 + $0x50] sm:$0xff] %v3262
        %3295 = vst [vmem:[%s348 + $0x58] sm:$0xff] %v3263
        %3296 = vst [vmem:[%s348 + $0x60] sm:$0xff] %v3264
        %3297 = vst [vmem:[%s348 + $0x68] sm:$0xff] %v3265
        %3298 = vst [vmem:[%s348 + $0x70] sm:$0xff] %v3266
        %3299 = vst [vmem:[%s348 + $0x78] sm:$0xff] %v3267
        %3300 = vst [vmem:[%s348 + $0x80] sm:$0xff] %v3268
        %3301 = vst [vmem:[%s348 + $0x88] sm:$0xff] %v3269
        %3302 = vst [vmem:[%s348 + $0x90] sm:$0xff] %v3270
        %3303 = vst [vmem:[%s348 + $0x98] sm:$0xff] %v3271
        %3304 = vst [vmem:[%s348 + $0xa0] sm:$0xff] %v3272
        %3305 = vst [vmem:[%s348 + $0xa8] sm:$0xff] %v3273
        %3306 = vst [vmem:[%s348 + $0xb0] sm:$0xff] %v3274
        %3307 = vst [vmem:[%s348 + $0xb8] sm:$0xff] %v3275
        %3308 = vst [vmem:[%s348 + $0xc0] sm:$0xff] %v3276
        %3309 = vst [vmem:[%s348 + $0xc8] sm:$0xff] %v3277
        %3310 = vst [vmem:[%s348 + $0xd0] sm:$0xff] %v3278
        %3311 = vst [vmem:[%s348 + $0xd8] sm:$0xff] %v3279
        %3312 = vst [vmem:[%s348 + $0xe0] sm:$0xff] %v3280
        %3313 = vst [vmem:[%s348 + $0xe8] sm:$0xff] %v3281
        %3314 = vst [vmem:[%s348 + $0xf0] sm:$0xff] %v3282
        %3315 = vst [vmem:[%s348 + $0xf8] sm:$0xff] %v3283
        %s3316 = sand.u32 %s186, 1
        %s3317 = scalar_lea.sflag [#allocation7], %s3316
        %s3318 = sand.u32 %s186, 1
        %s3319 = smul.addr %s3318, 256
        %s3320 = scalar_lea.vmem [#allocation13], %s3319
        // Predicated region
        $region65: #{tpu_custom_call.1} parent=47 // pred_check
          %p3321 = pneg %p196
        $region66: #{tpu_custom_call.1} parent=47 // pred_check_branch
          %3323 = sbr.rel (%p3321) target = $region68
        $region67: #{tpu_custom_call.1} parent=47 // pred_region
          %3325 = vsyncadd %s3317, 0
          %s3326 = smul.addr %s26, 32
          %s3327 = smul.addr %s3326, 8
          %s3328 = scalar_lea.hbm %s7, %s3327
          %s3329 = sshll.u32 %s3320, 4
          %s3330 = int_to_ptr.vmem [resolvable:$true] %s3329
          %s3331 = sshll.u32 %s3328, 4
          %s3332 = int_to_ptr.hbm [resolvable:$true] %s3331
          %3337 = dma.vmem_to_hbm [thread:$0]  %s3330, 4096, %s3332, %s3317, 128, 128, 8
        $region68: #{tpu_custom_call.1} parent=47 // pred_fallthru
          _
      $region48: #{tpu_custom_call.1} parent=5 // pred_fallthru
        _
      %p3338 = scmp.le.s32.totalorder 2, %s21
      // Predicated region
      $region69: #{tpu_custom_call.1} parent=5 // pred_check
        %p3339 = pneg %p3338
      $region70: #{tpu_custom_call.1} parent=5 // pred_check_branch
        %3341 = sbr.rel (%p3339) target = $region72
      $region71: #{tpu_custom_call.1} parent=5 // pred_region
        %s3342 = ssub.s32 %s21, 2
        // Predicated region
        $region73: #{tpu_custom_call.1} parent=71 // pred_check
          %p3343 = pneg %p202
        $region74: #{tpu_custom_call.1} parent=71 // pred_check_branch
          %3345 = sbr.rel (%p3343) target = $region76
        $region75: #{tpu_custom_call.1} parent=71 // pred_region
          %s3346 = sand.u32 %s187, 1
          %s3347 = scalar_lea.sflag [#allocation7], %s3346
          %s3348 = sand.u32 %s187, 1
          %s3349 = smul.addr %s3348, 256
          %s3350 = scalar_lea.vmem [#allocation13], %s3349
          %3352 = dma.done %s3347, 4096
        $region76: #{tpu_custom_call.1} parent=71 // pred_fallthru
          _
      $region72: #{tpu_custom_call.1} parent=5 // pred_fallthru
        _
    $region6: #{tpu_custom_call.1} parent=1 // loop_footer
      %s25 = sadd.s32 1, %s21
    $region7: #{tpu_custom_call.1} parent=1 // loop_footer_branch
      %20 = sbr.rel target = $region3
    $region8: #{tpu_custom_call.1} parent=1 // loop_exit
      _
    %3353 = vsyncpa [#allocation6], 1
    %s3354 = scalar_lea.sflag [#allocation6], 1
    %3355 = vsyncpa %s3354, 1
    %3356 = vsyncpa [#allocation9], 1
    %3357 = vsyncpa [#allocation12], 1
    %3358 = vsyncpa [#allocation7], 1
    %s3359 = scalar_lea.sflag [#allocation7], 1
    %3360 = vsyncpa %s3359, 1

</llo_original>
